<compile_context>
chip_gen: v7x
topology: tpu7x:2x2x1
jax: 0.10.0
libtpu: 0.0.40
codegen_flags: <defaults>
</compile_context>

<pallas_src>
import functools
import math

import jax
import jax.numpy as jnp
from jax import lax
from jax.experimental import pallas as pl
from jax.experimental.pallas import tpu as pltpu

F32 = jnp.float32
BF16 = jnp.bfloat16
VMEM_LIMIT = 32 * 1024 * 1024
NC = 8  # scan chunk / unroll length (one sublane group)


def _cp(n_axes):
    return pltpu.CompilerParams(
        dimension_semantics=("parallel",) * n_axes,
        vmem_limit_bytes=VMEM_LIMIT)


def _silu(x):
    return x * jax.nn.sigmoid(x)


def _softplus(x):
    # thresholded like torch.nn.functional.softplus (threshold=20), no overflow
    xc = jnp.minimum(x, 20.0)
    return jnp.where(x > 20.0, x, jnp.log(1.0 + jnp.exp(xc)))


def _row_tile(m, pref=256):
    t = math.gcd(m, pref)
    return t if t % 8 == 0 else m


# ----------------------- 1) fused LayerNorm + in_proj ------------------------

def ln_matmul_kernel(x_ref, g_ref, b_ref, w_ref, o_ref, *, eps):
    x = x_ref[...]
    mean = jnp.mean(x, axis=-1, keepdims=True)
    xc = x - mean
    var = jnp.mean(xc * xc, axis=-1, keepdims=True)
    xn = xc * lax.rsqrt(var + eps) * g_ref[...] + b_ref[...]
    o_ref[...] = jnp.dot(xn.astype(BF16), w_ref[...],
                         preferred_element_type=jnp.float32)


def ln_in_proj(x2d, gamma, beta, w_t, *, eps=1e-5):
    M, C = x2d.shape
    N = w_t.shape[1]
    tm = _row_tile(M)
    return pl.pallas_call(
        functools.partial(ln_matmul_kernel, eps=eps),
        out_shape=jax.ShapeDtypeStruct((M, N), F32),
        grid=(M // tm,),
        in_specs=[pl.BlockSpec((tm, C), lambda i: (i, 0)),
                  pl.BlockSpec((1, C), lambda i: (0, 0)),
                  pl.BlockSpec((1, C), lambda i: (0, 0)),
                  pl.BlockSpec((C, N), lambda i: (0, 0))],
        out_specs=pl.BlockSpec((tm, N), lambda i: (i, 0)),
        compiler_params=_cp(1),
    )(x2d, gamma.reshape(1, C), beta.reshape(1, C), w_t)


# ----------------------- 2) depthwise 3x3 conv + SiLU ------------------------

def dwconv_silu_kernel(xp_ref, w_ref, b_ref, o_ref):
    H, W, D = o_ref.shape
    acc = jnp.zeros((H, W, D), jnp.float32) + b_ref[0]
    for kh in range(3):
        for kw in range(3):
            acc = acc + xp_ref[kh:kh + H, kw:kw + W, :] * w_ref[kh, kw, :]
    o_ref[...] = _silu(acc)


def dwconv_silu(x, w, b):
    # TODO(synk): for large H/W/d_inner, tile over rows with a 1-row halo and
    #             handle edges in-kernel instead of materializing the padded image.
    B, H, W, D = x.shape
    xp = jnp.pad(x, ((0, 0), (1, 1), (1, 1), (0, 0)))
    return pl.pallas_call(
        dwconv_silu_kernel,
        out_shape=jax.ShapeDtypeStruct((B, H, W, D), F32),
        grid=(B,),
        in_specs=[pl.BlockSpec((None, H + 2, W + 2, D), lambda b: (b, 0, 0, 0)),
                  pl.BlockSpec((3, 3, D), lambda b: (0, 0, 0)),
                  pl.BlockSpec((1, D), lambda b: (0, 0))],
        out_specs=pl.BlockSpec((None, H, W, D), lambda b: (b, 0, 0, 0)),
        compiler_params=_cp(1),
    )(xp, w, b.reshape(1, D))


# ------------- 3) fused x_proj/dt_proj + packed 4-dir selective scan ---------

def ss2d_scan_kernel(xs_ref, wxp_ref, wdt_ref, dtb_ref, A_ref, Ds_ref, y_ref,
                     dt_scr, bs_scr, cs_scr, ea_scr, bu_scr, hst_scr,
                     *, D, S, K, R):
    L, KD = y_ref.shape
    KR, KS = K * R, K * S

    xs_bf = xs_ref[...].astype(BF16)                       # (L, KD), 4 dirs on lanes

    # Fused x_proj for all 4 directions (block-diagonal weight): [dt_low | B | C].
    xproj = jnp.dot(xs_bf, wxp_ref[...], preferred_element_type=jnp.float32)
    bs_scr[...] = xproj[:, KR:KR + KS]                     # (L, K*S)
    cs_scr[...] = xproj[:, KR + KS:]                       # (L, K*S)
    dt_raw = jnp.dot(xproj[:, :KR].astype(BF16), wdt_ref[...],
                     preferred_element_type=jnp.float32)   # (L, KD)
    dt_scr[...] = _softplus(dt_raw + dtb_ref[...])         # softplus hoisted

    A = A_ref[...]                                         # (S, KD) = -exp(A_log)
    Ds = Ds_ref[...]                                       # (1, KD)

    def chunk(ci, h):
        off = pl.multiple_of(ci * NC, NC)
        u_c = xs_ref[pl.ds(off, NC), :]                    # (NC, KD)
        dt_c = dt_scr[pl.ds(off, NC), :]                   # (NC, KD)
        b_c = bs_scr[pl.ds(off, NC), :]                    # (NC, K*S)
        c_c = cs_scr[pl.ds(off, NC), :]                    # (NC, K*S)
        dtu_c = dt_c * u_c

        # Hoisted off the serial path: exp(dt*A) and B*(dt*u) for the chunk.
        for s in range(S):
            ea_scr[:, s, :] = jnp.exp(dt_c * A[s:s + 1, :])
            bexp = jnp.concatenate(
                [jnp.broadcast_to(b_c[:, k * S + s:k * S + s + 1], (NC, D))
                 for k in range(K)], axis=-1)              # (NC, KD)
            bu_scr[:, s, :] = bexp * dtu_c

        # Serial recurrence: one (S, KD) vreg mul+add per token, fully unrolled.
        for n in range(NC):
            h = h * ea_scr[n] + bu_scr[n]
            hst_scr[n] = h

        # Output contraction with C, vectorized over the chunk (off serial path).
        y_c = Ds * u_c
        for s in range(S):
            cexp = jnp.concatenate(
                [jnp.broadcast_to(c_c[:, k * S + s:k * S + s + 1], (NC, D))
                 for k in range(K)], axis=-1)              # (NC, KD)
            y_c = y_c + hst_scr[:, s, :] * cexp
        y_ref[pl.ds(off, NC), :] = y_c                     # lane-dense (NC,128) store
        return h

    lax.fori_loop(0, L // NC, chunk, jnp.zeros((S, KD), jnp.float32))


def ss2d_scan(xs, wxp_bd, wdt_bd, dt_bias_p, A_p, Ds_p, *, D, S, K, R):
    # TODO(synk): for production L, add an L-chunk grid axis carrying the state
    #             in scratch so (L, KD) blocks never exceed v7x VMEM.
    B, L, KD = xs.shape
    assert KD == K * D and L % NC == 0
    NW = wxp_bd.shape[1]
    kern = functools.partial(ss2d_scan_kernel, D=D, S=S, K=K, R=R)
    return pl.pallas_call(
        kern,
        out_shape=jax.ShapeDtypeStruct((B, L, KD), F32),
        grid=(B,),
        in_specs=[pl.BlockSpec((None, L, KD), lambda b: (b, 0, 0)),
                  pl.BlockSpec((KD, NW), lambda b: (0, 0)),
                  pl.BlockSpec((K * R, KD), lambda b: (0, 0)),
                  pl.BlockSpec((1, KD), lambda b: (0, 0)),
                  pl.BlockSpec((S, KD), lambda b: (0, 0)),
                  pl.BlockSpec((1, KD), lambda b: (0, 0))],
        out_specs=pl.BlockSpec((None, L, KD), lambda b: (b, 0, 0)),
        scratch_shapes=[pltpu.VMEM((L, KD), F32),        # softplus(dt)
                        pltpu.VMEM((L, K * S), F32),     # B (all dirs)
                        pltpu.VMEM((L, K * S), F32),     # C (all dirs)
                        pltpu.VMEM((NC, S, KD), F32),    # exp(dt*A) per chunk
                        pltpu.VMEM((NC, S, KD), F32),    # B*(dt*u)  per chunk
                        pltpu.VMEM((NC, S, KD), F32)],   # state history per chunk
        compiler_params=_cp(1),
    )(xs, wxp_bd, wdt_bd, dt_bias_p, A_p, Ds_p)


# ------------- 4) fused out_norm + SiLU(z) gate + out_proj + residual --------

def out_gate_kernel(y_ref, z_ref, g_ref, b_ref, w_ref, r_ref, o_ref, *, eps):
    y = y_ref[...]
    mean = jnp.mean(y, axis=-1, keepdims=True)
    yc = y - mean
    var = jnp.mean(yc * yc, axis=-1, keepdims=True)
    yn = yc * lax.rsqrt(var + eps) * g_ref[...] + b_ref[...]
    gated = yn * _silu(z_ref[...])
    o_ref[...] = r_ref[...] + jnp.dot(gated.astype(BF16), w_ref[...],
                                      preferred_element_type=jnp.float32)


def out_gate_proj(y2d, z2d, gamma, beta, w_t, resid2d, *, eps=1e-5):
    M, Di = y2d.shape
    N = w_t.shape[1]
    tm = _row_tile(M)
    return pl.pallas_call(
        functools.partial(out_gate_kernel, eps=eps),
        out_shape=jax.ShapeDtypeStruct((M, N), F32),
        grid=(M // tm,),
        in_specs=[pl.BlockSpec((tm, Di), lambda i: (i, 0)),
                  pl.BlockSpec((tm, Di), lambda i: (i, 0)),
                  pl.BlockSpec((1, Di), lambda i: (0, 0)),
                  pl.BlockSpec((1, Di), lambda i: (0, 0)),
                  pl.BlockSpec((Di, N), lambda i: (0, 0)),
                  pl.BlockSpec((tm, N), lambda i: (i, 0))],
        out_specs=pl.BlockSpec((tm, N), lambda i: (i, 0)),
        compiler_params=_cp(1),
    )(y2d, z2d, gamma.reshape(1, Di), beta.reshape(1, Di), w_t, resid2d)


# --------------------------- parameters (synthetic) --------------------------

def init_params(key, dim=16, d_state=8, ssm_ratio=2.0, dt_rank=4, d_conv=3,
                dt_min=0.001, dt_max=0.1, dt_init_floor=1e-4):
    D = int(ssm_ratio * dim)
    K, S, R = 4, d_state, dt_rank
    keys = jax.random.split(key, 6)
    p = {}
    # VSSBlock.ln_1
    p["ln1_g"] = jnp.ones((dim,), F32)
    p["ln1_b"] = jnp.zeros((dim,), F32)
    # SS2D.in_proj (bias=False), stored transposed, bf16
    p["w_in_t"] = (jax.random.normal(keys[0], (dim, 2 * D), F32) * 0.02).astype(BF16)
    # SS2D.conv2d depthwise 3x3 + bias, stored (kh, kw, D)
    p["w_conv"] = jax.random.normal(keys[1], (d_conv, d_conv, D), F32) * 0.1
    p["b_conv"] = jnp.zeros((D,), F32)
    # SS2D.x_proj_weight (K, R+2S, D) -> single block-diagonal (K*D, K*R+2*K*S)
    wx = jax.random.normal(keys[2], (K, R + 2 * S, D), F32) * 0.05
    wxp = jnp.zeros((K * D, K * R + 2 * K * S), F32)
    for k in range(K):
        wk = wx[k]
        wxp = wxp.at[k * D:(k + 1) * D, k * R:(k + 1) * R].set(wk[:R].T)
        wxp = wxp.at[k * D:(k + 1) * D,
                     K * R + k * S:K * R + (k + 1) * S].set(wk[R:R + S].T)
        wxp = wxp.at[k * D:(k + 1) * D,
                     K * (R + S) + k * S:K * (R + S) + (k + 1) * S].set(wk[R + S:].T)
    p["w_xproj_bd"] = wxp.astype(BF16)
    # SS2D.dt_projs weights (K, D, R) -> block-diagonal (K*R, K*D)
    dt_std = R ** -0.5
    wdt = jax.random.uniform(keys[3], (K, D, R), F32, minval=-dt_std, maxval=dt_std)
    wdtbd = jnp.zeros((K * R, K * D), F32)
    for k in range(K):
        wdtbd = wdtbd.at[k * R:(k + 1) * R, k * D:(k + 1) * D].set(wdt[k].T)
    p["w_dt_bd"] = wdtbd.astype(BF16)
    # SS2D.dt_projs bias via inverse-softplus of dt, packed to (1, K*D)
    u = jax.random.uniform(keys[4], (K, D), F32)
    dt = jnp.exp(u * (math.log(dt_max) - math.log(dt_min)) + math.log(dt_min))
    dt = jnp.maximum(dt, dt_init_floor)
    p["dt_bias_p"] = (dt + jnp.log(-jnp.expm1(-dt))).reshape(1, K * D)
    # SS2D.A_logs: A = -exp(A_log), packed to (S, K*D)
    A_log = jnp.log(jnp.broadcast_to(jnp.arange(1, S + 1, dtype=F32), (K, D, S)))
    p["A_p"] = jnp.transpose(-jnp.exp(A_log), (2, 0, 1)).reshape(S, K * D)
    # SS2D.Ds packed to (1, K*D)
    p["Ds_p"] = jnp.ones((1, K * D), F32)
    # SS2D.out_norm
    p["out_norm_g"] = jnp.ones((D,), F32)
    p["out_norm_b"] = jnp.zeros((D,), F32)
    # SS2D.out_proj (bias=False), transposed, bf16
    p["w_out_t"] = (jax.random.normal(keys[5], (D, dim), F32) * 0.02).astype(BF16)
    return p


# ------------------------------ forward pass ---------------------------------

def vss_block_forward(x, p):
    # x: (B, H, W, C) NHWC
    B, H, W, C = x.shape
    L = H * W
    M = B * L
    Di = p["w_in_t"].shape[1] // 2
    K = 4
    S = p["A_p"].shape[0]
    R = p["w_dt_bd"].shape[0] // K

    # 1+2) ln_1 + SS2D.in_proj (fused kernel) -> chunk into (x, z)
    xz = ln_in_proj(x.reshape(M, C), p["ln1_g"], p["ln1_b"], p["w_in_t"])
    x_ss = xz[:, :Di].reshape(B, H, W, Di)
    z = xz[:, Di:]                                        # (M, Di)

    # 3) depthwise conv 3x3 + SiLU
    xc = dwconv_silu(x_ss, p["w_conv"], p["b_conv"])      # (B, H, W, Di)

    # 4) cross-scan: pack the 4 directions along the lane dim -> (B, L, 4*Di)
    # TODO(synk): at production sizes fold this reorder into the scan kernel
    #             (backward iteration / transposed index_map) to cut HBM traffic.
    xf = xc.reshape(B, L, Di)
    xt = jnp.transpose(xc, (0, 2, 1, 3)).reshape(B, L, Di)
    xs = jnp.concatenate([xf, xt, jnp.flip(xf, 1), jnp.flip(xt, 1)], axis=-1)

    # 5+6) x_proj/dt_proj + 4-direction selective scan (fused, packed lanes)
    ys = ss2d_scan(xs, p["w_xproj_bd"], p["w_dt_bd"], p["dt_bias_p"],
                   p["A_p"], p["Ds_p"], D=Di, S=S, K=K, R=R)  # (B, L, 4*Di)

    # 7) cross-merge (layout glue)
    y0 = ys[..., :Di]
    y1 = ys[..., Di:2 * Di]
    y2 = jnp.flip(ys[..., 2 * Di:3 * Di], 1)
    y3 = jnp.flip(ys[..., 3 * Di:], 1)
    y_col = jnp.transpose((y1 + y3).reshape(B, W, H, Di),
                          (0, 2, 1, 3)).reshape(B, L, Di)
    y = (y0 + y2 + y_col).reshape(M, Di)

    # 8+9) out_norm + SiLU(z) gate + out_proj + residual (fused kernel)
    out = out_gate_proj(y, z, p["out_norm_g"], p["out_norm_b"],
                        p["w_out_t"], x.reshape(M, C))
    return out.reshape(B, H, W, C)


if __name__ == "__main__":
    key = jax.random.PRNGKey(0)
    kx, kp = jax.random.split(key)
    B, H, W, C = 2, 8, 8, 16            # dim=16 -> d_inner=32, 4*d_inner=128 lanes
    x = jax.random.normal(kx, (B, H, W, C), F32)
    params = init_params(kp, dim=C, d_state=8, dt_rank=4)

    fwd = jax.jit(vss_block_forward)
    out = fwd(x, params)
    jax.block_until_ready(out)
    assert out.shape == (B, H, W, C) and out.dtype == F32
    assert bool(jnp.all(jnp.isfinite(out)))
    print("KERNEL_OK")
</pallas_src>

<mosaic_0001>
module attributes {stable_mosaic.version = 11 : i64} {
  func.func @ln_matmul_kernel(%arg0: i32, %arg1: memref<128x16xf32, #tpu.memory_space<vmem>>, %arg2: memref<1x16xf32, #tpu.memory_space<vmem>>, %arg3: memref<1x16xf32, #tpu.memory_space<vmem>>, %arg4: memref<16x64xbf16, #tpu.memory_space<vmem>>, %arg5: memref<128x64xf32, #tpu.memory_space<vmem>>) attributes {dimension_semantics = [#tpu.dimension_semantics<parallel>], iteration_bounds = array<i64: 1>, scalar_prefetch = 0 : i64, scratch_operands = 0 : i64, tpu.core_type = #tpu.core_type<tc>, window_params = [{transform_indices = @transform_0, window_bounds = array<i64: 128, 16>}, {pipeline_mode = #tpu.pipeline_mode<synchronous>, transform_indices = @transform_1, window_bounds = array<i64: 1, 16>}, {pipeline_mode = #tpu.pipeline_mode<synchronous>, transform_indices = @transform_2, window_bounds = array<i64: 1, 16>}, {pipeline_mode = #tpu.pipeline_mode<synchronous>, transform_indices = @transform_3, window_bounds = array<i64: 16, 64>}, {transform_indices = @transform_4, window_bounds = array<i64: 128, 64>}]} {
    %c0 = arith.constant 0 : index
    %c0_0 = arith.constant 0 : index
    %0 = vector.load %arg1[%c0, %c0_0] : memref<128x16xf32, #tpu.memory_space<vmem>>, vector<128x16xf32>
    %cst = arith.constant dense<0.000000e+00> : vector<128xf32>
    %1 = vector.multi_reduction <add>, %0, %cst [1] : vector<128x16xf32> to vector<128xf32>
    %2 = vector.shape_cast %1 : vector<128xf32> to vector<128x1xf32>
    %cst_1 = arith.constant 1.600000e+01 : f32
    %3 = vector.broadcast %cst_1 : f32 to vector<128x1xf32>
    %4 = arith.divf %2, %3 : vector<128x1xf32>
    %5 = vector.broadcast %4 : vector<128x1xf32> to vector<128x16xf32>
    %6 = arith.subf %0, %5 : vector<128x16xf32>
    %7 = arith.mulf %6, %6 : vector<128x16xf32>
    %cst_2 = arith.constant dense<0.000000e+00> : vector<128xf32>
    %8 = vector.multi_reduction <add>, %7, %cst_2 [1] : vector<128x16xf32> to vector<128xf32>
    %9 = vector.shape_cast %8 : vector<128xf32> to vector<128x1xf32>
    %cst_3 = arith.constant 1.600000e+01 : f32
    %10 = vector.broadcast %cst_3 : f32 to vector<128x1xf32>
    %11 = arith.divf %9, %10 : vector<128x1xf32>
    %cst_4 = arith.constant 9.99999974E-6 : f32
    %12 = vector.broadcast %cst_4 : f32 to vector<128x1xf32>
    %13 = arith.addf %11, %12 : vector<128x1xf32>
    %14 = math.rsqrt %13 : vector<128x1xf32>
    %15 = vector.broadcast %14 : vector<128x1xf32> to vector<128x16xf32>
    %16 = arith.mulf %6, %15 : vector<128x16xf32>
    %c0_5 = arith.constant 0 : index
    %c0_6 = arith.constant 0 : index
    %17 = vector.load %arg2[%c0_5, %c0_6] : memref<1x16xf32, #tpu.memory_space<vmem>>, vector<1x16xf32>
    %18 = vector.broadcast %17 : vector<1x16xf32> to vector<128x16xf32>
    %19 = arith.mulf %16, %18 : vector<128x16xf32>
    %c0_7 = arith.constant 0 : index
    %c0_8 = arith.constant 0 : index
    %20 = vector.load %arg3[%c0_7, %c0_8] : memref<1x16xf32, #tpu.memory_space<vmem>>, vector<1x16xf32>
    %21 = vector.broadcast %20 : vector<1x16xf32> to vector<128x16xf32>
    %22 = arith.addf %19, %21 : vector<128x16xf32>
    %23 = arith.truncf %22 : vector<128x16xf32> to vector<128x16xbf16>
    %c0_9 = arith.constant 0 : index
    %c0_10 = arith.constant 0 : index
    %24 = vector.load %arg4[%c0_9, %c0_10] : memref<16x64xbf16, #tpu.memory_space<vmem>>, vector<16x64xbf16>
    %cst_11 = arith.constant dense<0.000000e+00> : vector<128x64xf32>
    %25 = tpu.matmul %23, %24, %cst_11 {dimension_numbers = #tpu.dot_dimension_numbers<[1], [0], [0], [1], [0, 0, 1, 1], [], []>} : vector<128x16xbf16>, vector<16x64xbf16>, vector<128x64xf32> -> vector<128x64xf32>
    %c0_12 = arith.constant 0 : index
    %c0_13 = arith.constant 0 : index
    %26 = vector.load %arg5[%c0_12, %c0_13] : memref<128x64xf32, #tpu.memory_space<vmem>>, vector<128x64xf32>
    tpu.vector_store %arg5[%c0_12, %c0_13], %25 {strides = array<i32>} : memref<128x64xf32, #tpu.memory_space<vmem>>, vector<128x64xf32>,
    return
  }
  func.func @transform_0(%arg0: i32) -> (i32, i32) {
    %c0_i32 = arith.constant 0 : i32
    %c0_i32_0 = arith.constant 0 : i32
    return %arg0, %c0_i32 : i32, i32
  }
  func.func @transform_1(%arg0: i32) -> (i32, i32) {
    %c0_i32 = arith.constant 0 : i32
    %c0_i32_0 = arith.constant 0 : i32
    %c0_i32_1 = arith.constant 0 : i32
    return %c0_i32, %c0_i32_0 : i32, i32
  }
  func.func @transform_2(%arg0: i32) -> (i32, i32) {
    %c0_i32 = arith.constant 0 : i32
    %c0_i32_0 = arith.constant 0 : i32
    %c0_i32_1 = arith.constant 0 : i32
    return %c0_i32, %c0_i32_0 : i32, i32
  }
  func.func @transform_3(%arg0: i32) -> (i32, i32) {
    %c0_i32 = arith.constant 0 : i32
    %c0_i32_0 = arith.constant 0 : i32
    %c0_i32_1 = arith.constant 0 : i32
    return %c0_i32, %c0_i32_0 : i32, i32
  }
  func.func @transform_4(%arg0: i32) -> (i32, i32) {
    %c0_i32 = arith.constant 0 : i32
    %c0_i32_0 = arith.constant 0 : i32
    return %arg0, %c0_i32 : i32, i32
  }
}

module attributes {stable_mosaic.version = 11 : i64} {
  func.func @dwconv_silu_kernel(%arg0: i32, %arg1: memref<1x10x10x32xf32, #tpu.memory_space<vmem>>, %arg2: memref<3x3x32xf32, #tpu.memory_space<vmem>>, %arg3: memref<1x32xf32, #tpu.memory_space<vmem>>, %arg4: memref<1x8x8x32xf32, #tpu.memory_space<vmem>>) attributes {dimension_semantics = [#tpu.dimension_semantics<parallel>], iteration_bounds = array<i64: 2>, scalar_prefetch = 0 : i64, scratch_operands = 0 : i64, tpu.core_type = #tpu.core_type<tc>, window_params = [{transform_indices = @transform_0, window_bounds = array<i64: 1, 10, 10, 32>}, {pipeline_mode = #tpu.pipeline_mode<synchronous>, transform_indices = @transform_1, window_bounds = array<i64: 3, 3, 32>}, {pipeline_mode = #tpu.pipeline_mode<synchronous>, transform_indices = @transform_2, window_bounds = array<i64: 1, 32>}, {transform_indices = @transform_3, window_bounds = array<i64: 1, 8, 8, 32>}]} {
    %cst = arith.constant 0.000000e+00 : f32
    %0 = vector.broadcast %cst : f32 to vector<8x8x32xf32>
    %c0 = arith.constant 0 : index
    %c0_0 = arith.constant 0 : index
    %1 = vector.load %arg3[%c0, %c0_0] : memref<1x32xf32, #tpu.memory_space<vmem>>, vector<1x32xf32>
    %2 = vector.shape_cast %1 : vector<1x32xf32> to vector<32xf32>
    %3 = vector.shape_cast %2 : vector<32xf32> to vector<1x1x32xf32>
    %4 = vector.broadcast %3 : vector<1x1x32xf32> to vector<8x8x32xf32>
    %5 = arith.addf %0, %4 : vector<8x8x32xf32>
    %c0_1 = arith.constant 0 : index
    %c0_2 = arith.constant 0 : index
    %c0_3 = arith.constant 0 : index
    %c0_4 = arith.constant 0 : index
    %6 = vector.load %arg1[%c0_1, %c0_2, %c0_3, %c0_4] : memref<1x10x10x32xf32, #tpu.memory_space<vmem>>, vector<1x8x8x32xf32>
    %7 = vector.shape_cast %6 : vector<1x8x8x32xf32> to vector<8x8x32xf32>
    %c0_5 = arith.constant 0 : index
    %c0_6 = arith.constant 0 : index
    %c0_7 = arith.constant 0 : index
    %8 = vector.load %arg2[%c0_5, %c0_6, %c0_7] : memref<3x3x32xf32, #tpu.memory_space<vmem>>, vector<1x1x32xf32>
    %9 = vector.shape_cast %8 : vector<1x1x32xf32> to vector<32xf32>
    %10 = vector.shape_cast %9 : vector<32xf32> to vector<1x1x32xf32>
    %11 = vector.broadcast %10 : vector<1x1x32xf32> to vector<8x8x32xf32>
    %12 = arith.mulf %7, %11 : vector<8x8x32xf32>
    %13 = arith.addf %5, %12 : vector<8x8x32xf32>
    %c0_8 = arith.constant 0 : index
    %c0_9 = arith.constant 0 : index
    %c1 = arith.constant 1 : index
    %c0_10 = arith.constant 0 : index
    %14 = vector.load %arg1[%c0_8, %c0_9, %c1, %c0_10] : memref<1x10x10x32xf32, #tpu.memory_space<vmem>>, vector<1x8x8x32xf32>
    %15 = vector.shape_cast %14 : vector<1x8x8x32xf32> to vector<8x8x32xf32>
    %c0_11 = arith.constant 0 : index
    %c1_12 = arith.constant 1 : index
    %c0_13 = arith.constant 0 : index
    %16 = vector.load %arg2[%c0_11, %c1_12, %c0_13] : memref<3x3x32xf32, #tpu.memory_space<vmem>>, vector<1x1x32xf32>
    %17 = vector.shape_cast %16 : vector<1x1x32xf32> to vector<32xf32>
    %18 = vector.shape_cast %17 : vector<32xf32> to vector<1x1x32xf32>
    %19 = vector.broadcast %18 : vector<1x1x32xf32> to vector<8x8x32xf32>
    %20 = arith.mulf %15, %19 : vector<8x8x32xf32>
    %21 = arith.addf %13, %20 : vector<8x8x32xf32>
    %c0_14 = arith.constant 0 : index
    %c0_15 = arith.constant 0 : index
    %c2 = arith.constant 2 : index
    %c0_16 = arith.constant 0 : index
    %22 = vector.load %arg1[%c0_14, %c0_15, %c2, %c0_16] : memref<1x10x10x32xf32, #tpu.memory_space<vmem>>, vector<1x8x8x32xf32>
    %23 = vector.shape_cast %22 : vector<1x8x8x32xf32> to vector<8x8x32xf32>
    %c0_17 = arith.constant 0 : index
    %c2_18 = arith.constant 2 : index
    %c0_19 = arith.constant 0 : index
    %24 = vector.load %arg2[%c0_17, %c2_18, %c0_19] : memref<3x3x32xf32, #tpu.memory_space<vmem>>, vector<1x1x32xf32>
    %25 = vector.shape_cast %24 : vector<1x1x32xf32> to vector<32xf32>
    %26 = vector.shape_cast %25 : vector<32xf32> to vector<1x1x32xf32>
    %27 = vector.broadcast %26 : vector<1x1x32xf32> to vector<8x8x32xf32>
    %28 = arith.mulf %23, %27 : vector<8x8x32xf32>
    %29 = arith.addf %21, %28 : vector<8x8x32xf32>
    %c0_20 = arith.constant 0 : index
    %c1_21 = arith.constant 1 : index
    %c0_22 = arith.constant 0 : index
    %c0_23 = arith.constant 0 : index
    %30 = vector.load %arg1[%c0_20, %c1_21, %c0_22, %c0_23] : memref<1x10x10x32xf32, #tpu.memory_space<vmem>>, vector<1x8x8x32xf32>
    %31 = vector.shape_cast %30 : vector<1x8x8x32xf32> to vector<8x8x32xf32>
    %c1_24 = arith.constant 1 : index
    %c0_25 = arith.constant 0 : index
    %c0_26 = arith.constant 0 : index
    %32 = vector.load %arg2[%c1_24, %c0_25, %c0_26] : memref<3x3x32xf32, #tpu.memory_space<vmem>>, vector<1x1x32xf32>
    %33 = vector.shape_cast %32 : vector<1x1x32xf32> to vector<32xf32>
    %34 = vector.shape_cast %33 : vector<32xf32> to vector<1x1x32xf32>
    %35 = vector.broadcast %34 : vector<1x1x32xf32> to vector<8x8x32xf32>
    %36 = arith.mulf %31, %35 : vector<8x8x32xf32>
    %37 = arith.addf %29, %36 : vector<8x8x32xf32>
    %c0_27 = arith.constant 0 : index
    %c1_28 = arith.constant 1 : index
    %c1_29 = arith.constant 1 : index
    %c0_30 = arith.constant 0 : index
    %38 = vector.load %arg1[%c0_27, %c1_28, %c1_29, %c0_30] : memref<1x10x10x32xf32, #tpu.memory_space<vmem>>, vector<1x8x8x32xf32>
    %39 = vector.shape_cast %38 : vector<1x8x8x32xf32> to vector<8x8x32xf32>
    %c1_31 = arith.constant 1 : index
    %c1_32 = arith.constant 1 : index
    %c0_33 = arith.constant 0 : index
    %40 = vector.load %arg2[%c1_31, %c1_32, %c0_33] : memref<3x3x32xf32, #tpu.memory_space<vmem>>, vector<1x1x32xf32>
    %41 = vector.shape_cast %40 : vector<1x1x32xf32> to vector<32xf32>
    %42 = vector.shape_cast %41 : vector<32xf32> to vector<1x1x32xf32>
    %43 = vector.broadcast %42 : vector<1x1x32xf32> to vector<8x8x32xf32>
    %44 = arith.mulf %39, %43 : vector<8x8x32xf32>
    %45 = arith.addf %37, %44 : vector<8x8x32xf32>
    %c0_34 = arith.constant 0 : index
    %c1_35 = arith.constant 1 : index
    %c2_36 = arith.constant 2 : index
    %c0_37 = arith.constant 0 : index
    %46 = vector.load %arg1[%c0_34, %c1_35, %c2_36, %c0_37] : memref<1x10x10x32xf32, #tpu.memory_space<vmem>>, vector<1x8x8x32xf32>
    %47 = vector.shape_cast %46 : vector<1x8x8x32xf32> to vector<8x8x32xf32>
    %c1_38 = arith.constant 1 : index
    %c2_39 = arith.constant 2 : index
    %c0_40 = arith.constant 0 : index
    %48 = vector.load %arg2[%c1_38, %c2_39, %c0_40] : memref<3x3x32xf32, #tpu.memory_space<vmem>>, vector<1x1x32xf32>
    %49 = vector.shape_cast %48 : vector<1x1x32xf32> to vector<32xf32>
    %50 = vector.shape_cast %49 : vector<32xf32> to vector<1x1x32xf32>
    %51 = vector.broadcast %50 : vector<1x1x32xf32> to vector<8x8x32xf32>
    %52 = arith.mulf %47, %51 : vector<8x8x32xf32>
    %53 = arith.addf %45, %52 : vector<8x8x32xf32>
    %c0_41 = arith.constant 0 : index
    %c2_42 = arith.constant 2 : index
    %c0_43 = arith.constant 0 : index
    %c0_44 = arith.constant 0 : index
    %54 = vector.load %arg1[%c0_41, %c2_42, %c0_43, %c0_44] : memref<1x10x10x32xf32, #tpu.memory_space<vmem>>, vector<1x8x8x32xf32>
    %55 = vector.shape_cast %54 : vector<1x8x8x32xf32> to vector<8x8x32xf32>
    %c2_45 = arith.constant 2 : index
    %c0_46 = arith.constant 0 : index
    %c0_47 = arith.constant 0 : index
    %56 = vector.load %arg2[%c2_45, %c0_46, %c0_47] : memref<3x3x32xf32, #tpu.memory_space<vmem>>, vector<1x1x32xf32>
    %57 = vector.shape_cast %56 : vector<1x1x32xf32> to vector<32xf32>
    %58 = vector.shape_cast %57 : vector<32xf32> to vector<1x1x32xf32>
    %59 = vector.broadcast %58 : vector<1x1x32xf32> to vector<8x8x32xf32>
    %60 = arith.mulf %55, %59 : vector<8x8x32xf32>
    %61 = arith.addf %53, %60 : vector<8x8x32xf32>
    %c0_48 = arith.constant 0 : index
    %c2_49 = arith.constant 2 : index
    %c1_50 = arith.constant 1 : index
    %c0_51 = arith.constant 0 : index
    %62 = vector.load %arg1[%c0_48, %c2_49, %c1_50, %c0_51] : memref<1x10x10x32xf32, #tpu.memory_space<vmem>>, vector<1x8x8x32xf32>
    %63 = vector.shape_cast %62 : vector<1x8x8x32xf32> to vector<8x8x32xf32>
    %c2_52 = arith.constant 2 : index
    %c1_53 = arith.constant 1 : index
    %c0_54 = arith.constant 0 : index
    %64 = vector.load %arg2[%c2_52, %c1_53, %c0_54] : memref<3x3x32xf32, #tpu.memory_space<vmem>>, vector<1x1x32xf32>
    %65 = vector.shape_cast %64 : vector<1x1x32xf32> to vector<32xf32>
    %66 = vector.shape_cast %65 : vector<32xf32> to vector<1x1x32xf32>
    %67 = vector.broadcast %66 : vector<1x1x32xf32> to vector<8x8x32xf32>
    %68 = arith.mulf %63, %67 : vector<8x8x32xf32>
    %69 = arith.addf %61, %68 : vector<8x8x32xf32>
    %c0_55 = arith.constant 0 : index
    %c2_56 = arith.constant 2 : index
    %c2_57 = arith.constant 2 : index
    %c0_58 = arith.constant 0 : index
    %70 = vector.load %arg1[%c0_55, %c2_56, %c2_57, %c0_58] : memref<1x10x10x32xf32, #tpu.memory_space<vmem>>, vector<1x8x8x32xf32>
    %71 = vector.shape_cast %70 : vector<1x8x8x32xf32> to vector<8x8x32xf32>
    %c2_59 = arith.constant 2 : index
    %c2_60 = arith.constant 2 : index
    %c0_61 = arith.constant 0 : index
    %72 = vector.load %arg2[%c2_59, %c2_60, %c0_61] : memref<3x3x32xf32, #tpu.memory_space<vmem>>, vector<1x1x32xf32>
    %73 = vector.shape_cast %72 : vector<1x1x32xf32> to vector<32xf32>
    %74 = vector.shape_cast %73 : vector<32xf32> to vector<1x1x32xf32>
    %75 = vector.broadcast %74 : vector<1x1x32xf32> to vector<8x8x32xf32>
    %76 = arith.mulf %71, %75 : vector<8x8x32xf32>
    %77 = arith.addf %69, %76 : vector<8x8x32xf32>
    %78 = arith.negf %77 : vector<8x8x32xf32>
    %79 = math.exp %78 : vector<8x8x32xf32>
    %cst_62 = arith.constant 1.000000e+00 : f32
    %80 = vector.broadcast %cst_62 : f32 to vector<8x8x32xf32>
    %81 = arith.addf %80, %79 : vector<8x8x32xf32>
    %82 = arith.divf %80, %81 : vector<8x8x32xf32>
    %83 = arith.mulf %77, %82 : vector<8x8x32xf32>
    %c0_63 = arith.constant 0 : index
    %c0_64 = arith.constant 0 : index
    %c0_65 = arith.constant 0 : index
    %c0_66 = arith.constant 0 : index
    %84 = vector.load %arg4[%c0_63, %c0_64, %c0_65, %c0_66] : memref<1x8x8x32xf32, #tpu.memory_space<vmem>>, vector<1x8x8x32xf32>
    %85 = vector.shape_cast %84 : vector<1x8x8x32xf32> to vector<8x8x32xf32>
    %86 = vector.shape_cast %83 : vector<8x8x32xf32> to vector<1x8x8x32xf32>
    tpu.vector_store %arg4[%c0_63, %c0_64, %c0_65, %c0_66], %86 {strides = array<i32>} : memref<1x8x8x32xf32, #tpu.memory_space<vmem>>, vector<1x8x8x32xf32>,
    return
  }
  func.func @transform_0(%arg0: i32) -> (i32, i32, i32, i32) {
    %c0_i32 = arith.constant 0 : i32
    %c0_i32_0 = arith.constant 0 : i32
    %c0_i32_1 = arith.constant 0 : i32
    %c0_i32_2 = arith.constant 0 : i32
    return %arg0, %c0_i32, %c0_i32_0, %c0_i32_1 : i32, i32, i32, i32
  }
  func.func @transform_1(%arg0: i32) -> (i32, i32, i32) {
    %c0_i32 = arith.constant 0 : i32
    %c0_i32_0 = arith.constant 0 : i32
    %c0_i32_1 = arith.constant 0 : i32
    %c0_i32_2 = arith.constant 0 : i32
    return %c0_i32, %c0_i32_0, %c0_i32_1 : i32, i32, i32
  }
  func.func @transform_2(%arg0: i32) -> (i32, i32) {
    %c0_i32 = arith.constant 0 : i32
    %c0_i32_0 = arith.constant 0 : i32
    %c0_i32_1 = arith.constant 0 : i32
    return %c0_i32, %c0_i32_0 : i32, i32
  }
  func.func @transform_3(%arg0: i32) -> (i32, i32, i32, i32) {
    %c0_i32 = arith.constant 0 : i32
    %c0_i32_0 = arith.constant 0 : i32
    %c0_i32_1 = arith.constant 0 : i32
    %c0_i32_2 = arith.constant 0 : i32
    return %arg0, %c0_i32, %c0_i32_0, %c0_i32_1 : i32, i32, i32, i32
  }
}

module attributes {stable_mosaic.version = 11 : i64} {
  func.func @ss2d_scan_kernel(%arg0: i32, %arg1: memref<1x64x128xf32, #tpu.memory_space<vmem>>, %arg2: memref<128x80xbf16, #tpu.memory_space<vmem>>, %arg3: memref<16x128xbf16, #tpu.memory_space<vmem>>, %arg4: memref<1x128xf32, #tpu.memory_space<vmem>>, %arg5: memref<8x128xf32, #tpu.memory_space<vmem>>, %arg6: memref<1x128xf32, #tpu.memory_space<vmem>>, %arg7: memref<1x64x128xf32, #tpu.memory_space<vmem>>, %arg8: memref<64x128xf32, #tpu.memory_space<vmem>>, %arg9: memref<64x32xf32, #tpu.memory_space<vmem>>, %arg10: memref<64x32xf32, #tpu.memory_space<vmem>>, %arg11: memref<8x8x128xf32, #tpu.memory_space<vmem>>, %arg12: memref<8x8x128xf32, #tpu.memory_space<vmem>>, %arg13: memref<8x8x128xf32, #tpu.memory_space<vmem>>) attributes {dimension_semantics = [#tpu.dimension_semantics<parallel>], iteration_bounds = array<i64: 2>, scalar_prefetch = 0 : i64, scratch_operands = 6 : i64, tpu.core_type = #tpu.core_type<tc>, window_params = [{transform_indices = @transform_0, window_bounds = array<i64: 1, 64, 128>}, {pipeline_mode = #tpu.pipeline_mode<synchronous>, transform_indices = @transform_1, window_bounds = array<i64: 128, 80>}, {pipeline_mode = #tpu.pipeline_mode<synchronous>, transform_indices = @transform_2, window_bounds = array<i64: 16, 128>}, {pipeline_mode = #tpu.pipeline_mode<synchronous>, transform_indices = @transform_3, window_bounds = array<i64: 1, 128>}, {pipeline_mode = #tpu.pipeline_mode<synchronous>, transform_indices = @transform_4, window_bounds = array<i64: 8, 128>}, {pipeline_mode = #tpu.pipeline_mode<synchronous>, transform_indices = @transform_5, window_bounds = array<i64: 1, 128>}, {transform_indices = @transform_6, window_bounds = array<i64: 1, 64, 128>}]} {
    %c0 = arith.constant 0 : index
    %c0_0 = arith.constant 0 : index
    %c0_1 = arith.constant 0 : index
    %0 = vector.load %arg1[%c0, %c0_0, %c0_1] : memref<1x64x128xf32, #tpu.memory_space<vmem>>, vector<1x64x128xf32>
    %1 = vector.shape_cast %0 : vector<1x64x128xf32> to vector<64x128xf32>
    %2 = arith.truncf %1 : vector<64x128xf32> to vector<64x128xbf16>
    %c0_2 = arith.constant 0 : index
    %c0_3 = arith.constant 0 : index
    %3 = vector.load %arg2[%c0_2, %c0_3] : memref<128x80xbf16, #tpu.memory_space<vmem>>, vector<128x80xbf16>
    %cst = arith.constant dense<0.000000e+00> : vector<64x80xf32>
    %4 = tpu.matmul %2, %3, %cst {dimension_numbers = #tpu.dot_dimension_numbers<[1], [0], [0], [1], [0, 0, 1, 1], [], []>} : vector<64x128xbf16>, vector<128x80xbf16>, vector<64x80xf32> -> vector<64x80xf32>
    %5 = vector.extract_strided_slice %4 {offsets = [0, 16], sizes = [64, 32], strides = [1, 1]} : vector<64x80xf32> to vector<64x32xf32>
    %c0_4 = arith.constant 0 : index
    %c0_5 = arith.constant 0 : index
    %6 = vector.load %arg9[%c0_4, %c0_5] : memref<64x32xf32, #tpu.memory_space<vmem>>, vector<64x32xf32>
    tpu.vector_store %arg9[%c0_4, %c0_5], %5 {strides = array<i32>} : memref<64x32xf32, #tpu.memory_space<vmem>>, vector<64x32xf32>,
    %7 = vector.extract_strided_slice %4 {offsets = [0, 48], sizes = [64, 32], strides = [1, 1]} : vector<64x80xf32> to vector<64x32xf32>
    %c0_6 = arith.constant 0 : index
    %c0_7 = arith.constant 0 : index
    %8 = vector.load %arg10[%c0_6, %c0_7] : memref<64x32xf32, #tpu.memory_space<vmem>>, vector<64x32xf32>
    tpu.vector_store %arg10[%c0_6, %c0_7], %7 {strides = array<i32>} : memref<64x32xf32, #tpu.memory_space<vmem>>, vector<64x32xf32>,
    %9 = vector.extract_strided_slice %4 {offsets = [0, 0], sizes = [64, 16], strides = [1, 1]} : vector<64x80xf32> to vector<64x16xf32>
    %10 = arith.truncf %9 : vector<64x16xf32> to vector<64x16xbf16>
    %c0_8 = arith.constant 0 : index
    %c0_9 = arith.constant 0 : index
    %11 = vector.load %arg3[%c0_8, %c0_9] : memref<16x128xbf16, #tpu.memory_space<vmem>>, vector<16x128xbf16>
    %cst_10 = arith.constant dense<0.000000e+00> : vector<64x128xf32>
    %12 = tpu.matmul %10, %11, %cst_10 {dimension_numbers = #tpu.dot_dimension_numbers<[1], [0], [0], [1], [0, 0, 1, 1], [], []>} : vector<64x16xbf16>, vector<16x128xbf16>, vector<64x128xf32> -> vector<64x128xf32>
    %c0_11 = arith.constant 0 : index
    %c0_12 = arith.constant 0 : index
    %13 = vector.load %arg4[%c0_11, %c0_12] : memref<1x128xf32, #tpu.memory_space<vmem>>, vector<1x128xf32>
    %14 = vector.broadcast %13 : vector<1x128xf32> to vector<64x128xf32>
    %15 = arith.addf %12, %14 : vector<64x128xf32>
    %cst_13 = arith.constant 2.000000e+01 : f32
    %16 = vector.broadcast %cst_13 : f32 to vector<64x128xf32>
    %17 = arith.minimumf %15, %16 : vector<64x128xf32>
    %cst_14 = arith.constant 2.000000e+01 : f32
    %18 = vector.broadcast %cst_14 : f32 to vector<64x128xf32>
    %19 = arith.cmpf ogt, %15, %18 : vector<64x128xf32>
    %20 = math.exp %17 : vector<64x128xf32>
    %cst_15 = arith.constant 1.000000e+00 : f32
    %21 = vector.broadcast %cst_15 : f32 to vector<64x128xf32>
    %22 = arith.addf %21, %20 : vector<64x128xf32>
    %23 = math.log %22 : vector<64x128xf32>
    %24 = arith.select %19, %15, %23 : vector<64x128xi1>, vector<64x128xf32>
    %c0_16 = arith.constant 0 : index
    %c0_17 = arith.constant 0 : index
    %25 = vector.load %arg8[%c0_16, %c0_17] : memref<64x128xf32, #tpu.memory_space<vmem>>, vector<64x128xf32>
    tpu.vector_store %arg8[%c0_16, %c0_17], %24 {strides = array<i32>} : memref<64x128xf32, #tpu.memory_space<vmem>>, vector<64x128xf32>,
    %c0_18 = arith.constant 0 : index
    %c0_19 = arith.constant 0 : index
    %26 = vector.load %arg5[%c0_18, %c0_19] : memref<8x128xf32, #tpu.memory_space<vmem>>, vector<8x128xf32>
    %c0_20 = arith.constant 0 : index
    %c0_21 = arith.constant 0 : index
    %27 = vector.load %arg6[%c0_20, %c0_21] : memref<1x128xf32, #tpu.memory_space<vmem>>, vector<1x128xf32>
    %cst_22 = arith.constant 0.000000e+00 : f32
    %28 = vector.broadcast %cst_22 : f32 to vector<8x128xf32>
    %c0_i32 = arith.constant 0 : i32
    %c8_i32 = arith.constant 8 : i32
    %29 = arith.addi %c0_i32, %c8_i32 : i32
    %c1_i32 = arith.constant 1 : i32
    %30 = scf.for %arg14 = %c0_i32 to %29 step %c1_i32 iter_args(%arg15 = %28) -> (vector<8x128xf32>)  : i32 {
      %c8_i32_24 = arith.constant 8 : i32
      %31 = arith.muli %arg14, %c8_i32_24 : i32
      %32 = tpu.assume_multiple %31, 8 : i32
      %c0_25 = arith.constant 0 : index
      %33 = arith.index_cast %32 : i32 to index
      %c0_26 = arith.constant 0 : index
      %34 = vector.load %arg1[%c0_25, %33, %c0_26] : memref<1x64x128xf32, #tpu.memory_space<vmem>>, vector<1x8x128xf32>
      %35 = vector.shape_cast %34 : vector<1x8x128xf32> to vector<8x128xf32>
      %36 = arith.index_cast %32 : i32 to index
      %c0_27 = arith.constant 0 : index
      %37 = vector.load %arg8[%36, %c0_27] : memref<64x128xf32, #tpu.memory_space<vmem>>, vector<8x128xf32>
      %38 = arith.index_cast %32 : i32 to index
      %c0_28 = arith.constant 0 : index
      %39 = vector.load %arg9[%38, %c0_28] : memref<64x32xf32, #tpu.memory_space<vmem>>, vector<8x32xf32>
      %40 = arith.index_cast %32 : i32 to index
      %c0_29 = arith.constant 0 : index
      %41 = vector.load %arg10[%40, %c0_29] : memref<64x32xf32, #tpu.memory_space<vmem>>, vector<8x32xf32>
      %42 = arith.mulf %37, %35 : vector<8x128xf32>
      %43 = vector.extract_strided_slice %26 {offsets = [0, 0], sizes = [1, 128], strides = [1, 1]} : vector<8x128xf32> to vector<1x128xf32>
      %44 = vector.broadcast %43 : vector<1x128xf32> to vector<8x128xf32>
      %45 = arith.mulf %37, %44 : vector<8x128xf32>
      %46 = math.exp %45 : vector<8x128xf32>
      %c0_30 = arith.constant 0 : index
      %c0_31 = arith.constant 0 : index
      %c0_32 = arith.constant 0 : index
      %47 = vector.load %arg11[%c0_30, %c0_31, %c0_32] : memref<8x8x128xf32, #tpu.memory_space<vmem>>, vector<8x1x128xf32>
      %48 = vector.shape_cast %47 : vector<8x1x128xf32> to vector<8x128xf32>
      %49 = vector.shape_cast %46 : vector<8x128xf32> to vector<8x1x128xf32>
      tpu.vector_store %arg11[%c0_30, %c0_31, %c0_32], %49 {strides = array<i32>} : memref<8x8x128xf32, #tpu.memory_space<vmem>>, vector<8x1x128xf32>,
      %50 = vector.extract_strided_slice %39 {offsets = [0, 0], sizes = [8, 1], strides = [1, 1]} : vector<8x32xf32> to vector<8x1xf32>
      %51 = vector.shape_cast %50 : vector<8x1xf32> to vector<8x1xf32>
      %52 = vector.broadcast %51 : vector<8x1xf32> to vector<8x32xf32>
      %53 = vector.extract_strided_slice %39 {offsets = [0, 8], sizes = [8, 1], strides = [1, 1]} : vector<8x32xf32> to vector<8x1xf32>
      %54 = vector.shape_cast %53 : vector<8x1xf32> to vector<8x1xf32>
      %55 = vector.broadcast %54 : vector<8x1xf32> to vector<8x32xf32>
      %56 = vector.extract_strided_slice %39 {offsets = [0, 16], sizes = [8, 1], strides = [1, 1]} : vector<8x32xf32> to vector<8x1xf32>
      %57 = vector.shape_cast %56 : vector<8x1xf32> to vector<8x1xf32>
      %58 = vector.broadcast %57 : vector<8x1xf32> to vector<8x32xf32>
      %59 = vector.extract_strided_slice %39 {offsets = [0, 24], sizes = [8, 1], strides = [1, 1]} : vector<8x32xf32> to vector<8x1xf32>
      %60 = vector.shape_cast %59 : vector<8x1xf32> to vector<8x1xf32>
      %61 = vector.broadcast %60 : vector<8x1xf32> to vector<8x32xf32>
      %62 = tpu.concatenate %52, %55, %58, %61 in 1 : vector<8x32xf32>, vector<8x32xf32>, vector<8x32xf32>, vector<8x32xf32> -> vector<8x128xf32>
      %63 = arith.mulf %62, %42 : vector<8x128xf32>
      %c0_33 = arith.constant 0 : index
      %c0_34 = arith.constant 0 : index
      %c0_35 = arith.constant 0 : index
      %64 = vector.load %arg12[%c0_33, %c0_34, %c0_35] : memref<8x8x128xf32, #tpu.memory_space<vmem>>, vector<8x1x128xf32>
      %65 = vector.shape_cast %64 : vector<8x1x128xf32> to vector<8x128xf32>
      %66 = vector.shape_cast %63 : vector<8x128xf32> to vector<8x1x128xf32>
      tpu.vector_store %arg12[%c0_33, %c0_34, %c0_35], %66 {strides = array<i32>} : memref<8x8x128xf32, #tpu.memory_space<vmem>>, vector<8x1x128xf32>,
      %67 = vector.extract_strided_slice %26 {offsets = [1, 0], sizes = [1, 128], strides = [1, 1]} : vector<8x128xf32> to vector<1x128xf32>
      %68 = vector.broadcast %67 : vector<1x128xf32> to vector<8x128xf32>
      %69 = arith.mulf %37, %68 : vector<8x128xf32>
      %70 = math.exp %69 : vector<8x128xf32>
      %c0_36 = arith.constant 0 : index
      %c1 = arith.constant 1 : index
      %c0_37 = arith.constant 0 : index
      %71 = vector.load %arg11[%c0_36, %c1, %c0_37] : memref<8x8x128xf32, #tpu.memory_space<vmem>>, vector<8x1x128xf32>
      %72 = vector.shape_cast %71 : vector<8x1x128xf32> to vector<8x128xf32>
      %73 = vector.shape_cast %70 : vector<8x128xf32> to vector<8x1x128xf32>
      tpu.vector_store %arg11[%c0_36, %c1, %c0_37], %73 {strides = array<i32>} : memref<8x8x128xf32, #tpu.memory_space<vmem>>, vector<8x1x128xf32>,
      %74 = vector.extract_strided_slice %39 {offsets = [0, 1], sizes = [8, 1], strides = [1, 1]} : vector<8x32xf32> to vector<8x1xf32>
      %75 = vector.shape_cast %74 : vector<8x1xf32> to vector<8x1xf32>
      %76 = vector.broadcast %75 : vector<8x1xf32> to vector<8x32xf32>
      %77 = vector.extract_strided_slice %39 {offsets = [0, 9], sizes = [8, 1], strides = [1, 1]} : vector<8x32xf32> to vector<8x1xf32>
      %78 = vector.shape_cast %77 : vector<8x1xf32> to vector<8x1xf32>
      %79 = vector.broadcast %78 : vector<8x1xf32> to vector<8x32xf32>
      %80 = vector.extract_strided_slice %39 {offsets = [0, 17], sizes = [8, 1], strides = [1, 1]} : vector<8x32xf32> to vector<8x1xf32>
      %81 = vector.shape_cast %80 : vector<8x1xf32> to vector<8x1xf32>
      %82 = vector.broadcast %81 : vector<8x1xf32> to vector<8x32xf32>
      %83 = vector.extract_strided_slice %39 {offsets = [0, 25], sizes = [8, 1], strides = [1, 1]} : vector<8x32xf32> to vector<8x1xf32>
      %84 = vector.shape_cast %83 : vector<8x1xf32> to vector<8x1xf32>
      %85 = vector.broadcast %84 : vector<8x1xf32> to vector<8x32xf32>
      %86 = tpu.concatenate %76, %79, %82, %85 in 1 : vector<8x32xf32>, vector<8x32xf32>, vector<8x32xf32>, vector<8x32xf32> -> vector<8x128xf32>
      %87 = arith.mulf %86, %42 : vector<8x128xf32>
      %c0_38 = arith.constant 0 : index
      %c1_39 = arith.constant 1 : index
      %c0_40 = arith.constant 0 : index
      %88 = vector.load %arg12[%c0_38, %c1_39, %c0_40] : memref<8x8x128xf32, #tpu.memory_space<vmem>>, vector<8x1x128xf32>
      %89 = vector.shape_cast %88 : vector<8x1x128xf32> to vector<8x128xf32>
      %90 = vector.shape_cast %87 : vector<8x128xf32> to vector<8x1x128xf32>
      tpu.vector_store %arg12[%c0_38, %c1_39, %c0_40], %90 {strides = array<i32>} : memref<8x8x128xf32, #tpu.memory_space<vmem>>, vector<8x1x128xf32>,
      %91 = vector.extract_strided_slice %26 {offsets = [2, 0], sizes = [1, 128], strides = [1, 1]} : vector<8x128xf32> to vector<1x128xf32>
      %92 = vector.broadcast %91 : vector<1x128xf32> to vector<8x128xf32>
      %93 = arith.mulf %37, %92 : vector<8x128xf32>
      %94 = math.exp %93 : vector<8x128xf32>
      %c0_41 = arith.constant 0 : index
      %c2 = arith.constant 2 : index
      %c0_42 = arith.constant 0 : index
      %95 = vector.load %arg11[%c0_41, %c2, %c0_42] : memref<8x8x128xf32, #tpu.memory_space<vmem>>, vector<8x1x128xf32>
      %96 = vector.shape_cast %95 : vector<8x1x128xf32> to vector<8x128xf32>
      %97 = vector.shape_cast %94 : vector<8x128xf32> to vector<8x1x128xf32>
      tpu.vector_store %arg11[%c0_41, %c2, %c0_42], %97 {strides = array<i32>} : memref<8x8x128xf32, #tpu.memory_space<vmem>>, vector<8x1x128xf32>,
      %98 = vector.extract_strided_slice %39 {offsets = [0, 2], sizes = [8, 1], strides = [1, 1]} : vector<8x32xf32> to vector<8x1xf32>
      %99 = vector.shape_cast %98 : vector<8x1xf32> to vector<8x1xf32>
      %100 = vector.broadcast %99 : vector<8x1xf32> to vector<8x32xf32>
      %101 = vector.extract_strided_slice %39 {offsets = [0, 10], sizes = [8, 1], strides = [1, 1]} : vector<8x32xf32> to vector<8x1xf32>
      %102 = vector.shape_cast %101 : vector<8x1xf32> to vector<8x1xf32>
      %103 = vector.broadcast %102 : vector<8x1xf32> to vector<8x32xf32>
      %104 = vector.extract_strided_slice %39 {offsets = [0, 18], sizes = [8, 1], strides = [1, 1]} : vector<8x32xf32> to vector<8x1xf32>
      %105 = vector.shape_cast %104 : vector<8x1xf32> to vector<8x1xf32>
      %106 = vector.broadcast %105 : vector<8x1xf32> to vector<8x32xf32>
      %107 = vector.extract_strided_slice %39 {offsets = [0, 26], sizes = [8, 1], strides = [1, 1]} : vector<8x32xf32> to vector<8x1xf32>
      %108 = vector.shape_cast %107 : vector<8x1xf32> to vector<8x1xf32>
      %109 = vector.broadcast %108 : vector<8x1xf32> to vector<8x32xf32>
      %110 = tpu.concatenate %100, %103, %106, %109 in 1 : vector<8x32xf32>, vector<8x32xf32>, vector<8x32xf32>, vector<8x32xf32> -> vector<8x128xf32>
      %111 = arith.mulf %110, %42 : vector<8x128xf32>
      %c0_43 = arith.constant 0 : index
      %c2_44 = arith.constant 2 : index
      %c0_45 = arith.constant 0 : index
      %112 = vector.load %arg12[%c0_43, %c2_44, %c0_45] : memref<8x8x128xf32, #tpu.memory_space<vmem>>, vector<8x1x128xf32>
      %113 = vector.shape_cast %112 : vector<8x1x128xf32> to vector<8x128xf32>
      %114 = vector.shape_cast %111 : vector<8x128xf32> to vector<8x1x128xf32>
      tpu.vector_store %arg12[%c0_43, %c2_44, %c0_45], %114 {strides = array<i32>} : memref<8x8x128xf32, #tpu.memory_space<vmem>>, vector<8x1x128xf32>,
      %115 = vector.extract_strided_slice %26 {offsets = [3, 0], sizes = [1, 128], strides = [1, 1]} : vector<8x128xf32> to vector<1x128xf32>
      %116 = vector.broadcast %115 : vector<1x128xf32> to vector<8x128xf32>
      %117 = arith.mulf %37, %116 : vector<8x128xf32>
      %118 = math.exp %117 : vector<8x128xf32>
      %c0_46 = arith.constant 0 : index
      %c3 = arith.constant 3 : index
      %c0_47 = arith.constant 0 : index
      %119 = vector.load %arg11[%c0_46, %c3, %c0_47] : memref<8x8x128xf32, #tpu.memory_space<vmem>>, vector<8x1x128xf32>
      %120 = vector.shape_cast %119 : vector<8x1x128xf32> to vector<8x128xf32>
      %121 = vector.shape_cast %118 : vector<8x128xf32> to vector<8x1x128xf32>
      tpu.vector_store %arg11[%c0_46, %c3, %c0_47], %121 {strides = array<i32>} : memref<8x8x128xf32, #tpu.memory_space<vmem>>, vector<8x1x128xf32>,
      %122 = vector.extract_strided_slice %39 {offsets = [0, 3], sizes = [8, 1], strides = [1, 1]} : vector<8x32xf32> to vector<8x1xf32>
      %123 = vector.shape_cast %122 : vector<8x1xf32> to vector<8x1xf32>
      %124 = vector.broadcast %123 : vector<8x1xf32> to vector<8x32xf32>
      %125 = vector.extract_strided_slice %39 {offsets = [0, 11], sizes = [8, 1], strides = [1, 1]} : vector<8x32xf32> to vector<8x1xf32>
      %126 = vector.shape_cast %125 : vector<8x1xf32> to vector<8x1xf32>
      %127 = vector.broadcast %126 : vector<8x1xf32> to vector<8x32xf32>
      %128 = vector.extract_strided_slice %39 {offsets = [0, 19], sizes = [8, 1], strides = [1, 1]} : vector<8x32xf32> to vector<8x1xf32>
      %129 = vector.shape_cast %128 : vector<8x1xf32> to vector<8x1xf32>
      %130 = vector.broadcast %129 : vector<8x1xf32> to vector<8x32xf32>
      %131 = vector.extract_strided_slice %39 {offsets = [0, 27], sizes = [8, 1], strides = [1, 1]} : vector<8x32xf32> to vector<8x1xf32>
      %132 = vector.shape_cast %131 : vector<8x1xf32> to vector<8x1xf32>
      %133 = vector.broadcast %132 : vector<8x1xf32> to vector<8x32xf32>
      %134 = tpu.concatenate %124, %127, %130, %133 in 1 : vector<8x32xf32>, vector<8x32xf32>, vector<8x32xf32>, vector<8x32xf32> -> vector<8x128xf32>
      %135 = arith.mulf %134, %42 : vector<8x128xf32>
      %c0_48 = arith.constant 0 : index
      %c3_49 = arith.constant 3 : index
      %c0_50 = arith.constant 0 : index
      %136 = vector.load %arg12[%c0_48, %c3_49, %c0_50] : memref<8x8x128xf32, #tpu.memory_space<vmem>>, vector<8x1x128xf32>
      %137 = vector.shape_cast %136 : vector<8x1x128xf32> to vector<8x128xf32>
      %138 = vector.shape_cast %135 : vector<8x128xf32> to vector<8x1x128xf32>
      tpu.vector_store %arg12[%c0_48, %c3_49, %c0_50], %138 {strides = array<i32>} : memref<8x8x128xf32, #tpu.memory_space<vmem>>, vector<8x1x128xf32>,
      %139 = vector.extract_strided_slice %26 {offsets = [4, 0], sizes = [1, 128], strides = [1, 1]} : vector<8x128xf32> to vector<1x128xf32>
      %140 = vector.broadcast %139 : vector<1x128xf32> to vector<8x128xf32>
      %141 = arith.mulf %37, %140 : vector<8x128xf32>
      %142 = math.exp %141 : vector<8x128xf32>
      %c0_51 = arith.constant 0 : index
      %c4 = arith.constant 4 : index
      %c0_52 = arith.constant 0 : index
      %143 = vector.load %arg11[%c0_51, %c4, %c0_52] : memref<8x8x128xf32, #tpu.memory_space<vmem>>, vector<8x1x128xf32>
      %144 = vector.shape_cast %143 : vector<8x1x128xf32> to vector<8x128xf32>
      %145 = vector.shape_cast %142 : vector<8x128xf32> to vector<8x1x128xf32>
      tpu.vector_store %arg11[%c0_51, %c4, %c0_52], %145 {strides = array<i32>} : memref<8x8x128xf32, #tpu.memory_space<vmem>>, vector<8x1x128xf32>,
      %146 = vector.extract_strided_slice %39 {offsets = [0, 4], sizes = [8, 1], strides = [1, 1]} : vector<8x32xf32> to vector<8x1xf32>
      %147 = vector.shape_cast %146 : vector<8x1xf32> to vector<8x1xf32>
      %148 = vector.broadcast %147 : vector<8x1xf32> to vector<8x32xf32>
      %149 = vector.extract_strided_slice %39 {offsets = [0, 12], sizes = [8, 1], strides = [1, 1]} : vector<8x32xf32> to vector<8x1xf32>
      %150 = vector.shape_cast %149 : vector<8x1xf32> to vector<8x1xf32>
      %151 = vector.broadcast %150 : vector<8x1xf32> to vector<8x32xf32>
      %152 = vector.extract_strided_slice %39 {offsets = [0, 20], sizes = [8, 1], strides = [1, 1]} : vector<8x32xf32> to vector<8x1xf32>
      %153 = vector.shape_cast %152 : vector<8x1xf32> to vector<8x1xf32>
      %154 = vector.broadcast %153 : vector<8x1xf32> to vector<8x32xf32>
      %155 = vector.extract_strided_slice %39 {offsets = [0, 28], sizes = [8, 1], strides = [1, 1]} : vector<8x32xf32> to vector<8x1xf32>
      %156 = vector.shape_cast %155 : vector<8x1xf32> to vector<8x1xf32>
      %157 = vector.broadcast %156 : vector<8x1xf32> to vector<8x32xf32>
      %158 = tpu.concatenate %148, %151, %154, %157 in 1 : vector<8x32xf32>, vector<8x32xf32>, vector<8x32xf32>, vector<8x32xf32> -> vector<8x128xf32>
      %159 = arith.mulf %158, %42 : vector<8x128xf32>
      %c0_53 = arith.constant 0 : index
      %c4_54 = arith.constant 4 : index
      %c0_55 = arith.constant 0 : index
      %160 = vector.load %arg12[%c0_53, %c4_54, %c0_55] : memref<8x8x128xf32, #tpu.memory_space<vmem>>, vector<8x1x128xf32>
      %161 = vector.shape_cast %160 : vector<8x1x128xf32> to vector<8x128xf32>
      %162 = vector.shape_cast %159 : vector<8x128xf32> to vector<8x1x128xf32>
      tpu.vector_store %arg12[%c0_53, %c4_54, %c0_55], %162 {strides = array<i32>} : memref<8x8x128xf32, #tpu.memory_space<vmem>>, vector<8x1x128xf32>,
      %163 = vector.extract_strided_slice %26 {offsets = [5, 0], sizes = [1, 128], strides = [1, 1]} : vector<8x128xf32> to vector<1x128xf32>
      %164 = vector.broadcast %163 : vector<1x128xf32> to vector<8x128xf32>
      %165 = arith.mulf %37, %164 : vector<8x128xf32>
      %166 = math.exp %165 : vector<8x128xf32>
      %c0_56 = arith.constant 0 : index
      %c5 = arith.constant 5 : index
      %c0_57 = arith.constant 0 : index
      %167 = vector.load %arg11[%c0_56, %c5, %c0_57] : memref<8x8x128xf32, #tpu.memory_space<vmem>>, vector<8x1x128xf32>
      %168 = vector.shape_cast %167 : vector<8x1x128xf32> to vector<8x128xf32>
      %169 = vector.shape_cast %166 : vector<8x128xf32> to vector<8x1x128xf32>
      tpu.vector_store %arg11[%c0_56, %c5, %c0_57], %169 {strides = array<i32>} : memref<8x8x128xf32, #tpu.memory_space<vmem>>, vector<8x1x128xf32>,
      %170 = vector.extract_strided_slice %39 {offsets = [0, 5], sizes = [8, 1], strides = [1, 1]} : vector<8x32xf32> to vector<8x1xf32>
      %171 = vector.shape_cast %170 : vector<8x1xf32> to vector<8x1xf32>
      %172 = vector.broadcast %171 : vector<8x1xf32> to vector<8x32xf32>
      %173 = vector.extract_strided_slice %39 {offsets = [0, 13], sizes = [8, 1], strides = [1, 1]} : vector<8x32xf32> to vector<8x1xf32>
      %174 = vector.shape_cast %173 : vector<8x1xf32> to vector<8x1xf32>
      %175 = vector.broadcast %174 : vector<8x1xf32> to vector<8x32xf32>
      %176 = vector.extract_strided_slice %39 {offsets = [0, 21], sizes = [8, 1], strides = [1, 1]} : vector<8x32xf32> to vector<8x1xf32>
      %177 = vector.shape_cast %176 : vector<8x1xf32> to vector<8x1xf32>
      %178 = vector.broadcast %177 : vector<8x1xf32> to vector<8x32xf32>
      %179 = vector.extract_strided_slice %39 {offsets = [0, 29], sizes = [8, 1], strides = [1, 1]} : vector<8x32xf32> to vector<8x1xf32>
      %180 = vector.shape_cast %179 : vector<8x1xf32> to vector<8x1xf32>
      %181 = vector.broadcast %180 : vector<8x1xf32> to vector<8x32xf32>
      %182 = tpu.concatenate %172, %175, %178, %181 in 1 : vector<8x32xf32>, vector<8x32xf32>, vector<8x32xf32>, vector<8x32xf32> -> vector<8x128xf32>
      %183 = arith.mulf %182, %42 : vector<8x128xf32>
      %c0_58 = arith.constant 0 : index
      %c5_59 = arith.constant 5 : index
      %c0_60 = arith.constant 0 : index
      %184 = vector.load %arg12[%c0_58, %c5_59, %c0_60] : memref<8x8x128xf32, #tpu.memory_space<vmem>>, vector<8x1x128xf32>
      %185 = vector.shape_cast %184 : vector<8x1x128xf32> to vector<8x128xf32>
      %186 = vector.shape_cast %183 : vector<8x128xf32> to vector<8x1x128xf32>
      tpu.vector_store %arg12[%c0_58, %c5_59, %c0_60], %186 {strides = array<i32>} : memref<8x8x128xf32, #tpu.memory_space<vmem>>, vector<8x1x128xf32>,
      %187 = vector.extract_strided_slice %26 {offsets = [6, 0], sizes = [1, 128], strides = [1, 1]} : vector<8x128xf32> to vector<1x128xf32>
      %188 = vector.broadcast %187 : vector<1x128xf32> to vector<8x128xf32>
      %189 = arith.mulf %37, %188 : vector<8x128xf32>
      %190 = math.exp %189 : vector<8x128xf32>
      %c0_61 = arith.constant 0 : index
      %c6 = arith.constant 6 : index
      %c0_62 = arith.constant 0 : index
      %191 = vector.load %arg11[%c0_61, %c6, %c0_62] : memref<8x8x128xf32, #tpu.memory_space<vmem>>, vector<8x1x128xf32>
      %192 = vector.shape_cast %191 : vector<8x1x128xf32> to vector<8x128xf32>
      %193 = vector.shape_cast %190 : vector<8x128xf32> to vector<8x1x128xf32>
      tpu.vector_store %arg11[%c0_61, %c6, %c0_62], %193 {strides = array<i32>} : memref<8x8x128xf32, #tpu.memory_space<vmem>>, vector<8x1x128xf32>,
      %194 = vector.extract_strided_slice %39 {offsets = [0, 6], sizes = [8, 1], strides = [1, 1]} : vector<8x32xf32> to vector<8x1xf32>
      %195 = vector.shape_cast %194 : vector<8x1xf32> to vector<8x1xf32>
      %196 = vector.broadcast %195 : vector<8x1xf32> to vector<8x32xf32>
      %197 = vector.extract_strided_slice %39 {offsets = [0, 14], sizes = [8, 1], strides = [1, 1]} : vector<8x32xf32> to vector<8x1xf32>
      %198 = vector.shape_cast %197 : vector<8x1xf32> to vector<8x1xf32>
      %199 = vector.broadcast %198 : vector<8x1xf32> to vector<8x32xf32>
      %200 = vector.extract_strided_slice %39 {offsets = [0, 22], sizes = [8, 1], strides = [1, 1]} : vector<8x32xf32> to vector<8x1xf32>
      %201 = vector.shape_cast %200 : vector<8x1xf32> to vector<8x1xf32>
      %202 = vector.broadcast %201 : vector<8x1xf32> to vector<8x32xf32>
      %203 = vector.extract_strided_slice %39 {offsets = [0, 30], sizes = [8, 1], strides = [1, 1]} : vector<8x32xf32> to vector<8x1xf32>
      %204 = vector.shape_cast %203 : vector<8x1xf32> to vector<8x1xf32>
      %205 = vector.broadcast %204 : vector<8x1xf32> to vector<8x32xf32>
      %206 = tpu.concatenate %196, %199, %202, %205 in 1 : vector<8x32xf32>, vector<8x32xf32>, vector<8x32xf32>, vector<8x32xf32> -> vector<8x128xf32>
      %207 = arith.mulf %206, %42 : vector<8x128xf32>
      %c0_63 = arith.constant 0 : index
      %c6_64 = arith.constant 6 : index
      %c0_65 = arith.constant 0 : index
      %208 = vector.load %arg12[%c0_63, %c6_64, %c0_65] : memref<8x8x128xf32, #tpu.memory_space<vmem>>, vector<8x1x128xf32>
      %209 = vector.shape_cast %208 : vector<8x1x128xf32> to vector<8x128xf32>
      %210 = vector.shape_cast %207 : vector<8x128xf32> to vector<8x1x128xf32>
      tpu.vector_store %arg12[%c0_63, %c6_64, %c0_65], %210 {strides = array<i32>} : memref<8x8x128xf32, #tpu.memory_space<vmem>>, vector<8x1x128xf32>,
      %211 = vector.extract_strided_slice %26 {offsets = [7, 0], sizes = [1, 128], strides = [1, 1]} : vector<8x128xf32> to vector<1x128xf32>
      %212 = vector.broadcast %211 : vector<1x128xf32> to vector<8x128xf32>
      %213 = arith.mulf %37, %212 : vector<8x128xf32>
      %214 = math.exp %213 : vector<8x128xf32>
      %c0_66 = arith.constant 0 : index
      %c7 = arith.constant 7 : index
      %c0_67 = arith.constant 0 : index
      %215 = vector.load %arg11[%c0_66, %c7, %c0_67] : memref<8x8x128xf32, #tpu.memory_space<vmem>>, vector<8x1x128xf32>
      %216 = vector.shape_cast %215 : vector<8x1x128xf32> to vector<8x128xf32>
      %217 = vector.shape_cast %214 : vector<8x128xf32> to vector<8x1x128xf32>
      tpu.vector_store %arg11[%c0_66, %c7, %c0_67], %217 {strides = array<i32>} : memref<8x8x128xf32, #tpu.memory_space<vmem>>, vector<8x1x128xf32>,
      %218 = vector.extract_strided_slice %39 {offsets = [0, 7], sizes = [8, 1], strides = [1, 1]} : vector<8x32xf32> to vector<8x1xf32>
      %219 = vector.shape_cast %218 : vector<8x1xf32> to vector<8x1xf32>
      %220 = vector.broadcast %219 : vector<8x1xf32> to vector<8x32xf32>
      %221 = vector.extract_strided_slice %39 {offsets = [0, 15], sizes = [8, 1], strides = [1, 1]} : vector<8x32xf32> to vector<8x1xf32>
      %222 = vector.shape_cast %221 : vector<8x1xf32> to vector<8x1xf32>
      %223 = vector.broadcast %222 : vector<8x1xf32> to vector<8x32xf32>
      %224 = vector.extract_strided_slice %39 {offsets = [0, 23], sizes = [8, 1], strides = [1, 1]} : vector<8x32xf32> to vector<8x1xf32>
      %225 = vector.shape_cast %224 : vector<8x1xf32> to vector<8x1xf32>
      %226 = vector.broadcast %225 : vector<8x1xf32> to vector<8x32xf32>
      %227 = vector.extract_strided_slice %39 {offsets = [0, 31], sizes = [8, 1], strides = [1, 1]} : vector<8x32xf32> to vector<8x1xf32>
      %228 = vector.shape_cast %227 : vector<8x1xf32> to vector<8x1xf32>
      %229 = vector.broadcast %228 : vector<8x1xf32> to vector<8x32xf32>
      %230 = tpu.concatenate %220, %223, %226, %229 in 1 : vector<8x32xf32>, vector<8x32xf32>, vector<8x32xf32>, vector<8x32xf32> -> vector<8x128xf32>
      %231 = arith.mulf %230, %42 : vector<8x128xf32>
      %c0_68 = arith.constant 0 : index
      %c7_69 = arith.constant 7 : index
      %c0_70 = arith.constant 0 : index
      %232 = vector.load %arg12[%c0_68, %c7_69, %c0_70] : memref<8x8x128xf32, #tpu.memory_space<vmem>>, vector<8x1x128xf32>
      %233 = vector.shape_cast %232 : vector<8x1x128xf32> to vector<8x128xf32>
      %234 = vector.shape_cast %231 : vector<8x128xf32> to vector<8x1x128xf32>
      tpu.vector_store %arg12[%c0_68, %c7_69, %c0_70], %234 {strides = array<i32>} : memref<8x8x128xf32, #tpu.memory_space<vmem>>, vector<8x1x128xf32>,
      %c0_71 = arith.constant 0 : index
      %c0_72 = arith.constant 0 : index
      %c0_73 = arith.constant 0 : index
      %235 = vector.load %arg11[%c0_71, %c0_72, %c0_73] : memref<8x8x128xf32, #tpu.memory_space<vmem>>, vector<1x8x128xf32>
      %236 = vector.shape_cast %235 : vector<1x8x128xf32> to vector<8x128xf32>
      %237 = arith.mulf %arg15, %236 : vector<8x128xf32>
      %c0_74 = arith.constant 0 : index
      %c0_75 = arith.constant 0 : index
      %c0_76 = arith.constant 0 : index
      %238 = vector.load %arg12[%c0_74, %c0_75, %c0_76] : memref<8x8x128xf32, #tpu.memory_space<vmem>>, vector<1x8x128xf32>
      %239 = vector.shape_cast %238 : vector<1x8x128xf32> to vector<8x128xf32>
      %240 = arith.addf %237, %239 : vector<8x128xf32>
      %c0_77 = arith.constant 0 : index
      %c0_78 = arith.constant 0 : index
      %c0_79 = arith.constant 0 : index
      %241 = vector.load %arg13[%c0_77, %c0_78, %c0_79] : memref<8x8x128xf32, #tpu.memory_space<vmem>>, vector<1x8x128xf32>
      %242 = vector.shape_cast %241 : vector<1x8x128xf32> to vector<8x128xf32>
      %243 = vector.shape_cast %240 : vector<8x128xf32> to vector<1x8x128xf32>
      tpu.vector_store %arg13[%c0_77, %c0_78, %c0_79], %243 {strides = array<i32>} : memref<8x8x128xf32, #tpu.memory_space<vmem>>, vector<1x8x128xf32>,
      %c1_80 = arith.constant 1 : index
      %c0_81 = arith.constant 0 : index
      %c0_82 = arith.constant 0 : index
      %244 = vector.load %arg11[%c1_80, %c0_81, %c0_82] : memref<8x8x128xf32, #tpu.memory_space<vmem>>, vector<1x8x128xf32>
      %245 = vector.shape_cast %244 : vector<1x8x128xf32> to vector<8x128xf32>
      %246 = arith.mulf %240, %245 : vector<8x128xf32>
      %c1_83 = arith.constant 1 : index
      %c0_84 = arith.constant 0 : index
      %c0_85 = arith.constant 0 : index
      %247 = vector.load %arg12[%c1_83, %c0_84, %c0_85] : memref<8x8x128xf32, #tpu.memory_space<vmem>>, vector<1x8x128xf32>
      %248 = vector.shape_cast %247 : vector<1x8x128xf32> to vector<8x128xf32>
      %249 = arith.addf %246, %248 : vector<8x128xf32>
      %c1_86 = arith.constant 1 : index
      %c0_87 = arith.constant 0 : index
      %c0_88 = arith.constant 0 : index
      %250 = vector.load %arg13[%c1_86, %c0_87, %c0_88] : memref<8x8x128xf32, #tpu.memory_space<vmem>>, vector<1x8x128xf32>
      %251 = vector.shape_cast %250 : vector<1x8x128xf32> to vector<8x128xf32>
      %252 = vector.shape_cast %249 : vector<8x128xf32> to vector<1x8x128xf32>
      tpu.vector_store %arg13[%c1_86, %c0_87, %c0_88], %252 {strides = array<i32>} : memref<8x8x128xf32, #tpu.memory_space<vmem>>, vector<1x8x128xf32>,
      %c2_89 = arith.constant 2 : index
      %c0_90 = arith.constant 0 : index
      %c0_91 = arith.constant 0 : index
      %253 = vector.load %arg11[%c2_89, %c0_90, %c0_91] : memref<8x8x128xf32, #tpu.memory_space<vmem>>, vector<1x8x128xf32>
      %254 = vector.shape_cast %253 : vector<1x8x128xf32> to vector<8x128xf32>
      %255 = arith.mulf %249, %254 : vector<8x128xf32>
      %c2_92 = arith.constant 2 : index
      %c0_93 = arith.constant 0 : index
      %c0_94 = arith.constant 0 : index
      %256 = vector.load %arg12[%c2_92, %c0_93, %c0_94] : memref<8x8x128xf32, #tpu.memory_space<vmem>>, vector<1x8x128xf32>
      %257 = vector.shape_cast %256 : vector<1x8x128xf32> to vector<8x128xf32>
      %258 = arith.addf %255, %257 : vector<8x128xf32>
      %c2_95 = arith.constant 2 : index
      %c0_96 = arith.constant 0 : index
      %c0_97 = arith.constant 0 : index
      %259 = vector.load %arg13[%c2_95, %c0_96, %c0_97] : memref<8x8x128xf32, #tpu.memory_space<vmem>>, vector<1x8x128xf32>
      %260 = vector.shape_cast %259 : vector<1x8x128xf32> to vector<8x128xf32>
      %261 = vector.shape_cast %258 : vector<8x128xf32> to vector<1x8x128xf32>
      tpu.vector_store %arg13[%c2_95, %c0_96, %c0_97], %261 {strides = array<i32>} : memref<8x8x128xf32, #tpu.memory_space<vmem>>, vector<1x8x128xf32>,
      %c3_98 = arith.constant 3 : index
      %c0_99 = arith.constant 0 : index
      %c0_100 = arith.constant 0 : index
      %262 = vector.load %arg11[%c3_98, %c0_99, %c0_100] : memref<8x8x128xf32, #tpu.memory_space<vmem>>, vector<1x8x128xf32>
      %263 = vector.shape_cast %262 : vector<1x8x128xf32> to vector<8x128xf32>
      %264 = arith.mulf %258, %263 : vector<8x128xf32>
      %c3_101 = arith.constant 3 : index
      %c0_102 = arith.constant 0 : index
      %c0_103 = arith.constant 0 : index
      %265 = vector.load %arg12[%c3_101, %c0_102, %c0_103] : memref<8x8x128xf32, #tpu.memory_space<vmem>>, vector<1x8x128xf32>
      %266 = vector.shape_cast %265 : vector<1x8x128xf32> to vector<8x128xf32>
      %267 = arith.addf %264, %266 : vector<8x128xf32>
      %c3_104 = arith.constant 3 : index
      %c0_105 = arith.constant 0 : index
      %c0_106 = arith.constant 0 : index
      %268 = vector.load %arg13[%c3_104, %c0_105, %c0_106] : memref<8x8x128xf32, #tpu.memory_space<vmem>>, vector<1x8x128xf32>
      %269 = vector.shape_cast %268 : vector<1x8x128xf32> to vector<8x128xf32>
      %270 = vector.shape_cast %267 : vector<8x128xf32> to vector<1x8x128xf32>
      tpu.vector_store %arg13[%c3_104, %c0_105, %c0_106], %270 {strides = array<i32>} : memref<8x8x128xf32, #tpu.memory_space<vmem>>, vector<1x8x128xf32>,
      %c4_107 = arith.constant 4 : index
      %c0_108 = arith.constant 0 : index
      %c0_109 = arith.constant 0 : index
      %271 = vector.load %arg11[%c4_107, %c0_108, %c0_109] : memref<8x8x128xf32, #tpu.memory_space<vmem>>, vector<1x8x128xf32>
      %272 = vector.shape_cast %271 : vector<1x8x128xf32> to vector<8x128xf32>
      %273 = arith.mulf %267, %272 : vector<8x128xf32>
      %c4_110 = arith.constant 4 : index
      %c0_111 = arith.constant 0 : index
      %c0_112 = arith.constant 0 : index
      %274 = vector.load %arg12[%c4_110, %c0_111, %c0_112] : memref<8x8x128xf32, #tpu.memory_space<vmem>>, vector<1x8x128xf32>
      %275 = vector.shape_cast %274 : vector<1x8x128xf32> to vector<8x128xf32>
      %276 = arith.addf %273, %275 : vector<8x128xf32>
      %c4_113 = arith.constant 4 : index
      %c0_114 = arith.constant 0 : index
      %c0_115 = arith.constant 0 : index
      %277 = vector.load %arg13[%c4_113, %c0_114, %c0_115] : memref<8x8x128xf32, #tpu.memory_space<vmem>>, vector<1x8x128xf32>
      %278 = vector.shape_cast %277 : vector<1x8x128xf32> to vector<8x128xf32>
      %279 = vector.shape_cast %276 : vector<8x128xf32> to vector<1x8x128xf32>
      tpu.vector_store %arg13[%c4_113, %c0_114, %c0_115], %279 {strides = array<i32>} : memref<8x8x128xf32, #tpu.memory_space<vmem>>, vector<1x8x128xf32>,
      %c5_116 = arith.constant 5 : index
      %c0_117 = arith.constant 0 : index
      %c0_118 = arith.constant 0 : index
      %280 = vector.load %arg11[%c5_116, %c0_117, %c0_118] : memref<8x8x128xf32, #tpu.memory_space<vmem>>, vector<1x8x128xf32>
      %281 = vector.shape_cast %280 : vector<1x8x128xf32> to vector<8x128xf32>
      %282 = arith.mulf %276, %281 : vector<8x128xf32>
      %c5_119 = arith.constant 5 : index
      %c0_120 = arith.constant 0 : index
      %c0_121 = arith.constant 0 : index
      %283 = vector.load %arg12[%c5_119, %c0_120, %c0_121] : memref<8x8x128xf32, #tpu.memory_space<vmem>>, vector<1x8x128xf32>
      %284 = vector.shape_cast %283 : vector<1x8x128xf32> to vector<8x128xf32>
      %285 = arith.addf %282, %284 : vector<8x128xf32>
      %c5_122 = arith.constant 5 : index
      %c0_123 = arith.constant 0 : index
      %c0_124 = arith.constant 0 : index
      %286 = vector.load %arg13[%c5_122, %c0_123, %c0_124] : memref<8x8x128xf32, #tpu.memory_space<vmem>>, vector<1x8x128xf32>
      %287 = vector.shape_cast %286 : vector<1x8x128xf32> to vector<8x128xf32>
      %288 = vector.shape_cast %285 : vector<8x128xf32> to vector<1x8x128xf32>
      tpu.vector_store %arg13[%c5_122, %c0_123, %c0_124], %288 {strides = array<i32>} : memref<8x8x128xf32, #tpu.memory_space<vmem>>, vector<1x8x128xf32>,
      %c6_125 = arith.constant 6 : index
      %c0_126 = arith.constant 0 : index
      %c0_127 = arith.constant 0 : index
      %289 = vector.load %arg11[%c6_125, %c0_126, %c0_127] : memref<8x8x128xf32, #tpu.memory_space<vmem>>, vector<1x8x128xf32>
      %290 = vector.shape_cast %289 : vector<1x8x128xf32> to vector<8x128xf32>
      %291 = arith.mulf %285, %290 : vector<8x128xf32>
      %c6_128 = arith.constant 6 : index
      %c0_129 = arith.constant 0 : index
      %c0_130 = arith.constant 0 : index
      %292 = vector.load %arg12[%c6_128, %c0_129, %c0_130] : memref<8x8x128xf32, #tpu.memory_space<vmem>>, vector<1x8x128xf32>
      %293 = vector.shape_cast %292 : vector<1x8x128xf32> to vector<8x128xf32>
      %294 = arith.addf %291, %293 : vector<8x128xf32>
      %c6_131 = arith.constant 6 : index
      %c0_132 = arith.constant 0 : index
      %c0_133 = arith.constant 0 : index
      %295 = vector.load %arg13[%c6_131, %c0_132, %c0_133] : memref<8x8x128xf32, #tpu.memory_space<vmem>>, vector<1x8x128xf32>
      %296 = vector.shape_cast %295 : vector<1x8x128xf32> to vector<8x128xf32>
      %297 = vector.shape_cast %294 : vector<8x128xf32> to vector<1x8x128xf32>
      tpu.vector_store %arg13[%c6_131, %c0_132, %c0_133], %297 {strides = array<i32>} : memref<8x8x128xf32, #tpu.memory_space<vmem>>, vector<1x8x128xf32>,
      %c7_134 = arith.constant 7 : index
      %c0_135 = arith.constant 0 : index
      %c0_136 = arith.constant 0 : index
      %298 = vector.load %arg11[%c7_134, %c0_135, %c0_136] : memref<8x8x128xf32, #tpu.memory_space<vmem>>, vector<1x8x128xf32>
      %299 = vector.shape_cast %298 : vector<1x8x128xf32> to vector<8x128xf32>
      %300 = arith.mulf %294, %299 : vector<8x128xf32>
      %c7_137 = arith.constant 7 : index
      %c0_138 = arith.constant 0 : index
      %c0_139 = arith.constant 0 : index
      %301 = vector.load %arg12[%c7_137, %c0_138, %c0_139] : memref<8x8x128xf32, #tpu.memory_space<vmem>>, vector<1x8x128xf32>
      %302 = vector.shape_cast %301 : vector<1x8x128xf32> to vector<8x128xf32>
      %303 = arith.addf %300, %302 : vector<8x128xf32>
      %c7_140 = arith.constant 7 : index
      %c0_141 = arith.constant 0 : index
      %c0_142 = arith.constant 0 : index
      %304 = vector.load %arg13[%c7_140, %c0_141, %c0_142] : memref<8x8x128xf32, #tpu.memory_space<vmem>>, vector<1x8x128xf32>
      %305 = vector.shape_cast %304 : vector<1x8x128xf32> to vector<8x128xf32>
      %306 = vector.shape_cast %303 : vector<8x128xf32> to vector<1x8x128xf32>
      tpu.vector_store %arg13[%c7_140, %c0_141, %c0_142], %306 {strides = array<i32>} : memref<8x8x128xf32, #tpu.memory_space<vmem>>, vector<1x8x128xf32>,
      %307 = vector.broadcast %27 : vector<1x128xf32> to vector<8x128xf32>
      %308 = arith.mulf %307, %35 : vector<8x128xf32>
      %309 = vector.extract_strided_slice %41 {offsets = [0, 0], sizes = [8, 1], strides = [1, 1]} : vector<8x32xf32> to vector<8x1xf32>
      %310 = vector.shape_cast %309 : vector<8x1xf32> to vector<8x1xf32>
      %311 = vector.broadcast %310 : vector<8x1xf32> to vector<8x32xf32>
      %312 = vector.extract_strided_slice %41 {offsets = [0, 8], sizes = [8, 1], strides = [1, 1]} : vector<8x32xf32> to vector<8x1xf32>
      %313 = vector.shape_cast %312 : vector<8x1xf32> to vector<8x1xf32>
      %314 = vector.broadcast %313 : vector<8x1xf32> to vector<8x32xf32>
      %315 = vector.extract_strided_slice %41 {offsets = [0, 16], sizes = [8, 1], strides = [1, 1]} : vector<8x32xf32> to vector<8x1xf32>
      %316 = vector.shape_cast %315 : vector<8x1xf32> to vector<8x1xf32>
      %317 = vector.broadcast %316 : vector<8x1xf32> to vector<8x32xf32>
      %318 = vector.extract_strided_slice %41 {offsets = [0, 24], sizes = [8, 1], strides = [1, 1]} : vector<8x32xf32> to vector<8x1xf32>
      %319 = vector.shape_cast %318 : vector<8x1xf32> to vector<8x1xf32>
      %320 = vector.broadcast %319 : vector<8x1xf32> to vector<8x32xf32>
      %321 = tpu.concatenate %311, %314, %317, %320 in 1 : vector<8x32xf32>, vector<8x32xf32>, vector<8x32xf32>, vector<8x32xf32> -> vector<8x128xf32>
      %c0_143 = arith.constant 0 : index
      %c0_144 = arith.constant 0 : index
      %c0_145 = arith.constant 0 : index
      %322 = vector.load %arg13[%c0_143, %c0_144, %c0_145] : memref<8x8x128xf32, #tpu.memory_space<vmem>>, vector<8x1x128xf32>
      %323 = vector.shape_cast %322 : vector<8x1x128xf32> to vector<8x128xf32>
      %324 = arith.mulf %323, %321 : vector<8x128xf32>
      %325 = arith.addf %308, %324 : vector<8x128xf32>
      %326 = vector.extract_strided_slice %41 {offsets = [0, 1], sizes = [8, 1], strides = [1, 1]} : vector<8x32xf32> to vector<8x1xf32>
      %327 = vector.shape_cast %326 : vector<8x1xf32> to vector<8x1xf32>
      %328 = vector.broadcast %327 : vector<8x1xf32> to vector<8x32xf32>
      %329 = vector.extract_strided_slice %41 {offsets = [0, 9], sizes = [8, 1], strides = [1, 1]} : vector<8x32xf32> to vector<8x1xf32>
      %330 = vector.shape_cast %329 : vector<8x1xf32> to vector<8x1xf32>
      %331 = vector.broadcast %330 : vector<8x1xf32> to vector<8x32xf32>
      %332 = vector.extract_strided_slice %41 {offsets = [0, 17], sizes = [8, 1], strides = [1, 1]} : vector<8x32xf32> to vector<8x1xf32>
      %333 = vector.shape_cast %332 : vector<8x1xf32> to vector<8x1xf32>
      %334 = vector.broadcast %333 : vector<8x1xf32> to vector<8x32xf32>
      %335 = vector.extract_strided_slice %41 {offsets = [0, 25], sizes = [8, 1], strides = [1, 1]} : vector<8x32xf32> to vector<8x1xf32>
      %336 = vector.shape_cast %335 : vector<8x1xf32> to vector<8x1xf32>
      %337 = vector.broadcast %336 : vector<8x1xf32> to vector<8x32xf32>
      %338 = tpu.concatenate %328, %331, %334, %337 in 1 : vector<8x32xf32>, vector<8x32xf32>, vector<8x32xf32>, vector<8x32xf32> -> vector<8x128xf32>
      %c0_146 = arith.constant 0 : index
      %c1_147 = arith.constant 1 : index
      %c0_148 = arith.constant 0 : index
      %339 = vector.load %arg13[%c0_146, %c1_147, %c0_148] : memref<8x8x128xf32, #tpu.memory_space<vmem>>, vector<8x1x128xf32>
      %340 = vector.shape_cast %339 : vector<8x1x128xf32> to vector<8x128xf32>
      %341 = arith.mulf %340, %338 : vector<8x128xf32>
      %342 = arith.addf %325, %341 : vector<8x128xf32>
      %343 = vector.extract_strided_slice %41 {offsets = [0, 2], sizes = [8, 1], strides = [1, 1]} : vector<8x32xf32> to vector<8x1xf32>
      %344 = vector.shape_cast %343 : vector<8x1xf32> to vector<8x1xf32>
      %345 = vector.broadcast %344 : vector<8x1xf32> to vector<8x32xf32>
      %346 = vector.extract_strided_slice %41 {offsets = [0, 10], sizes = [8, 1], strides = [1, 1]} : vector<8x32xf32> to vector<8x1xf32>
      %347 = vector.shape_cast %346 : vector<8x1xf32> to vector<8x1xf32>
      %348 = vector.broadcast %347 : vector<8x1xf32> to vector<8x32xf32>
      %349 = vector.extract_strided_slice %41 {offsets = [0, 18], sizes = [8, 1], strides = [1, 1]} : vector<8x32xf32> to vector<8x1xf32>
      %350 = vector.shape_cast %349 : vector<8x1xf32> to vector<8x1xf32>
      %351 = vector.broadcast %350 : vector<8x1xf32> to vector<8x32xf32>
      %352 = vector.extract_strided_slice %41 {offsets = [0, 26], sizes = [8, 1], strides = [1, 1]} : vector<8x32xf32> to vector<8x1xf32>
      %353 = vector.shape_cast %352 : vector<8x1xf32> to vector<8x1xf32>
      %354 = vector.broadcast %353 : vector<8x1xf32> to vector<8x32xf32>
      %355 = tpu.concatenate %345, %348, %351, %354 in 1 : vector<8x32xf32>, vector<8x32xf32>, vector<8x32xf32>, vector<8x32xf32> -> vector<8x128xf32>
      %c0_149 = arith.constant 0 : index
      %c2_150 = arith.constant 2 : index
      %c0_151 = arith.constant 0 : index
      %356 = vector.load %arg13[%c0_149, %c2_150, %c0_151] : memref<8x8x128xf32, #tpu.memory_space<vmem>>, vector<8x1x128xf32>
      %357 = vector.shape_cast %356 : vector<8x1x128xf32> to vector<8x128xf32>
      %358 = arith.mulf %357, %355 : vector<8x128xf32>
      %359 = arith.addf %342, %358 : vector<8x128xf32>
      %360 = vector.extract_strided_slice %41 {offsets = [0, 3], sizes = [8, 1], strides = [1, 1]} : vector<8x32xf32> to vector<8x1xf32>
      %361 = vector.shape_cast %360 : vector<8x1xf32> to vector<8x1xf32>
      %362 = vector.broadcast %361 : vector<8x1xf32> to vector<8x32xf32>
      %363 = vector.extract_strided_slice %41 {offsets = [0, 11], sizes = [8, 1], strides = [1, 1]} : vector<8x32xf32> to vector<8x1xf32>
      %364 = vector.shape_cast %363 : vector<8x1xf32> to vector<8x1xf32>
      %365 = vector.broadcast %364 : vector<8x1xf32> to vector<8x32xf32>
      %366 = vector.extract_strided_slice %41 {offsets = [0, 19], sizes = [8, 1], strides = [1, 1]} : vector<8x32xf32> to vector<8x1xf32>
      %367 = vector.shape_cast %366 : vector<8x1xf32> to vector<8x1xf32>
      %368 = vector.broadcast %367 : vector<8x1xf32> to vector<8x32xf32>
      %369 = vector.extract_strided_slice %41 {offsets = [0, 27], sizes = [8, 1], strides = [1, 1]} : vector<8x32xf32> to vector<8x1xf32>
      %370 = vector.shape_cast %369 : vector<8x1xf32> to vector<8x1xf32>
      %371 = vector.broadcast %370 : vector<8x1xf32> to vector<8x32xf32>
      %372 = tpu.concatenate %362, %365, %368, %371 in 1 : vector<8x32xf32>, vector<8x32xf32>, vector<8x32xf32>, vector<8x32xf32> -> vector<8x128xf32>
      %c0_152 = arith.constant 0 : index
      %c3_153 = arith.constant 3 : index
      %c0_154 = arith.constant 0 : index
      %373 = vector.load %arg13[%c0_152, %c3_153, %c0_154] : memref<8x8x128xf32, #tpu.memory_space<vmem>>, vector<8x1x128xf32>
      %374 = vector.shape_cast %373 : vector<8x1x128xf32> to vector<8x128xf32>
      %375 = arith.mulf %374, %372 : vector<8x128xf32>
      %376 = arith.addf %359, %375 : vector<8x128xf32>
      %377 = vector.extract_strided_slice %41 {offsets = [0, 4], sizes = [8, 1], strides = [1, 1]} : vector<8x32xf32> to vector<8x1xf32>
      %378 = vector.shape_cast %377 : vector<8x1xf32> to vector<8x1xf32>
      %379 = vector.broadcast %378 : vector<8x1xf32> to vector<8x32xf32>
      %380 = vector.extract_strided_slice %41 {offsets = [0, 12], sizes = [8, 1], strides = [1, 1]} : vector<8x32xf32> to vector<8x1xf32>
      %381 = vector.shape_cast %380 : vector<8x1xf32> to vector<8x1xf32>
      %382 = vector.broadcast %381 : vector<8x1xf32> to vector<8x32xf32>
      %383 = vector.extract_strided_slice %41 {offsets = [0, 20], sizes = [8, 1], strides = [1, 1]} : vector<8x32xf32> to vector<8x1xf32>
      %384 = vector.shape_cast %383 : vector<8x1xf32> to vector<8x1xf32>
      %385 = vector.broadcast %384 : vector<8x1xf32> to vector<8x32xf32>
      %386 = vector.extract_strided_slice %41 {offsets = [0, 28], sizes = [8, 1], strides = [1, 1]} : vector<8x32xf32> to vector<8x1xf32>
      %387 = vector.shape_cast %386 : vector<8x1xf32> to vector<8x1xf32>
      %388 = vector.broadcast %387 : vector<8x1xf32> to vector<8x32xf32>
      %389 = tpu.concatenate %379, %382, %385, %388 in 1 : vector<8x32xf32>, vector<8x32xf32>, vector<8x32xf32>, vector<8x32xf32> -> vector<8x128xf32>
      %c0_155 = arith.constant 0 : index
      %c4_156 = arith.constant 4 : index
      %c0_157 = arith.constant 0 : index
      %390 = vector.load %arg13[%c0_155, %c4_156, %c0_157] : memref<8x8x128xf32, #tpu.memory_space<vmem>>, vector<8x1x128xf32>
      %391 = vector.shape_cast %390 : vector<8x1x128xf32> to vector<8x128xf32>
      %392 = arith.mulf %391, %389 : vector<8x128xf32>
      %393 = arith.addf %376, %392 : vector<8x128xf32>
      %394 = vector.extract_strided_slice %41 {offsets = [0, 5], sizes = [8, 1], strides = [1, 1]} : vector<8x32xf32> to vector<8x1xf32>
      %395 = vector.shape_cast %394 : vector<8x1xf32> to vector<8x1xf32>
      %396 = vector.broadcast %395 : vector<8x1xf32> to vector<8x32xf32>
      %397 = vector.extract_strided_slice %41 {offsets = [0, 13], sizes = [8, 1], strides = [1, 1]} : vector<8x32xf32> to vector<8x1xf32>
      %398 = vector.shape_cast %397 : vector<8x1xf32> to vector<8x1xf32>
      %399 = vector.broadcast %398 : vector<8x1xf32> to vector<8x32xf32>
      %400 = vector.extract_strided_slice %41 {offsets = [0, 21], sizes = [8, 1], strides = [1, 1]} : vector<8x32xf32> to vector<8x1xf32>
      %401 = vector.shape_cast %400 : vector<8x1xf32> to vector<8x1xf32>
      %402 = vector.broadcast %401 : vector<8x1xf32> to vector<8x32xf32>
      %403 = vector.extract_strided_slice %41 {offsets = [0, 29], sizes = [8, 1], strides = [1, 1]} : vector<8x32xf32> to vector<8x1xf32>
      %404 = vector.shape_cast %403 : vector<8x1xf32> to vector<8x1xf32>
      %405 = vector.broadcast %404 : vector<8x1xf32> to vector<8x32xf32>
      %406 = tpu.concatenate %396, %399, %402, %405 in 1 : vector<8x32xf32>, vector<8x32xf32>, vector<8x32xf32>, vector<8x32xf32> -> vector<8x128xf32>
      %c0_158 = arith.constant 0 : index
      %c5_159 = arith.constant 5 : index
      %c0_160 = arith.constant 0 : index
      %407 = vector.load %arg13[%c0_158, %c5_159, %c0_160] : memref<8x8x128xf32, #tpu.memory_space<vmem>>, vector<8x1x128xf32>
      %408 = vector.shape_cast %407 : vector<8x1x128xf32> to vector<8x128xf32>
      %409 = arith.mulf %408, %406 : vector<8x128xf32>
      %410 = arith.addf %393, %409 : vector<8x128xf32>
      %411 = vector.extract_strided_slice %41 {offsets = [0, 6], sizes = [8, 1], strides = [1, 1]} : vector<8x32xf32> to vector<8x1xf32>
      %412 = vector.shape_cast %411 : vector<8x1xf32> to vector<8x1xf32>
      %413 = vector.broadcast %412 : vector<8x1xf32> to vector<8x32xf32>
      %414 = vector.extract_strided_slice %41 {offsets = [0, 14], sizes = [8, 1], strides = [1, 1]} : vector<8x32xf32> to vector<8x1xf32>
      %415 = vector.shape_cast %414 : vector<8x1xf32> to vector<8x1xf32>
      %416 = vector.broadcast %415 : vector<8x1xf32> to vector<8x32xf32>
      %417 = vector.extract_strided_slice %41 {offsets = [0, 22], sizes = [8, 1], strides = [1, 1]} : vector<8x32xf32> to vector<8x1xf32>
      %418 = vector.shape_cast %417 : vector<8x1xf32> to vector<8x1xf32>
      %419 = vector.broadcast %418 : vector<8x1xf32> to vector<8x32xf32>
      %420 = vector.extract_strided_slice %41 {offsets = [0, 30], sizes = [8, 1], strides = [1, 1]} : vector<8x32xf32> to vector<8x1xf32>
      %421 = vector.shape_cast %420 : vector<8x1xf32> to vector<8x1xf32>
      %422 = vector.broadcast %421 : vector<8x1xf32> to vector<8x32xf32>
      %423 = tpu.concatenate %413, %416, %419, %422 in 1 : vector<8x32xf32>, vector<8x32xf32>, vector<8x32xf32>, vector<8x32xf32> -> vector<8x128xf32>
      %c0_161 = arith.constant 0 : index
      %c6_162 = arith.constant 6 : index
      %c0_163 = arith.constant 0 : index
      %424 = vector.load %arg13[%c0_161, %c6_162, %c0_163] : memref<8x8x128xf32, #tpu.memory_space<vmem>>, vector<8x1x128xf32>
      %425 = vector.shape_cast %424 : vector<8x1x128xf32> to vector<8x128xf32>
      %426 = arith.mulf %425, %423 : vector<8x128xf32>
      %427 = arith.addf %410, %426 : vector<8x128xf32>
      %428 = vector.extract_strided_slice %41 {offsets = [0, 7], sizes = [8, 1], strides = [1, 1]} : vector<8x32xf32> to vector<8x1xf32>
      %429 = vector.shape_cast %428 : vector<8x1xf32> to vector<8x1xf32>
      %430 = vector.broadcast %429 : vector<8x1xf32> to vector<8x32xf32>
      %431 = vector.extract_strided_slice %41 {offsets = [0, 15], sizes = [8, 1], strides = [1, 1]} : vector<8x32xf32> to vector<8x1xf32>
      %432 = vector.shape_cast %431 : vector<8x1xf32> to vector<8x1xf32>
      %433 = vector.broadcast %432 : vector<8x1xf32> to vector<8x32xf32>
      %434 = vector.extract_strided_slice %41 {offsets = [0, 23], sizes = [8, 1], strides = [1, 1]} : vector<8x32xf32> to vector<8x1xf32>
      %435 = vector.shape_cast %434 : vector<8x1xf32> to vector<8x1xf32>
      %436 = vector.broadcast %435 : vector<8x1xf32> to vector<8x32xf32>
      %437 = vector.extract_strided_slice %41 {offsets = [0, 31], sizes = [8, 1], strides = [1, 1]} : vector<8x32xf32> to vector<8x1xf32>
      %438 = vector.shape_cast %437 : vector<8x1xf32> to vector<8x1xf32>
      %439 = vector.broadcast %438 : vector<8x1xf32> to vector<8x32xf32>
      %440 = tpu.concatenate %430, %433, %436, %439 in 1 : vector<8x32xf32>, vector<8x32xf32>, vector<8x32xf32>, vector<8x32xf32> -> vector<8x128xf32>
      %c0_164 = arith.constant 0 : index
      %c7_165 = arith.constant 7 : index
      %c0_166 = arith.constant 0 : index
      %441 = vector.load %arg13[%c0_164, %c7_165, %c0_166] : memref<8x8x128xf32, #tpu.memory_space<vmem>>, vector<8x1x128xf32>
      %442 = vector.shape_cast %441 : vector<8x1x128xf32> to vector<8x128xf32>
      %443 = arith.mulf %442, %440 : vector<8x128xf32>
      %444 = arith.addf %427, %443 : vector<8x128xf32>
      %c0_167 = arith.constant 0 : index
      %445 = arith.index_cast %32 : i32 to index
      %c0_168 = arith.constant 0 : index
      %446 = vector.load %arg7[%c0_167, %445, %c0_168] : memref<1x64x128xf32, #tpu.memory_space<vmem>>, vector<1x8x128xf32>
      %447 = vector.shape_cast %446 : vector<1x8x128xf32> to vector<8x128xf32>
      %448 = vector.shape_cast %444 : vector<8x128xf32> to vector<1x8x128xf32>
      tpu.vector_store %arg7[%c0_167, %445, %c0_168], %448 {strides = array<i32>} : memref<1x64x128xf32, #tpu.memory_space<vmem>>, vector<1x8x128xf32>,
      scf.yield %303 : vector<8x128xf32>
    }
    %c8_i32_23 = arith.constant 8 : i32
    return
  }
  func.func @transform_0(%arg0: i32) -> (i32, i32, i32) {
    %c0_i32 = arith.constant 0 : i32
    %c0_i32_0 = arith.constant 0 : i32
    %c0_i32_1 = arith.constant 0 : i32
    return %arg0, %c0_i32, %c0_i32_0 : i32, i32, i32
  }
  func.func @transform_1(%arg0: i32) -> (i32, i32) {
    %c0_i32 = arith.constant 0 : i32
    %c0_i32_0 = arith.constant 0 : i32
    %c0_i32_1 = arith.constant 0 : i32
    return %c0_i32, %c0_i32_0 : i32, i32
  }
  func.func @transform_2(%arg0: i32) -> (i32, i32) {
    %c0_i32 = arith.constant 0 : i32
    %c0_i32_0 = arith.constant 0 : i32
    %c0_i32_1 = arith.constant 0 : i32
    return %c0_i32, %c0_i32_0 : i32, i32
  }
  func.func @transform_3(%arg0: i32) -> (i32, i32) {
    %c0_i32 = arith.constant 0 : i32
    %c0_i32_0 = arith.constant 0 : i32
    %c0_i32_1 = arith.constant 0 : i32
    return %c0_i32, %c0_i32_0 : i32, i32
  }
  func.func @transform_4(%arg0: i32) -> (i32, i32) {
    %c0_i32 = arith.constant 0 : i32
    %c0_i32_0 = arith.constant 0 : i32
    %c0_i32_1 = arith.constant 0 : i32
    return %c0_i32, %c0_i32_0 : i32, i32
  }
  func.func @transform_5(%arg0: i32) -> (i32, i32) {
    %c0_i32 = arith.constant 0 : i32
    %c0_i32_0 = arith.constant 0 : i32
    %c0_i32_1 = arith.constant 0 : i32
    return %c0_i32, %c0_i32_0 : i32, i32
  }
  func.func @transform_6(%arg0: i32) -> (i32, i32, i32) {
    %c0_i32 = arith.constant 0 : i32
    %c0_i32_0 = arith.constant 0 : i32
    %c0_i32_1 = arith.constant 0 : i32
    return %arg0, %c0_i32, %c0_i32_0 : i32, i32, i32
  }
}

module attributes {stable_mosaic.version = 11 : i64} {
  func.func @out_gate_kernel(%arg0: i32, %arg1: memref<128x32xf32, #tpu.memory_space<vmem>>, %arg2: memref<128x32xf32, #tpu.memory_space<vmem>>, %arg3: memref<1x32xf32, #tpu.memory_space<vmem>>, %arg4: memref<1x32xf32, #tpu.memory_space<vmem>>, %arg5: memref<32x16xbf16, #tpu.memory_space<vmem>>, %arg6: memref<128x16xf32, #tpu.memory_space<vmem>>, %arg7: memref<128x16xf32, #tpu.memory_space<vmem>>) attributes {dimension_semantics = [#tpu.dimension_semantics<parallel>], iteration_bounds = array<i64: 1>, scalar_prefetch = 0 : i64, scratch_operands = 0 : i64, tpu.core_type = #tpu.core_type<tc>, window_params = [{transform_indices = @transform_0, window_bounds = array<i64: 128, 32>}, {transform_indices = @transform_1, window_bounds = array<i64: 128, 32>}, {pipeline_mode = #tpu.pipeline_mode<synchronous>, transform_indices = @transform_2, window_bounds = array<i64: 1, 32>}, {pipeline_mode = #tpu.pipeline_mode<synchronous>, transform_indices = @transform_3, window_bounds = array<i64: 1, 32>}, {pipeline_mode = #tpu.pipeline_mode<synchronous>, transform_indices = @transform_4, window_bounds = array<i64: 32, 16>}, {transform_indices = @transform_5, window_bounds = array<i64: 128, 16>}, {transform_indices = @transform_6, window_bounds = array<i64: 128, 16>}]} {
    %c0 = arith.constant 0 : index
    %c0_0 = arith.constant 0 : index
    %0 = vector.load %arg1[%c0, %c0_0] : memref<128x32xf32, #tpu.memory_space<vmem>>, vector<128x32xf32>
    %cst = arith.constant dense<0.000000e+00> : vector<128xf32>
    %1 = vector.multi_reduction <add>, %0, %cst [1] : vector<128x32xf32> to vector<128xf32>
    %2 = vector.shape_cast %1 : vector<128xf32> to vector<128x1xf32>
    %cst_1 = arith.constant 3.200000e+01 : f32
    %3 = vector.broadcast %cst_1 : f32 to vector<128x1xf32>
    %4 = arith.divf %2, %3 : vector<128x1xf32>
    %5 = vector.broadcast %4 : vector<128x1xf32> to vector<128x32xf32>
    %6 = arith.subf %0, %5 : vector<128x32xf32>
    %7 = arith.mulf %6, %6 : vector<128x32xf32>
    %cst_2 = arith.constant dense<0.000000e+00> : vector<128xf32>
    %8 = vector.multi_reduction <add>, %7, %cst_2 [1] : vector<128x32xf32> to vector<128xf32>
    %9 = vector.shape_cast %8 : vector<128xf32> to vector<128x1xf32>
    %cst_3 = arith.constant 3.200000e+01 : f32
    %10 = vector.broadcast %cst_3 : f32 to vector<128x1xf32>
    %11 = arith.divf %9, %10 : vector<128x1xf32>
    %cst_4 = arith.constant 9.99999974E-6 : f32
    %12 = vector.broadcast %cst_4 : f32 to vector<128x1xf32>
    %13 = arith.addf %11, %12 : vector<128x1xf32>
    %14 = math.rsqrt %13 : vector<128x1xf32>
    %15 = vector.broadcast %14 : vector<128x1xf32> to vector<128x32xf32>
    %16 = arith.mulf %6, %15 : vector<128x32xf32>
    %c0_5 = arith.constant 0 : index
    %c0_6 = arith.constant 0 : index
    %17 = vector.load %arg3[%c0_5, %c0_6] : memref<1x32xf32, #tpu.memory_space<vmem>>, vector<1x32xf32>
    %18 = vector.broadcast %17 : vector<1x32xf32> to vector<128x32xf32>
    %19 = arith.mulf %16, %18 : vector<128x32xf32>
    %c0_7 = arith.constant 0 : index
    %c0_8 = arith.constant 0 : index
    %20 = vector.load %arg4[%c0_7, %c0_8] : memref<1x32xf32, #tpu.memory_space<vmem>>, vector<1x32xf32>
    %21 = vector.broadcast %20 : vector<1x32xf32> to vector<128x32xf32>
    %22 = arith.addf %19, %21 : vector<128x32xf32>
    %c0_9 = arith.constant 0 : index
    %c0_10 = arith.constant 0 : index
    %23 = vector.load %arg2[%c0_9, %c0_10] : memref<128x32xf32, #tpu.memory_space<vmem>>, vector<128x32xf32>
    %24 = arith.negf %23 : vector<128x32xf32>
    %25 = math.exp %24 : vector<128x32xf32>
    %cst_11 = arith.constant 1.000000e+00 : f32
    %26 = vector.broadcast %cst_11 : f32 to vector<128x32xf32>
    %27 = arith.addf %26, %25 : vector<128x32xf32>
    %28 = arith.divf %26, %27 : vector<128x32xf32>
    %29 = arith.mulf %23, %28 : vector<128x32xf32>
    %30 = arith.mulf %22, %29 : vector<128x32xf32>
    %c0_12 = arith.constant 0 : index
    %c0_13 = arith.constant 0 : index
    %31 = vector.load %arg6[%c0_12, %c0_13] : memref<128x16xf32, #tpu.memory_space<vmem>>, vector<128x16xf32>
    %32 = arith.truncf %30 : vector<128x32xf32> to vector<128x32xbf16>
    %c0_14 = arith.constant 0 : index
    %c0_15 = arith.constant 0 : index
    %33 = vector.load %arg5[%c0_14, %c0_15] : memref<32x16xbf16, #tpu.memory_space<vmem>>, vector<32x16xbf16>
    %cst_16 = arith.constant dense<0.000000e+00> : vector<128x16xf32>
    %34 = tpu.matmul %32, %33, %cst_16 {dimension_numbers = #tpu.dot_dimension_numbers<[1], [0], [0], [1], [0, 0, 1, 1], [], []>} : vector<128x32xbf16>, vector<32x16xbf16>, vector<128x16xf32> -> vector<128x16xf32>
    %35 = arith.addf %31, %34 : vector<128x16xf32>
    %c0_17 = arith.constant 0 : index
    %c0_18 = arith.constant 0 : index
    %36 = vector.load %arg7[%c0_17, %c0_18] : memref<128x16xf32, #tpu.memory_space<vmem>>, vector<128x16xf32>
    tpu.vector_store %arg7[%c0_17, %c0_18], %35 {strides = array<i32>} : memref<128x16xf32, #tpu.memory_space<vmem>>, vector<128x16xf32>,
    return
  }
  func.func @transform_0(%arg0: i32) -> (i32, i32) {
    %c0_i32 = arith.constant 0 : i32
    %c0_i32_0 = arith.constant 0 : i32
    return %arg0, %c0_i32 : i32, i32
  }
  func.func @transform_1(%arg0: i32) -> (i32, i32) {
    %c0_i32 = arith.constant 0 : i32
    %c0_i32_0 = arith.constant 0 : i32
    return %arg0, %c0_i32 : i32, i32
  }
  func.func @transform_2(%arg0: i32) -> (i32, i32) {
    %c0_i32 = arith.constant 0 : i32
    %c0_i32_0 = arith.constant 0 : i32
    %c0_i32_1 = arith.constant 0 : i32
    return %c0_i32, %c0_i32_0 : i32, i32
  }
  func.func @transform_3(%arg0: i32) -> (i32, i32) {
    %c0_i32 = arith.constant 0 : i32
    %c0_i32_0 = arith.constant 0 : i32
    %c0_i32_1 = arith.constant 0 : i32
    return %c0_i32, %c0_i32_0 : i32, i32
  }
  func.func @transform_4(%arg0: i32) -> (i32, i32) {
    %c0_i32 = arith.constant 0 : i32
    %c0_i32_0 = arith.constant 0 : i32
    %c0_i32_1 = arith.constant 0 : i32
    return %c0_i32, %c0_i32_0 : i32, i32
  }
  func.func @transform_5(%arg0: i32) -> (i32, i32) {
    %c0_i32 = arith.constant 0 : i32
    %c0_i32_0 = arith.constant 0 : i32
    return %arg0, %c0_i32 : i32, i32
  }
  func.func @transform_6(%arg0: i32) -> (i32, i32) {
    %c0_i32 = arith.constant 0 : i32
    %c0_i32_0 = arith.constant 0 : i32
    return %arg0, %c0_i32 : i32, i32
  }
}

</mosaic_0001>

<llo_original>
// kernel: vss_block_forward.4
$region0: #{vss_block_forward.4}
  #allocation0 [shape = 'u32[]', space=smem, size = 0x4, offset = 0x4, fixed_abs, tag = 'smem constant byte address 0x4 - core index']
  #allocation1 [shape = 'u32[144,128]{1,0:T(1,128)}', space=vmem, size = 0x12000, scoped, tag = 'internal scratch']
  %s0 = inlined_call_operand.hbm [shape: f32[128,16], index: 0, kind: input, shape index: {}]
  %s1 = inlined_call_operand.vmem [shape: f32[1,16], index: 1, kind: input, shape index: {}]
  %s2 = inlined_call_operand.vmem [shape: f32[1,16], index: 2, kind: input, shape index: {}]
  %s3 = inlined_call_operand.vmem [shape: bf16[16,64], index: 3, kind: input, shape index: {}]
  %s4 = inlined_call_operand.vmem [shape: f32[128,64], index: 4, kind: output, shape index: {}]
  %s5 = sld [smem:[#allocation0]]
  $region30: #{vss_block_forward.4} parent=0
    _
  %s7 = ssub.s32 1, %s5
  %s8 = scalar_select 0, %s7, %s5
  $region1: #{vss_block_forward.4} parent=0
    #allocation2 [shape = 'u8[65536]{0}', space=vmem, size = 0x10000, scoped, tag = 'input window, operand 0, single buffered']
    #allocation3 [shape = 's32[1]{0}', space=sflag, size = 0x4, scoped, tag = 'scoped memory for vss_block_forward.4']
    %9 = vsyncpa [#allocation3], 0
    // Predicated region
    $region2: #{vss_block_forward.4} parent=1 // pred_check
      _
    $region3: #{vss_block_forward.4} parent=1 // pred_check_branch
      %11 = sbr.rel (0) target = $region5
    $region4: #{vss_block_forward.4} parent=1 // pred_region
      %s13 = ssub.s32 2048, 2048
      %14 = vsyncadd [#allocation3], %s13
      %s15 = sshll.u32 [#allocation2], 4
      %s16 = int_to_ptr.vmem [resolvable:$true] %s15
      %21 = dma.hbm_to_vmem [thread:$0]  %s0, 2048, %s16, [#allocation3], 128, 128, 8
    $region5: #{vss_block_forward.4} parent=1 // pred_fallthru
      _
    // Predicated region
    $region6: #{vss_block_forward.4} parent=1 // pred_check
      _
    $region7: #{vss_block_forward.4} parent=1 // pred_check_branch
      %23 = sbr.rel (0) target = $region9
    $region8: #{vss_block_forward.4} parent=1 // pred_region
      _
    $region9: #{vss_block_forward.4} parent=1 // pred_fallthru
      _
    // Predicated region
    $region10: #{vss_block_forward.4} parent=1 // pred_check
      _
    $region11: #{vss_block_forward.4} parent=1 // pred_check_branch
      %25 = sbr.rel (0) target = $region13
    $region12: #{vss_block_forward.4} parent=1 // pred_region
      _
    $region13: #{vss_block_forward.4} parent=1 // pred_fallthru
      _
    // Predicated region
    $region14: #{vss_block_forward.4} parent=1 // pred_check
      _
    $region15: #{vss_block_forward.4} parent=1 // pred_check_branch
      %27 = sbr.rel (0) target = $region17
    $region16: #{vss_block_forward.4} parent=1 // pred_region
      _
    $region17: #{vss_block_forward.4} parent=1 // pred_fallthru
      _
    // Predicated region
    $region18: #{vss_block_forward.4} parent=1 // pred_check
      _
    $region19: #{vss_block_forward.4} parent=1 // pred_check_branch
      %29 = sbr.rel (0) target = $region21
    $region20: #{vss_block_forward.4} parent=1 // pred_region
      %30 = dma.done [#allocation3], 2048
    $region21: #{vss_block_forward.4} parent=1 // pred_fallthru
      _
    %v32 = vld [vmem:[#allocation2] sm:$0xff]
    %v33 = vld [vmem:[#allocation2 + $0x8] sm:$0xff]
    %v34 = vld [vmem:[#allocation2 + $0x10] sm:$0xff]
    %v35 = vld [vmem:[#allocation2 + $0x18] sm:$0xff]
    %v36 = vld [vmem:[#allocation2 + $0x20] sm:$0xff]
    %v37 = vld [vmem:[#allocation2 + $0x28] sm:$0xff]
    %v38 = vld [vmem:[#allocation2 + $0x30] sm:$0xff]
    %v39 = vld [vmem:[#allocation2 + $0x38] sm:$0xff]
    %v40 = vld [vmem:[#allocation2 + $0x40] sm:$0xff]
    %v41 = vld [vmem:[#allocation2 + $0x48] sm:$0xff]
    %v42 = vld [vmem:[#allocation2 + $0x50] sm:$0xff]
    %v43 = vld [vmem:[#allocation2 + $0x58] sm:$0xff]
    %v44 = vld [vmem:[#allocation2 + $0x60] sm:$0xff]
    %v45 = vld [vmem:[#allocation2 + $0x68] sm:$0xff]
    %v46 = vld [vmem:[#allocation2 + $0x70] sm:$0xff]
    %v47 = vld [vmem:[#allocation2 + $0x78] sm:$0xff]
    %vm48 = vcmask 130048
    %v49 = vsel %vm48, %v32, 0.0
    %50 = vadd.xlane.f32.xlu0 %v49
    %v51 = vpop.xlane.xlu0 %50
    %v52 = vsel %vm48, %v33, 0.0
    %53 = vadd.xlane.f32.xlu0 %v52
    %v54 = vpop.xlane.xlu0 %53
    %v55 = vsel %vm48, %v34, 0.0
    %56 = vadd.xlane.f32.xlu0 %v55
    %v57 = vpop.xlane.xlu0 %56
    %v58 = vsel %vm48, %v35, 0.0
    %59 = vadd.xlane.f32.xlu0 %v58
    %v60 = vpop.xlane.xlu0 %59
    %v61 = vsel %vm48, %v36, 0.0
    %62 = vadd.xlane.f32.xlu0 %v61
    %v63 = vpop.xlane.xlu0 %62
    %v64 = vsel %vm48, %v37, 0.0
    %65 = vadd.xlane.f32.xlu0 %v64
    %v66 = vpop.xlane.xlu0 %65
    %v67 = vsel %vm48, %v38, 0.0
    %68 = vadd.xlane.f32.xlu0 %v67
    %v69 = vpop.xlane.xlu0 %68
    %v70 = vsel %vm48, %v39, 0.0
    %71 = vadd.xlane.f32.xlu0 %v70
    %v72 = vpop.xlane.xlu0 %71
    %v73 = vsel %vm48, %v40, 0.0
    %74 = vadd.xlane.f32.xlu0 %v73
    %v75 = vpop.xlane.xlu0 %74
    %v76 = vsel %vm48, %v41, 0.0
    %77 = vadd.xlane.f32.xlu0 %v76
    %v78 = vpop.xlane.xlu0 %77
    %v79 = vsel %vm48, %v42, 0.0
    %80 = vadd.xlane.f32.xlu0 %v79
    %v81 = vpop.xlane.xlu0 %80
    %v82 = vsel %vm48, %v43, 0.0
    %83 = vadd.xlane.f32.xlu0 %v82
    %v84 = vpop.xlane.xlu0 %83
    %v85 = vsel %vm48, %v44, 0.0
    %86 = vadd.xlane.f32.xlu0 %v85
    %v87 = vpop.xlane.xlu0 %86
    %v88 = vsel %vm48, %v45, 0.0
    %89 = vadd.xlane.f32.xlu0 %v88
    %v90 = vpop.xlane.xlu0 %89
    %v91 = vsel %vm48, %v46, 0.0
    %92 = vadd.xlane.f32.xlu0 %v91
    %v93 = vpop.xlane.xlu0 %92
    %v94 = vsel %vm48, %v47, 0.0
    %95 = vadd.xlane.f32.xlu0 %v94
    %v96 = vpop.xlane.xlu0 %95
    %v97 = vrcp.pop 16.0
    %v98 = vmul.f32 %v51, %v97
    %v99 = vmul.f32 %v54, %v97
    %v100 = vmul.f32 %v57, %v97
    %v101 = vmul.f32 %v60, %v97
    %v102 = vmul.f32 %v63, %v97
    %v103 = vmul.f32 %v66, %v97
    %v104 = vmul.f32 %v69, %v97
    %v105 = vmul.f32 %v72, %v97
    %v106 = vmul.f32 %v75, %v97
    %v107 = vmul.f32 %v78, %v97
    %v108 = vmul.f32 %v81, %v97
    %v109 = vmul.f32 %v84, %v97
    %v110 = vmul.f32 %v87, %v97
    %v111 = vmul.f32 %v90, %v97
    %v112 = vmul.f32 %v93, %v97
    %v113 = vmul.f32 %v96, %v97
    %v114 = vsub.f32 %v32, %v98
    %v115 = vsub.f32 %v33, %v99
    %v116 = vsub.f32 %v34, %v100
    %v117 = vsub.f32 %v35, %v101
    %v118 = vsub.f32 %v36, %v102
    %v119 = vsub.f32 %v37, %v103
    %v120 = vsub.f32 %v38, %v104
    %v121 = vsub.f32 %v39, %v105
    %v122 = vsub.f32 %v40, %v106
    %v123 = vsub.f32 %v41, %v107
    %v124 = vsub.f32 %v42, %v108
    %v125 = vsub.f32 %v43, %v109
    %v126 = vsub.f32 %v44, %v110
    %v127 = vsub.f32 %v45, %v111
    %v128 = vsub.f32 %v46, %v112
    %v129 = vsub.f32 %v47, %v113
    %v130 = vmul.f32 %v114, %v114
    %v131 = vmul.f32 %v115, %v115
    %v132 = vmul.f32 %v116, %v116
    %v133 = vmul.f32 %v117, %v117
    %v134 = vmul.f32 %v118, %v118
    %v135 = vmul.f32 %v119, %v119
    %v136 = vmul.f32 %v120, %v120
    %v137 = vmul.f32 %v121, %v121
    %v138 = vmul.f32 %v122, %v122
    %v139 = vmul.f32 %v123, %v123
    %v140 = vmul.f32 %v124, %v124
    %v141 = vmul.f32 %v125, %v125
    %v142 = vmul.f32 %v126, %v126
    %v143 = vmul.f32 %v127, %v127
    %v144 = vmul.f32 %v128, %v128
    %v145 = vmul.f32 %v129, %v129
    %v146 = vsel %vm48, %v130, 0.0
    %147 = vadd.xlane.f32.xlu0 %v146
    %v148 = vpop.xlane.xlu0 %147
    %v149 = vsel %vm48, %v131, 0.0
    %150 = vadd.xlane.f32.xlu0 %v149
    %v151 = vpop.xlane.xlu0 %150
    %v152 = vsel %vm48, %v132, 0.0
    %153 = vadd.xlane.f32.xlu0 %v152
    %v154 = vpop.xlane.xlu0 %153
    %v155 = vsel %vm48, %v133, 0.0
    %156 = vadd.xlane.f32.xlu0 %v155
    %v157 = vpop.xlane.xlu0 %156
    %v158 = vsel %vm48, %v134, 0.0
    %159 = vadd.xlane.f32.xlu0 %v158
    %v160 = vpop.xlane.xlu0 %159
    %v161 = vsel %vm48, %v135, 0.0
    %162 = vadd.xlane.f32.xlu0 %v161
    %v163 = vpop.xlane.xlu0 %162
    %v164 = vsel %vm48, %v136, 0.0
    %165 = vadd.xlane.f32.xlu0 %v164
    %v166 = vpop.xlane.xlu0 %165
    %v167 = vsel %vm48, %v137, 0.0
    %168 = vadd.xlane.f32.xlu0 %v167
    %v169 = vpop.xlane.xlu0 %168
    %v170 = vsel %vm48, %v138, 0.0
    %171 = vadd.xlane.f32.xlu0 %v170
    %v172 = vpop.xlane.xlu0 %171
    %v173 = vsel %vm48, %v139, 0.0
    %174 = vadd.xlane.f32.xlu0 %v173
    %v175 = vpop.xlane.xlu0 %174
    %v176 = vsel %vm48, %v140, 0.0
    %177 = vadd.xlane.f32.xlu0 %v176
    %v178 = vpop.xlane.xlu0 %177
    %v179 = vsel %vm48, %v141, 0.0
    %180 = vadd.xlane.f32.xlu0 %v179
    %v181 = vpop.xlane.xlu0 %180
    %v182 = vsel %vm48, %v142, 0.0
    %183 = vadd.xlane.f32.xlu0 %v182
    %v184 = vpop.xlane.xlu0 %183
    %v185 = vsel %vm48, %v143, 0.0
    %186 = vadd.xlane.f32.xlu0 %v185
    %v187 = vpop.xlane.xlu0 %186
    %v188 = vsel %vm48, %v144, 0.0
    %189 = vadd.xlane.f32.xlu0 %v188
    %v190 = vpop.xlane.xlu0 %189
    %v191 = vsel %vm48, %v145, 0.0
    %192 = vadd.xlane.f32.xlu0 %v191
    %v193 = vpop.xlane.xlu0 %192
    %v194 = vmul.f32 %v148, %v97
    %v195 = vmul.f32 %v151, %v97
    %v196 = vmul.f32 %v154, %v97
    %v197 = vmul.f32 %v157, %v97
    %v198 = vmul.f32 %v160, %v97
    %v199 = vmul.f32 %v163, %v97
    %v200 = vmul.f32 %v166, %v97
    %v201 = vmul.f32 %v169, %v97
    %v202 = vmul.f32 %v172, %v97
    %v203 = vmul.f32 %v175, %v97
    %v204 = vmul.f32 %v178, %v97
    %v205 = vmul.f32 %v181, %v97
    %v206 = vmul.f32 %v184, %v97
    %v207 = vmul.f32 %v187, %v97
    %v208 = vmul.f32 %v190, %v97
    %v209 = vmul.f32 %v193, %v97
    %v210 = vadd.f32 %v194, 1e-05
    %v211 = vadd.f32 %v195, 1e-05
    %v212 = vadd.f32 %v196, 1e-05
    %v213 = vadd.f32 %v197, 1e-05
    %v214 = vadd.f32 %v198, 1e-05
    %v215 = vadd.f32 %v199, 1e-05
    %v216 = vadd.f32 %v200, 1e-05
    %v217 = vadd.f32 %v201, 1e-05
    %v218 = vadd.f32 %v202, 1e-05
    %v219 = vadd.f32 %v203, 1e-05
    %v220 = vadd.f32 %v204, 1e-05
    %v221 = vadd.f32 %v205, 1e-05
    %v222 = vadd.f32 %v206, 1e-05
    %v223 = vadd.f32 %v207, 1e-05
    %v224 = vadd.f32 %v208, 1e-05
    %v225 = vadd.f32 %v209, 1e-05
    %v226 = vrsqrt.pop %v210
    %v227 = vrsqrt.pop %v211
    %v228 = vrsqrt.pop %v212
    %v229 = vrsqrt.pop %v213
    %v230 = vrsqrt.pop %v214
    %v231 = vrsqrt.pop %v215
    %v232 = vrsqrt.pop %v216
    %v233 = vrsqrt.pop %v217
    %v234 = vrsqrt.pop %v218
    %v235 = vrsqrt.pop %v219
    %v236 = vrsqrt.pop %v220
    %v237 = vrsqrt.pop %v221
    %v238 = vrsqrt.pop %v222
    %v239 = vrsqrt.pop %v223
    %v240 = vrsqrt.pop %v224
    %v241 = vrsqrt.pop %v225
    %v242 = vmul.f32 %v114, %v226
    %v243 = vmul.f32 %v115, %v227
    %v244 = vmul.f32 %v116, %v228
    %v245 = vmul.f32 %v117, %v229
    %v246 = vmul.f32 %v118, %v230
    %v247 = vmul.f32 %v119, %v231
    %v248 = vmul.f32 %v120, %v232
    %v249 = vmul.f32 %v121, %v233
    %v250 = vmul.f32 %v122, %v234
    %v251 = vmul.f32 %v123, %v235
    %v252 = vmul.f32 %v124, %v236
    %v253 = vmul.f32 %v125, %v237
    %v254 = vmul.f32 %v126, %v238
    %v255 = vmul.f32 %v127, %v239
    %v256 = vmul.f32 %v128, %v240
    %v257 = vmul.f32 %v129, %v241
    %v258 = vld [vmem:[%s1] sm:$0x1]
    %v260 = vlaneseq
    %v261 = vshrl.u32 %v260, 7
    %v262 = vsub.s32 0, %v261
    %v263 = vrot.slane %v258, %v262
    %v265 = vmul.f32 %v242, %v263
    %v266 = vmul.f32 %v243, %v263
    %v267 = vmul.f32 %v244, %v263
    %v268 = vmul.f32 %v245, %v263
    %v269 = vmul.f32 %v246, %v263
    %v270 = vmul.f32 %v247, %v263
    %v271 = vmul.f32 %v248, %v263
    %v272 = vmul.f32 %v249, %v263
    %v273 = vmul.f32 %v250, %v263
    %v274 = vmul.f32 %v251, %v263
    %v275 = vmul.f32 %v252, %v263
    %v276 = vmul.f32 %v253, %v263
    %v277 = vmul.f32 %v254, %v263
    %v278 = vmul.f32 %v255, %v263
    %v279 = vmul.f32 %v256, %v263
    %v280 = vmul.f32 %v257, %v263
    %v281 = vld [vmem:[%s2] sm:$0x1]
    %v283 = vlaneseq
    %v284 = vshrl.u32 %v283, 7
    %v285 = vsub.s32 0, %v284
    %v286 = vrot.slane %v281, %v285
    %v288 = vadd.f32 %v265, %v286
    %v289 = vadd.f32 %v266, %v286
    %v290 = vadd.f32 %v267, %v286
    %v291 = vadd.f32 %v268, %v286
    %v292 = vadd.f32 %v269, %v286
    %v293 = vadd.f32 %v270, %v286
    %v294 = vadd.f32 %v271, %v286
    %v295 = vadd.f32 %v272, %v286
    %v296 = vadd.f32 %v273, %v286
    %v297 = vadd.f32 %v274, %v286
    %v298 = vadd.f32 %v275, %v286
    %v299 = vadd.f32 %v276, %v286
    %v300 = vadd.f32 %v277, %v286
    %v301 = vadd.f32 %v278, %v286
    %v302 = vadd.f32 %v279, %v286
    %v303 = vadd.f32 %v280, %v286
    %v304 = vpack.c.bf16 %v289, %v288
    %v305 = vpack.c.bf16 %v291, %v290
    %v306 = vpack.c.bf16 %v293, %v292
    %v307 = vpack.c.bf16 %v295, %v294
    %v308 = vpack.c.bf16 %v297, %v296
    %v309 = vpack.c.bf16 %v299, %v298
    %v310 = vpack.c.bf16 %v301, %v300
    %v311 = vpack.c.bf16 %v303, %v302
    %v312 = vld [vmem:[%s3] sm:$0xf]
    %v313 = vld [vmem:[%s3 + $0x4] sm:$0xf]
    %v316 = vunpack.c.l.b16 %v312
    %v317 = vunpack.c.l.b16 %v313
    %v318 = vpack.c.b16 %v317, %v316
    %v321 = vsel %vm48, %v304, 0
    %v324 = vsel %vm48, %v305, 0
    %v327 = vsel %vm48, %v306, 0
    %v330 = vsel %vm48, %v307, 0
    %v333 = vsel %vm48, %v308, 0
    %v336 = vsel %vm48, %v309, 0
    %v339 = vsel %vm48, %v310, 0
    %v342 = vsel %vm48, %v311, 0
    %344 = vmatprep.subr.bf16.mxu0 0
    %345 = vmatpush1.bf16.msra.mxu0 %v318
    %346 = vmatprep.subr.bf16.mxu0 0
    %347 = vmatpush1.bf16.msra.mxu0 0
    %348 = vmatprep.subr.bf16.mxu0 0
    %349 = vmatpush1.bf16.msra.mxu0 0
    %350 = vmatprep.subr.bf16.mxu0 0
    %351 = vmatpush1.bf16.msra.mxu0 0
    %352 = vmatprep.subr.bf16.mxu0 0
    %353 = vmatpush1.bf16.msra.mxu0 0
    %354 = vmatprep.subr.bf16.mxu0 0
    %355 = vmatpush1.bf16.msra.mxu0 0
    %356 = vmatprep.subr.bf16.mxu0 0
    %357 = vmatpush1.bf16.msra.mxu0 0
    %358 = vmatprep.subr.bf16.mxu0 0
    %359 = vmatpush1.bf16.msra.mxu0 0
    %360 = vmatprep.subr.bf16.mxu0 0
    %361 = vmatpush1.bf16.msra.mxu0 0
    %362 = vmatprep.subr.bf16.mxu0 0
    %363 = vmatpush1.bf16.msra.mxu0 0
    %364 = vmatprep.subr.bf16.mxu0 0
    %365 = vmatpush1.bf16.msra.mxu0 0
    %366 = vmatprep.subr.bf16.mxu0 0
    %367 = vmatpush1.bf16.msra.mxu0 0
    %368 = vmatprep.subr.bf16.mxu0 0
    %369 = vmatpush1.bf16.msra.mxu0 0
    %370 = vmatprep.subr.bf16.mxu0 0
    %371 = vmatpush1.bf16.msra.mxu0 0
    %372 = vmatprep.subr.bf16.mxu0 0
    %373 = vmatpush1.bf16.msra.mxu0 0
    %374 = vmatprep.subr.bf16.mxu0 0
    %375 = vmatpush1.bf16.msra.mxu0 0
    %376 = vmatprep.mubr.bf16.mxu0 0
    %377 = vmatmul.mubr.bf16.gmra.mrb[0].mxu0 %v321
    %v378 = vpop.f32.mrb[0].mxu0
    %v379 = vadd.f32 0.0, %v378
    %v380 = vpop.f32.mrb[0].mxu0
    %v381 = vpop.f32.mrb[0].mxu0
    %v382 = vadd.f32 0.0, %v381
    %v383 = vpop.f32.mrb[0].mxu0
    %384 = vmatprep.mubr.bf16.mxu0 0
    %385 = vmatmul.mubr.bf16.gmra.mrb[0].mxu0 %v324
    %v386 = vpop.f32.mrb[0].mxu0
    %v387 = vadd.f32 0.0, %v386
    %v388 = vpop.f32.mrb[0].mxu0
    %v389 = vpop.f32.mrb[0].mxu0
    %v390 = vadd.f32 0.0, %v389
    %v391 = vpop.f32.mrb[0].mxu0
    %392 = vmatprep.mubr.bf16.mxu0 0
    %393 = vmatmul.mubr.bf16.gmra.mrb[0].mxu0 %v327
    %v394 = vpop.f32.mrb[0].mxu0
    %v395 = vadd.f32 0.0, %v394
    %v396 = vpop.f32.mrb[0].mxu0
    %v397 = vpop.f32.mrb[0].mxu0
    %v398 = vadd.f32 0.0, %v397
    %v399 = vpop.f32.mrb[0].mxu0
    %400 = vmatprep.mubr.bf16.mxu0 0
    %401 = vmatmul.mubr.bf16.gmra.mrb[0].mxu0 %v330
    %v402 = vpop.f32.mrb[0].mxu0
    %v403 = vadd.f32 0.0, %v402
    %v404 = vpop.f32.mrb[0].mxu0
    %v405 = vpop.f32.mrb[0].mxu0
    %v406 = vadd.f32 0.0, %v405
    %v407 = vpop.f32.mrb[0].mxu0
    %408 = vmatprep.mubr.bf16.mxu0 0
    %409 = vmatmul.mubr.bf16.gmra.mrb[0].mxu0 %v333
    %v410 = vpop.f32.mrb[0].mxu0
    %v411 = vadd.f32 0.0, %v410
    %v412 = vpop.f32.mrb[0].mxu0
    %v413 = vpop.f32.mrb[0].mxu0
    %v414 = vadd.f32 0.0, %v413
    %v415 = vpop.f32.mrb[0].mxu0
    %416 = vmatprep.mubr.bf16.mxu0 0
    %417 = vmatmul.mubr.bf16.gmra.mrb[0].mxu0 %v336
    %v418 = vpop.f32.mrb[0].mxu0
    %v419 = vadd.f32 0.0, %v418
    %v420 = vpop.f32.mrb[0].mxu0
    %v421 = vpop.f32.mrb[0].mxu0
    %v422 = vadd.f32 0.0, %v421
    %v423 = vpop.f32.mrb[0].mxu0
    %424 = vmatprep.mubr.bf16.mxu0 0
    %425 = vmatmul.mubr.bf16.gmra.mrb[0].mxu0 %v339
    %v426 = vpop.f32.mrb[0].mxu0
    %v427 = vadd.f32 0.0, %v426
    %v428 = vpop.f32.mrb[0].mxu0
    %v429 = vpop.f32.mrb[0].mxu0
    %v430 = vadd.f32 0.0, %v429
    %v431 = vpop.f32.mrb[0].mxu0
    %432 = vmatprep.mubr.bf16.mxu0 0
    %433 = vmatmul.mubr.bf16.gmra.mrb[0].mxu0 %v342
    %v434 = vpop.f32.mrb[0].mxu0
    %v435 = vadd.f32 0.0, %v434
    %v436 = vpop.f32.mrb[0].mxu0
    %v437 = vpop.f32.mrb[0].mxu0
    %v438 = vadd.f32 0.0, %v437
    %v439 = vpop.f32.mrb[0].mxu0
    %440 = vdwg.mxu0
    %vm441 = vcmask 523264
    %442 = vst.msk [vmem:[%s4] sm:$0xff] %vm441, %v379
    %443 = vst.msk [vmem:[%s4 + $0x8] sm:$0xff] %vm441, %v382
    %444 = vst.msk [vmem:[%s4 + $0x10] sm:$0xff] %vm441, %v387
    %445 = vst.msk [vmem:[%s4 + $0x18] sm:$0xff] %vm441, %v390
    %446 = vst.msk [vmem:[%s4 + $0x20] sm:$0xff] %vm441, %v395
    %447 = vst.msk [vmem:[%s4 + $0x28] sm:$0xff] %vm441, %v398
    %448 = vst.msk [vmem:[%s4 + $0x30] sm:$0xff] %vm441, %v403
    %449 = vst.msk [vmem:[%s4 + $0x38] sm:$0xff] %vm441, %v406
    %450 = vst.msk [vmem:[%s4 + $0x40] sm:$0xff] %vm441, %v411
    %451 = vst.msk [vmem:[%s4 + $0x48] sm:$0xff] %vm441, %v414
    %452 = vst.msk [vmem:[%s4 + $0x50] sm:$0xff] %vm441, %v419
    %453 = vst.msk [vmem:[%s4 + $0x58] sm:$0xff] %vm441, %v422
    %454 = vst.msk [vmem:[%s4 + $0x60] sm:$0xff] %vm441, %v427
    %455 = vst.msk [vmem:[%s4 + $0x68] sm:$0xff] %vm441, %v430
    %456 = vst.msk [vmem:[%s4 + $0x70] sm:$0xff] %vm441, %v435
    %457 = vst.msk [vmem:[%s4 + $0x78] sm:$0xff] %vm441, %v438
    // Predicated region
    $region22: #{vss_block_forward.4} parent=1 // pred_check
      _
    $region23: #{vss_block_forward.4} parent=1 // pred_check_branch
      %459 = sbr.rel (0) target = $region25
    $region24: #{vss_block_forward.4} parent=1 // pred_region
      _
    $region25: #{vss_block_forward.4} parent=1 // pred_fallthru
      _
    // Predicated region
    $region26: #{vss_block_forward.4} parent=1 // pred_check
      _
    $region27: #{vss_block_forward.4} parent=1 // pred_check_branch
      %461 = sbr.rel (0) target = $region29
    $region28: #{vss_block_forward.4} parent=1 // pred_region
      _
    $region29: #{vss_block_forward.4} parent=1 // pred_fallthru
      _
    %462 = vsyncpa [#allocation3], 1

// kernel: vss_block_forward.5
$region0: #{vss_block_forward.5}
  #allocation0 [shape = 'u32[]', space=smem, size = 0x4, offset = 0x4, fixed_abs, tag = 'smem constant byte address 0x4 - core index']
  #allocation1 [shape = 'u32[144,128]{1,0:T(1,128)}', space=vmem, size = 0x12000, scoped, tag = 'internal scratch']
  %s0 = inlined_call_operand.vmem [shape: f32[2,10,10,32], index: 0, kind: input, shape index: {}]
  %s1 = inlined_call_operand.vmem [shape: f32[3,3,32], index: 1, kind: input, shape index: {}]
  %s2 = inlined_call_operand.vmem [shape: f32[1,32], index: 2, kind: input, shape index: {}]
  %s3 = inlined_call_operand.vmem [shape: f32[2,8,8,32], index: 3, kind: output, shape index: {}]
  %s4 = sld [smem:[#allocation0]]
  $region45: #{vss_block_forward.5} parent=0
    _
  %s6 = ssub.s32 1, %s4
  %s7 = scalar_select 0, %s6, %s4
  loop: start=0, step=1, limit=4
  $region2: #{vss_block_forward.5} parent=0 // loop_pre_header
    _
  $region3: #{vss_block_forward.5} parent=0 // loop_header
    %s9 = sphi 0, %s13
    %p10 = scmp.ge.s32.totalorder %s9, 4
    %s19 = sphi 0, %s21
    %s22 = sphi 0, %s19
    %s23 = sphi 0, %s22
    %s39 = sphi 0, %s23
    %s43 = sphi 0, %s43
    %s45 = sphi 0, %s43
    %s46 = sphi 0, %s45
    %s60 = sphi 0, %s46
    %s64 = sphi 0, %s64
    %s66 = sphi 0, %s64
    %s67 = sphi 0, %s66
    %s81 = sphi 0, %s67
    %s87 = sphi 0, %s89
    %s90 = sphi 0, %s87
    %s91 = sphi 0, %s90
    %s107 = sphi 0, %s91
  $region4: #{vss_block_forward.5} parent=0 // loop_header_branch
    %12 = sbr.rel (%p10) target = $region8
  $region5: #{vss_block_forward.5} parent=0 // loop_body
    %s14 = ssub.s32 %s9, 1
    %s15 = ssub.s32 %s9, 2
    %s16 = sadd.s32 %s9, 1
    %s17 = ssub.s32 %s9, %s16
    %p18 = scmp.eq.s32.totalorder %s17, 0
    %s20 = sadd.s32 %s19, 1
    %s21 = scalar_select %p18, %s19, %s20
    %p24 = pneg %p18
    %p25 = scmp.eq.s32.totalorder %s9, 1
    %p26 = por %p24, %p25
    %p27 = scmp.ne.s32.totalorder %s19, %s22
    %p28 = scmp.eq.s32.totalorder %s9, 0
    %p29 = por %p27, %p28
    %p30 = scmp.ne.s32.totalorder %s19, %s22
    %p31 = scmp.eq.s32.totalorder %s14, 1
    %p32 = por %p30, %p31
    %p33 = scmp.ne.s32.totalorder %s22, %s23
    %p34 = scmp.eq.s32.totalorder %s14, 0
    %p35 = por %p33, %p34
    %p36 = scmp.ne.s32.totalorder %s22, %s23
    %p37 = scmp.eq.s32.totalorder %s15, 1
    %p38 = por %p36, %p37
    %p40 = scmp.ne.s32.totalorder %s23, %s39
    %p41 = scmp.eq.s32.totalorder %s15, 0
    %p42 = por %p40, %p41
    %s44 = sadd.s32 %s43, 1
    %p47 = scmp.eq.s32.totalorder %s9, 1
    %p48 = scmp.ne.s32.totalorder %s43, %s45
    %p49 = scmp.eq.s32.totalorder %s9, 0
    %p50 = por %p48, %p49
    %p51 = scmp.ne.s32.totalorder %s43, %s45
    %p52 = scmp.eq.s32.totalorder %s14, 1
    %p53 = por %p51, %p52
    %p54 = scmp.ne.s32.totalorder %s45, %s46
    %p55 = scmp.eq.s32.totalorder %s14, 0
    %p56 = por %p54, %p55
    %p57 = scmp.ne.s32.totalorder %s45, %s46
    %p58 = scmp.eq.s32.totalorder %s15, 1
    %p59 = por %p57, %p58
    %p61 = scmp.ne.s32.totalorder %s46, %s60
    %p62 = scmp.eq.s32.totalorder %s15, 0
    %p63 = por %p61, %p62
    %s65 = sadd.s32 %s64, 1
    %p68 = scmp.eq.s32.totalorder %s9, 1
    %p69 = scmp.ne.s32.totalorder %s64, %s66
    %p70 = scmp.eq.s32.totalorder %s9, 0
    %p71 = por %p69, %p70
    %p72 = scmp.ne.s32.totalorder %s64, %s66
    %p73 = scmp.eq.s32.totalorder %s14, 1
    %p74 = por %p72, %p73
    %p75 = scmp.ne.s32.totalorder %s66, %s67
    %p76 = scmp.eq.s32.totalorder %s14, 0
    %p77 = por %p75, %p76
    %p78 = scmp.ne.s32.totalorder %s66, %s67
    %p79 = scmp.eq.s32.totalorder %s15, 1
    %p80 = por %p78, %p79
    %p82 = scmp.ne.s32.totalorder %s67, %s81
    %p83 = scmp.eq.s32.totalorder %s15, 0
    %p84 = por %p82, %p83
    %s85 = ssub.s32 %s9, %s16
    %p86 = scmp.eq.s32.totalorder %s85, 0
    %s88 = sadd.s32 %s87, 1
    %s89 = scalar_select %p86, %s87, %s88
    %p92 = pneg %p86
    %p93 = scmp.eq.s32.totalorder %s9, 1
    %p94 = por %p92, %p93
    %p95 = scmp.ne.s32.totalorder %s87, %s90
    %p96 = scmp.eq.s32.totalorder %s9, 0
    %p97 = por %p95, %p96
    %p98 = scmp.ne.s32.totalorder %s87, %s90
    %p99 = scmp.eq.s32.totalorder %s14, 1
    %p100 = por %p98, %p99
    %p101 = scmp.ne.s32.totalorder %s90, %s91
    %p102 = scmp.eq.s32.totalorder %s14, 0
    %p103 = por %p101, %p102
    %p104 = scmp.ne.s32.totalorder %s90, %s91
    %p105 = scmp.eq.s32.totalorder %s15, 1
    %p106 = por %p104, %p105
    %p108 = scmp.ne.s32.totalorder %s91, %s107
    %p109 = scmp.eq.s32.totalorder %s15, 0
    %p110 = por %p108, %p109
    %p111 = scmp.le.s32.totalorder 1, %s9
    %p112 = scmp.lt.s32.totalorder %s9, 3
    %p113 = pnand %p111, %p112
    %p114 = pneg %p113
    // Predicated region
    $region9: #{vss_block_forward.5} parent=5 // pred_check
      _
    $region10: #{vss_block_forward.5} parent=5 // pred_check_branch
      %116 = sbr.rel (%p113) target = $region12
    $region11: #{vss_block_forward.5} parent=5 // pred_region
      %s117 = ssub.s32 %s9, 1
      // Predicated region
      $region13: #{vss_block_forward.5} parent=11 // pred_check
        %p118 = pneg %p56
      $region14: #{vss_block_forward.5} parent=11 // pred_check_branch
        %120 = sbr.rel (%p118) target = $region16
      $region15: #{vss_block_forward.5} parent=11 // pred_region
        _
      $region16: #{vss_block_forward.5} parent=11 // pred_fallthru
        _
      // Predicated region
      $region17: #{vss_block_forward.5} parent=11 // pred_check
        %p121 = pneg %p77
      $region18: #{vss_block_forward.5} parent=11 // pred_check_branch
        %123 = sbr.rel (%p121) target = $region20
      $region19: #{vss_block_forward.5} parent=11 // pred_region
        _
      $region20: #{vss_block_forward.5} parent=11 // pred_fallthru
        _
    $region12: #{vss_block_forward.5} parent=5 // pred_fallthru
      _
    %p124 = scmp.lt.s32.totalorder %s9, 2
    // Predicated region
    $region21: #{vss_block_forward.5} parent=5 // pred_check
      %p125 = pneg %p124
    $region22: #{vss_block_forward.5} parent=5 // pred_check_branch
      %127 = sbr.rel (%p125) target = $region24
    $region23: #{vss_block_forward.5} parent=5 // pred_region
      // Predicated region
      $region25: #{vss_block_forward.5} parent=23 // pred_check
        %p128 = pneg %p29
      $region26: #{vss_block_forward.5} parent=23 // pred_check_branch
        %130 = sbr.rel (%p128) target = $region28
      $region27: #{vss_block_forward.5} parent=23 // pred_region
        %p131 = scmp.lt.s32.totalorder %s9, 1
        %s132 = scalar_select %p131, %s9, 1
        %s133 = smul.addr %s132, 20
        %s134 = smul.addr %s133, 8
        %s135 = scalar_lea.vmem %s0, %s134
      $region28: #{vss_block_forward.5} parent=23 // pred_fallthru
        _
    $region24: #{vss_block_forward.5} parent=5 // pred_fallthru
      _
    %p136 = scmp.le.s32.totalorder 1, %s9
    %p137 = scmp.lt.s32.totalorder %s9, 3
    %p138 = pnand %p136, %p137
    %p139 = pneg %p138
    // Predicated region
    $region29: #{vss_block_forward.5} parent=5 // pred_check
      _
    $region30: #{vss_block_forward.5} parent=5 // pred_check_branch
      %141 = sbr.rel (%p138) target = $region32
    $region31: #{vss_block_forward.5} parent=5 // pred_region
      %s142 = ssub.s32 %s9, 1
      %p143 = scmp.lt.s32.totalorder %s14, 1
      %s144 = scalar_select %p143, %s14, 1
      %s145 = smul.addr %s144, 20
      %s146 = smul.addr %s145, 8
      %s147 = scalar_lea.vmem %s0, %s146
      %p148 = pneg %p35
      %p149 = pneg %p32
      %p150 = pneg %p56
      %p151 = pneg %p53
      %p152 = pneg %p77
      %p153 = pneg %p74
      %p154 = pneg %p103
      %p155 = pneg %p100
      %p156 = scmp.lt.s32.totalorder %s14, 1
      %s157 = scalar_select %p156, %s14, 1
      %s158 = smul.addr %s157, 8
      %s159 = smul.addr %s158, 8
      %s160 = scalar_lea.vmem %s3, %s159
      %p161 = scmp.lt.s32.totalorder %s14, 1
      %s162 = scalar_select %p161, %s14, 1
      %s163 = smul.addr %s162, 20
      %s164 = smul.addr %s163, 8
      %s165 = scalar_lea.vmem %s0, %s164
      %p166 = scmp.lt.s32.totalorder %s14, 1
      %s167 = scalar_select %p166, %s14, 1
      %s168 = smul.addr %s167, 8
      %s169 = smul.addr %s168, 8
      %s170 = scalar_lea.vmem %s3, %s169
      %v171 = vld [vmem:[%s2] sm:$0x1]
      %v173 = vlaneseq
      %v174 = vshrl.u32 %v173, 7
      %v175 = vsub.s32 0, %v174
      %v176 = vrot.slane %v171, %v175
      %v178 = vadd.f32 %v176, 0.0
      %v179 = vld [vmem:[%s165] sm:$0xff]
      %v180 = vld [vmem:[%s165 + $0x10] sm:$0xff]
      %v181 = vld [vmem:[%s165 + $0x20] sm:$0xff]
      %v182 = vld [vmem:[%s165 + $0x30] sm:$0xff]
      %v183 = vld [vmem:[%s165 + $0x40] sm:$0xff]
      %v184 = vld [vmem:[%s165 + $0x50] sm:$0xff]
      %v185 = vld [vmem:[%s165 + $0x60] sm:$0xff]
      %v186 = vld [vmem:[%s165 + $0x70] sm:$0xff]
      %v187 = vld [vmem:[%s1] sm:$0x1]
      %v188 = vlaneseq
      %v189 = vshrl.u32 %v188, 7
      %v190 = vsub.s32 0, %v189
      %v191 = vrot.slane %v187, %v190
      %v192 = vmul.f32 %v179, %v191
      %v193 = vmul.f32 %v180, %v191
      %v194 = vmul.f32 %v181, %v191
      %v195 = vmul.f32 %v182, %v191
      %v196 = vmul.f32 %v183, %v191
      %v197 = vmul.f32 %v184, %v191
      %v198 = vmul.f32 %v185, %v191
      %v199 = vmul.f32 %v186, %v191
      %v200 = vadd.f32 %v178, %v192
      %v201 = vadd.f32 %v178, %v193
      %v202 = vadd.f32 %v178, %v194
      %v203 = vadd.f32 %v178, %v195
      %v204 = vadd.f32 %v178, %v196
      %v205 = vadd.f32 %v178, %v197
      %v206 = vadd.f32 %v178, %v198
      %v207 = vadd.f32 %v178, %v199
      %v208 = vld [vmem:[%s165 + $0x1] sm:$0xff]
      %v209 = vld [vmem:[%s165 + $0x11] sm:$0xff]
      %v210 = vld [vmem:[%s165 + $0x21] sm:$0xff]
      %v211 = vld [vmem:[%s165 + $0x31] sm:$0xff]
      %v212 = vld [vmem:[%s165 + $0x41] sm:$0xff]
      %v213 = vld [vmem:[%s165 + $0x51] sm:$0xff]
      %v214 = vld [vmem:[%s165 + $0x61] sm:$0xff]
      %v215 = vld [vmem:[%s165 + $0x71] sm:$0xff]
      %v216 = vld [vmem:[%s1 + $0x1] sm:$0x1]
      %v217 = vlaneseq
      %v218 = vshrl.u32 %v217, 7
      %v219 = vsub.s32 0, %v218
      %v220 = vrot.slane %v216, %v219
      %v221 = vmul.f32 %v208, %v220
      %v222 = vmul.f32 %v209, %v220
      %v223 = vmul.f32 %v210, %v220
      %v224 = vmul.f32 %v211, %v220
      %v225 = vmul.f32 %v212, %v220
      %v226 = vmul.f32 %v213, %v220
      %v227 = vmul.f32 %v214, %v220
      %v228 = vmul.f32 %v215, %v220
      %v229 = vadd.f32 %v200, %v221
      %v230 = vadd.f32 %v201, %v222
      %v231 = vadd.f32 %v202, %v223
      %v232 = vadd.f32 %v203, %v224
      %v233 = vadd.f32 %v204, %v225
      %v234 = vadd.f32 %v205, %v226
      %v235 = vadd.f32 %v206, %v227
      %v236 = vadd.f32 %v207, %v228
      %v237 = vld [vmem:[%s165 + $0x2] sm:$0xff]
      %v238 = vld [vmem:[%s165 + $0x12] sm:$0xff]
      %v239 = vld [vmem:[%s165 + $0x22] sm:$0xff]
      %v240 = vld [vmem:[%s165 + $0x32] sm:$0xff]
      %v241 = vld [vmem:[%s165 + $0x42] sm:$0xff]
      %v242 = vld [vmem:[%s165 + $0x52] sm:$0xff]
      %v243 = vld [vmem:[%s165 + $0x62] sm:$0xff]
      %v244 = vld [vmem:[%s165 + $0x72] sm:$0xff]
      %v245 = vld [vmem:[%s1 + $0x2] sm:$0x1]
      %v246 = vlaneseq
      %v247 = vshrl.u32 %v246, 7
      %v248 = vsub.s32 0, %v247
      %v249 = vrot.slane %v245, %v248
      %v250 = vmul.f32 %v237, %v249
      %v251 = vmul.f32 %v238, %v249
      %v252 = vmul.f32 %v239, %v249
      %v253 = vmul.f32 %v240, %v249
      %v254 = vmul.f32 %v241, %v249
      %v255 = vmul.f32 %v242, %v249
      %v256 = vmul.f32 %v243, %v249
      %v257 = vmul.f32 %v244, %v249
      %v258 = vadd.f32 %v229, %v250
      %v259 = vadd.f32 %v230, %v251
      %v260 = vadd.f32 %v231, %v252
      %v261 = vadd.f32 %v232, %v253
      %v262 = vadd.f32 %v233, %v254
      %v263 = vadd.f32 %v234, %v255
      %v264 = vadd.f32 %v235, %v256
      %v265 = vadd.f32 %v236, %v257
      %s266 = scalar_lea.vmem %s165, 16
      %v267 = vld [vmem:[%s266] sm:$0xff]
      %v268 = vld [vmem:[%s266 + $0x10] sm:$0xff]
      %v269 = vld [vmem:[%s266 + $0x20] sm:$0xff]
      %v270 = vld [vmem:[%s266 + $0x30] sm:$0xff]
      %v271 = vld [vmem:[%s266 + $0x40] sm:$0xff]
      %v272 = vld [vmem:[%s266 + $0x50] sm:$0xff]
      %v273 = vld [vmem:[%s266 + $0x60] sm:$0xff]
      %v274 = vld [vmem:[%s266 + $0x70] sm:$0xff]
      %s275 = scalar_lea.vmem %s1, 4
      %v276 = vld [vmem:[%s275] sm:$0x1]
      %v277 = vlaneseq
      %v278 = vshrl.u32 %v277, 7
      %v279 = vsub.s32 0, %v278
      %v280 = vrot.slane %v276, %v279
      %v281 = vmul.f32 %v267, %v280
      %v282 = vmul.f32 %v268, %v280
      %v283 = vmul.f32 %v269, %v280
      %v284 = vmul.f32 %v270, %v280
      %v285 = vmul.f32 %v271, %v280
      %v286 = vmul.f32 %v272, %v280
      %v287 = vmul.f32 %v273, %v280
      %v288 = vmul.f32 %v274, %v280
      %v289 = vadd.f32 %v258, %v281
      %v290 = vadd.f32 %v259, %v282
      %v291 = vadd.f32 %v260, %v283
      %v292 = vadd.f32 %v261, %v284
      %v293 = vadd.f32 %v262, %v285
      %v294 = vadd.f32 %v263, %v286
      %v295 = vadd.f32 %v264, %v287
      %v296 = vadd.f32 %v265, %v288
      %v297 = vld [vmem:[%s266 + $0x1] sm:$0xff]
      %v298 = vld [vmem:[%s266 + $0x11] sm:$0xff]
      %v299 = vld [vmem:[%s266 + $0x21] sm:$0xff]
      %v300 = vld [vmem:[%s266 + $0x31] sm:$0xff]
      %v301 = vld [vmem:[%s266 + $0x41] sm:$0xff]
      %v302 = vld [vmem:[%s266 + $0x51] sm:$0xff]
      %v303 = vld [vmem:[%s266 + $0x61] sm:$0xff]
      %v304 = vld [vmem:[%s266 + $0x71] sm:$0xff]
      %v305 = vld [vmem:[%s275 + $0x1] sm:$0x1]
      %v306 = vlaneseq
      %v307 = vshrl.u32 %v306, 7
      %v308 = vsub.s32 0, %v307
      %v309 = vrot.slane %v305, %v308
      %v310 = vmul.f32 %v297, %v309
      %v311 = vmul.f32 %v298, %v309
      %v312 = vmul.f32 %v299, %v309
      %v313 = vmul.f32 %v300, %v309
      %v314 = vmul.f32 %v301, %v309
      %v315 = vmul.f32 %v302, %v309
      %v316 = vmul.f32 %v303, %v309
      %v317 = vmul.f32 %v304, %v309
      %v318 = vadd.f32 %v289, %v310
      %v319 = vadd.f32 %v290, %v311
      %v320 = vadd.f32 %v291, %v312
      %v321 = vadd.f32 %v292, %v313
      %v322 = vadd.f32 %v293, %v314
      %v323 = vadd.f32 %v294, %v315
      %v324 = vadd.f32 %v295, %v316
      %v325 = vadd.f32 %v296, %v317
      %v326 = vld [vmem:[%s266 + $0x2] sm:$0xff]
      %v327 = vld [vmem:[%s266 + $0x12] sm:$0xff]
      %v328 = vld [vmem:[%s266 + $0x22] sm:$0xff]
      %v329 = vld [vmem:[%s266 + $0x32] sm:$0xff]
      %v330 = vld [vmem:[%s266 + $0x42] sm:$0xff]
      %v331 = vld [vmem:[%s266 + $0x52] sm:$0xff]
      %v332 = vld [vmem:[%s266 + $0x62] sm:$0xff]
      %v333 = vld [vmem:[%s266 + $0x72] sm:$0xff]
      %v334 = vld [vmem:[%s275 + $0x2] sm:$0x1]
      %v335 = vlaneseq
      %v336 = vshrl.u32 %v335, 7
      %v337 = vsub.s32 0, %v336
      %v338 = vrot.slane %v334, %v337
      %v339 = vmul.f32 %v326, %v338
      %v340 = vmul.f32 %v327, %v338
      %v341 = vmul.f32 %v328, %v338
      %v342 = vmul.f32 %v329, %v338
      %v343 = vmul.f32 %v330, %v338
      %v344 = vmul.f32 %v331, %v338
      %v345 = vmul.f32 %v332, %v338
      %v346 = vmul.f32 %v333, %v338
      %v347 = vadd.f32 %v318, %v339
      %v348 = vadd.f32 %v319, %v340
      %v349 = vadd.f32 %v320, %v341
      %v350 = vadd.f32 %v321, %v342
      %v351 = vadd.f32 %v322, %v343
      %v352 = vadd.f32 %v323, %v344
      %v353 = vadd.f32 %v324, %v345
      %v354 = vadd.f32 %v325, %v346
      %s355 = scalar_lea.vmem %s165, 32
      %v356 = vld [vmem:[%s355] sm:$0xff]
      %v357 = vld [vmem:[%s355 + $0x10] sm:$0xff]
      %v358 = vld [vmem:[%s355 + $0x20] sm:$0xff]
      %v359 = vld [vmem:[%s355 + $0x30] sm:$0xff]
      %v360 = vld [vmem:[%s355 + $0x40] sm:$0xff]
      %v361 = vld [vmem:[%s355 + $0x50] sm:$0xff]
      %v362 = vld [vmem:[%s355 + $0x60] sm:$0xff]
      %v363 = vld [vmem:[%s355 + $0x70] sm:$0xff]
      %s364 = scalar_lea.vmem %s1, 8
      %v365 = vld [vmem:[%s364] sm:$0x1]
      %v366 = vlaneseq
      %v367 = vshrl.u32 %v366, 7
      %v368 = vsub.s32 0, %v367
      %v369 = vrot.slane %v365, %v368
      %v370 = vmul.f32 %v356, %v369
      %v371 = vmul.f32 %v357, %v369
      %v372 = vmul.f32 %v358, %v369
      %v373 = vmul.f32 %v359, %v369
      %v374 = vmul.f32 %v360, %v369
      %v375 = vmul.f32 %v361, %v369
      %v376 = vmul.f32 %v362, %v369
      %v377 = vmul.f32 %v363, %v369
      %v378 = vadd.f32 %v347, %v370
      %v379 = vadd.f32 %v348, %v371
      %v380 = vadd.f32 %v349, %v372
      %v381 = vadd.f32 %v350, %v373
      %v382 = vadd.f32 %v351, %v374
      %v383 = vadd.f32 %v352, %v375
      %v384 = vadd.f32 %v353, %v376
      %v385 = vadd.f32 %v354, %v377
      %v386 = vld [vmem:[%s355 + $0x1] sm:$0xff]
      %v387 = vld [vmem:[%s355 + $0x11] sm:$0xff]
      %v388 = vld [vmem:[%s355 + $0x21] sm:$0xff]
      %v389 = vld [vmem:[%s355 + $0x31] sm:$0xff]
      %v390 = vld [vmem:[%s355 + $0x41] sm:$0xff]
      %v391 = vld [vmem:[%s355 + $0x51] sm:$0xff]
      %v392 = vld [vmem:[%s355 + $0x61] sm:$0xff]
      %v393 = vld [vmem:[%s355 + $0x71] sm:$0xff]
      %v394 = vld [vmem:[%s364 + $0x1] sm:$0x1]
      %v395 = vlaneseq
      %v396 = vshrl.u32 %v395, 7
      %v397 = vsub.s32 0, %v396
      %v398 = vrot.slane %v394, %v397
      %v399 = vmul.f32 %v386, %v398
      %v400 = vmul.f32 %v387, %v398
      %v401 = vmul.f32 %v388, %v398
      %v402 = vmul.f32 %v389, %v398
      %v403 = vmul.f32 %v390, %v398
      %v404 = vmul.f32 %v391, %v398
      %v405 = vmul.f32 %v392, %v398
      %v406 = vmul.f32 %v393, %v398
      %v407 = vadd.f32 %v378, %v399
      %v408 = vadd.f32 %v379, %v400
      %v409 = vadd.f32 %v380, %v401
      %v410 = vadd.f32 %v381, %v402
      %v411 = vadd.f32 %v382, %v403
      %v412 = vadd.f32 %v383, %v404
      %v413 = vadd.f32 %v384, %v405
      %v414 = vadd.f32 %v385, %v406
      %v415 = vld [vmem:[%s355 + $0x2] sm:$0xff]
      %v416 = vld [vmem:[%s355 + $0x12] sm:$0xff]
      %v417 = vld [vmem:[%s355 + $0x22] sm:$0xff]
      %v418 = vld [vmem:[%s355 + $0x32] sm:$0xff]
      %v419 = vld [vmem:[%s355 + $0x42] sm:$0xff]
      %v420 = vld [vmem:[%s355 + $0x52] sm:$0xff]
      %v421 = vld [vmem:[%s355 + $0x62] sm:$0xff]
      %v422 = vld [vmem:[%s355 + $0x72] sm:$0xff]
      %v423 = vld [vmem:[%s364 + $0x2] sm:$0x1]
      %v424 = vlaneseq
      %v425 = vshrl.u32 %v424, 7
      %v426 = vsub.s32 0, %v425
      %v427 = vrot.slane %v423, %v426
      %v428 = vmul.f32 %v415, %v427
      %v429 = vmul.f32 %v416, %v427
      %v430 = vmul.f32 %v417, %v427
      %v431 = vmul.f32 %v418, %v427
      %v432 = vmul.f32 %v419, %v427
      %v433 = vmul.f32 %v420, %v427
      %v434 = vmul.f32 %v421, %v427
      %v435 = vmul.f32 %v422, %v427
      %v436 = vadd.f32 %v407, %v428
      %v437 = vadd.f32 %v408, %v429
      %v438 = vadd.f32 %v409, %v430
      %v439 = vadd.f32 %v410, %v431
      %v440 = vadd.f32 %v411, %v432
      %v441 = vadd.f32 %v412, %v433
      %v442 = vadd.f32 %v413, %v434
      %v443 = vadd.f32 %v414, %v435
      %v444 = vxor.u32 %v436, 2147483648
      %v445 = vxor.u32 %v437, 2147483648
      %v446 = vxor.u32 %v438, 2147483648
      %v447 = vxor.u32 %v439, 2147483648
      %v448 = vxor.u32 %v440, 2147483648
      %v449 = vxor.u32 %v441, 2147483648
      %v450 = vxor.u32 %v442, 2147483648
      %v451 = vxor.u32 %v443, 2147483648
      %v452 = vmul.f32 %v444, 1.442695
      %v453 = vpow.pop %v452
      %v454 = vmul.f32 %v445, 1.442695
      %v455 = vpow.pop %v454
      %v456 = vmul.f32 %v446, 1.442695
      %v457 = vpow.pop %v456
      %v458 = vmul.f32 %v447, 1.442695
      %v459 = vpow.pop %v458
      %v460 = vmul.f32 %v448, 1.442695
      %v461 = vpow.pop %v460
      %v462 = vmul.f32 %v449, 1.442695
      %v463 = vpow.pop %v462
      %v464 = vmul.f32 %v450, 1.442695
      %v465 = vpow.pop %v464
      %v466 = vmul.f32 %v451, 1.442695
      %v467 = vpow.pop %v466
      %v468 = vadd.f32 %v453, 1.0
      %v469 = vadd.f32 %v455, 1.0
      %v470 = vadd.f32 %v457, 1.0
      %v471 = vadd.f32 %v459, 1.0
      %v472 = vadd.f32 %v461, 1.0
      %v473 = vadd.f32 %v463, 1.0
      %v474 = vadd.f32 %v465, 1.0
      %v475 = vadd.f32 %v467, 1.0
      %v476 = vrcp.pop %v468
      %v477 = vmul.f32 1.0, %v476
      %v478 = vrcp.pop %v469
      %v479 = vmul.f32 1.0, %v478
      %v480 = vrcp.pop %v470
      %v481 = vmul.f32 1.0, %v480
      %v482 = vrcp.pop %v471
      %v483 = vmul.f32 1.0, %v482
      %v484 = vrcp.pop %v472
      %v485 = vmul.f32 1.0, %v484
      %v486 = vrcp.pop %v473
      %v487 = vmul.f32 1.0, %v486
      %v488 = vrcp.pop %v474
      %v489 = vmul.f32 1.0, %v488
      %v490 = vrcp.pop %v475
      %v491 = vmul.f32 1.0, %v490
      %v492 = vmul.f32 %v436, %v477
      %v493 = vmul.f32 %v437, %v479
      %v494 = vmul.f32 %v438, %v481
      %v495 = vmul.f32 %v439, %v483
      %v496 = vmul.f32 %v440, %v485
      %v497 = vmul.f32 %v441, %v487
      %v498 = vmul.f32 %v442, %v489
      %v499 = vmul.f32 %v443, %v491
      %vm500 = vcmask 261120
      %501 = vst.msk [vmem:[%s170] sm:$0xff] %vm500, %v492
      %502 = vst.msk [vmem:[%s170 + $0x8] sm:$0xff] %vm500, %v493
      %503 = vst.msk [vmem:[%s170 + $0x10] sm:$0xff] %vm500, %v494
      %504 = vst.msk [vmem:[%s170 + $0x18] sm:$0xff] %vm500, %v495
      %505 = vst.msk [vmem:[%s170 + $0x20] sm:$0xff] %vm500, %v496
      %506 = vst.msk [vmem:[%s170 + $0x28] sm:$0xff] %vm500, %v497
      %507 = vst.msk [vmem:[%s170 + $0x30] sm:$0xff] %vm500, %v498
      %508 = vst.msk [vmem:[%s170 + $0x38] sm:$0xff] %vm500, %v499
      %p509 = scmp.lt.s32.totalorder %s14, 1
      %s510 = scalar_select %p509, %s14, 1
      %s511 = smul.addr %s510, 8
      %s512 = smul.addr %s511, 8
      %s513 = scalar_lea.vmem %s3, %s512
      // Predicated region
      $region33: #{vss_block_forward.5} parent=31 // pred_check
        %p514 = pneg %p100
      $region34: #{vss_block_forward.5} parent=31 // pred_check_branch
        %516 = sbr.rel (%p514) target = $region36
      $region35: #{vss_block_forward.5} parent=31 // pred_region
        _
      $region36: #{vss_block_forward.5} parent=31 // pred_fallthru
        _
    $region32: #{vss_block_forward.5} parent=5 // pred_fallthru
      _
    %p517 = scmp.le.s32.totalorder 2, %s9
    // Predicated region
    $region37: #{vss_block_forward.5} parent=5 // pred_check
      %p518 = pneg %p517
    $region38: #{vss_block_forward.5} parent=5 // pred_check_branch
      %520 = sbr.rel (%p518) target = $region40
    $region39: #{vss_block_forward.5} parent=5 // pred_region
      %s521 = ssub.s32 %s9, 2
      // Predicated region
      $region41: #{vss_block_forward.5} parent=39 // pred_check
        %p522 = pneg %p106
      $region42: #{vss_block_forward.5} parent=39 // pred_check_branch
        %524 = sbr.rel (%p522) target = $region44
      $region43: #{vss_block_forward.5} parent=39 // pred_region
        %p525 = scmp.lt.s32.totalorder %s15, 1
        %s526 = scalar_select %p525, %s15, 1
        %s527 = smul.addr %s526, 8
        %s528 = smul.addr %s527, 8
        %s529 = scalar_lea.vmem %s3, %s528
      $region44: #{vss_block_forward.5} parent=39 // pred_fallthru
        _
    $region40: #{vss_block_forward.5} parent=5 // pred_fallthru
      _
  $region6: #{vss_block_forward.5} parent=0 // loop_footer
    %s13 = sadd.s32 1, %s9
  $region7: #{vss_block_forward.5} parent=0 // loop_footer_branch
    %8 = sbr.rel target = $region3
  $region8: #{vss_block_forward.5} parent=0 // loop_exit
    _

// kernel: vss_block_forward.7
$region0: #{vss_block_forward.7}
  #allocation0 [shape = 'u32[]', space=smem, size = 0x4, offset = 0x4, fixed_abs, tag = 'smem constant byte address 0x4 - core index']
  #allocation1 [shape = 'u32[144,128]{1,0:T(1,128)}', space=vmem, size = 0x12000, scoped, tag = 'internal scratch']
  %s0 = inlined_call_operand.vmem [shape: f32[128,32], index: 0, kind: input, shape index: {}]
  %s1 = inlined_call_operand.vmem [shape: f32[128,32], index: 1, kind: input, shape index: {}]
  %s2 = inlined_call_operand.vmem [shape: f32[1,32], index: 2, kind: input, shape index: {}]
  %s3 = inlined_call_operand.vmem [shape: f32[1,32], index: 3, kind: input, shape index: {}]
  %s4 = inlined_call_operand.vmem [shape: bf16[32,16], index: 4, kind: input, shape index: {}]
  %s5 = inlined_call_operand.vmem [shape: f32[128,16], index: 5, kind: input, shape index: {}]
  %s6 = inlined_call_operand.hbm [shape: f32[128,16], index: 6, kind: output, shape index: {}]
  %s7 = sld [smem:[#allocation0]]
  $region34: #{vss_block_forward.7} parent=0
    _
  %s9 = ssub.s32 1, %s7
  %s10 = scalar_select 0, %s9, %s7
  $region1: #{vss_block_forward.7} parent=0
    #allocation2 [shape = 'u8[65536]{0}', space=vmem, size = 0x10000, scoped, tag = 'output window, operand 0, single buffered']
    #allocation3 [shape = 's32[1]{0}', space=sflag, size = 0x4, scoped, tag = 'scoped memory for vss_block_forward.7']
    %11 = vsyncpa [#allocation3], 0
    // Predicated region
    $region2: #{vss_block_forward.7} parent=1 // pred_check
      _
    $region3: #{vss_block_forward.7} parent=1 // pred_check_branch
      %13 = sbr.rel (0) target = $region5
    $region4: #{vss_block_forward.7} parent=1 // pred_region
      _
    $region5: #{vss_block_forward.7} parent=1 // pred_fallthru
      _
    // Predicated region
    $region6: #{vss_block_forward.7} parent=1 // pred_check
      _
    $region7: #{vss_block_forward.7} parent=1 // pred_check_branch
      %15 = sbr.rel (0) target = $region9
    $region8: #{vss_block_forward.7} parent=1 // pred_region
      _
    $region9: #{vss_block_forward.7} parent=1 // pred_fallthru
      _
    // Predicated region
    $region10: #{vss_block_forward.7} parent=1 // pred_check
      _
    $region11: #{vss_block_forward.7} parent=1 // pred_check_branch
      %17 = sbr.rel (0) target = $region13
    $region12: #{vss_block_forward.7} parent=1 // pred_region
      _
    $region13: #{vss_block_forward.7} parent=1 // pred_fallthru
      _
    // Predicated region
    $region14: #{vss_block_forward.7} parent=1 // pred_check
      _
    $region15: #{vss_block_forward.7} parent=1 // pred_check_branch
      %19 = sbr.rel (0) target = $region17
    $region16: #{vss_block_forward.7} parent=1 // pred_region
      _
    $region17: #{vss_block_forward.7} parent=1 // pred_fallthru
      _
    // Predicated region
    $region18: #{vss_block_forward.7} parent=1 // pred_check
      _
    $region19: #{vss_block_forward.7} parent=1 // pred_check_branch
      %21 = sbr.rel (0) target = $region21
    $region20: #{vss_block_forward.7} parent=1 // pred_region
      _
    $region21: #{vss_block_forward.7} parent=1 // pred_fallthru
      _
    // Predicated region
    $region22: #{vss_block_forward.7} parent=1 // pred_check
      _
    $region23: #{vss_block_forward.7} parent=1 // pred_check_branch
      %23 = sbr.rel (0) target = $region25
    $region24: #{vss_block_forward.7} parent=1 // pred_region
      _
    $region25: #{vss_block_forward.7} parent=1 // pred_fallthru
      _
    %v25 = vld [vmem:[%s0] sm:$0xff]
    %v26 = vld [vmem:[%s0 + $0x8] sm:$0xff]
    %v27 = vld [vmem:[%s0 + $0x10] sm:$0xff]
    %v28 = vld [vmem:[%s0 + $0x18] sm:$0xff]
    %v29 = vld [vmem:[%s0 + $0x20] sm:$0xff]
    %v30 = vld [vmem:[%s0 + $0x28] sm:$0xff]
    %v31 = vld [vmem:[%s0 + $0x30] sm:$0xff]
    %v32 = vld [vmem:[%s0 + $0x38] sm:$0xff]
    %v33 = vld [vmem:[%s0 + $0x40] sm:$0xff]
    %v34 = vld [vmem:[%s0 + $0x48] sm:$0xff]
    %v35 = vld [vmem:[%s0 + $0x50] sm:$0xff]
    %v36 = vld [vmem:[%s0 + $0x58] sm:$0xff]
    %v37 = vld [vmem:[%s0 + $0x60] sm:$0xff]
    %v38 = vld [vmem:[%s0 + $0x68] sm:$0xff]
    %v39 = vld [vmem:[%s0 + $0x70] sm:$0xff]
    %v40 = vld [vmem:[%s0 + $0x78] sm:$0xff]
    %vm41 = vcmask 261120
    %v42 = vsel %vm41, %v25, 0.0
    %43 = vadd.xlane.f32.xlu0 %v42
    %v44 = vpop.xlane.xlu0 %43
    %v45 = vsel %vm41, %v26, 0.0
    %46 = vadd.xlane.f32.xlu0 %v45
    %v47 = vpop.xlane.xlu0 %46
    %v48 = vsel %vm41, %v27, 0.0
    %49 = vadd.xlane.f32.xlu0 %v48
    %v50 = vpop.xlane.xlu0 %49
    %v51 = vsel %vm41, %v28, 0.0
    %52 = vadd.xlane.f32.xlu0 %v51
    %v53 = vpop.xlane.xlu0 %52
    %v54 = vsel %vm41, %v29, 0.0
    %55 = vadd.xlane.f32.xlu0 %v54
    %v56 = vpop.xlane.xlu0 %55
    %v57 = vsel %vm41, %v30, 0.0
    %58 = vadd.xlane.f32.xlu0 %v57
    %v59 = vpop.xlane.xlu0 %58
    %v60 = vsel %vm41, %v31, 0.0
    %61 = vadd.xlane.f32.xlu0 %v60
    %v62 = vpop.xlane.xlu0 %61
    %v63 = vsel %vm41, %v32, 0.0
    %64 = vadd.xlane.f32.xlu0 %v63
    %v65 = vpop.xlane.xlu0 %64
    %v66 = vsel %vm41, %v33, 0.0
    %67 = vadd.xlane.f32.xlu0 %v66
    %v68 = vpop.xlane.xlu0 %67
    %v69 = vsel %vm41, %v34, 0.0
    %70 = vadd.xlane.f32.xlu0 %v69
    %v71 = vpop.xlane.xlu0 %70
    %v72 = vsel %vm41, %v35, 0.0
    %73 = vadd.xlane.f32.xlu0 %v72
    %v74 = vpop.xlane.xlu0 %73
    %v75 = vsel %vm41, %v36, 0.0
    %76 = vadd.xlane.f32.xlu0 %v75
    %v77 = vpop.xlane.xlu0 %76
    %v78 = vsel %vm41, %v37, 0.0
    %79 = vadd.xlane.f32.xlu0 %v78
    %v80 = vpop.xlane.xlu0 %79
    %v81 = vsel %vm41, %v38, 0.0
    %82 = vadd.xlane.f32.xlu0 %v81
    %v83 = vpop.xlane.xlu0 %82
    %v84 = vsel %vm41, %v39, 0.0
    %85 = vadd.xlane.f32.xlu0 %v84
    %v86 = vpop.xlane.xlu0 %85
    %v87 = vsel %vm41, %v40, 0.0
    %88 = vadd.xlane.f32.xlu0 %v87
    %v89 = vpop.xlane.xlu0 %88
    %v90 = vrcp.pop 32.0
    %v91 = vmul.f32 %v44, %v90
    %v92 = vmul.f32 %v47, %v90
    %v93 = vmul.f32 %v50, %v90
    %v94 = vmul.f32 %v53, %v90
    %v95 = vmul.f32 %v56, %v90
    %v96 = vmul.f32 %v59, %v90
    %v97 = vmul.f32 %v62, %v90
    %v98 = vmul.f32 %v65, %v90
    %v99 = vmul.f32 %v68, %v90
    %v100 = vmul.f32 %v71, %v90
    %v101 = vmul.f32 %v74, %v90
    %v102 = vmul.f32 %v77, %v90
    %v103 = vmul.f32 %v80, %v90
    %v104 = vmul.f32 %v83, %v90
    %v105 = vmul.f32 %v86, %v90
    %v106 = vmul.f32 %v89, %v90
    %v107 = vsub.f32 %v25, %v91
    %v108 = vsub.f32 %v26, %v92
    %v109 = vsub.f32 %v27, %v93
    %v110 = vsub.f32 %v28, %v94
    %v111 = vsub.f32 %v29, %v95
    %v112 = vsub.f32 %v30, %v96
    %v113 = vsub.f32 %v31, %v97
    %v114 = vsub.f32 %v32, %v98
    %v115 = vsub.f32 %v33, %v99
    %v116 = vsub.f32 %v34, %v100
    %v117 = vsub.f32 %v35, %v101
    %v118 = vsub.f32 %v36, %v102
    %v119 = vsub.f32 %v37, %v103
    %v120 = vsub.f32 %v38, %v104
    %v121 = vsub.f32 %v39, %v105
    %v122 = vsub.f32 %v40, %v106
    %v123 = vmul.f32 %v107, %v107
    %v124 = vmul.f32 %v108, %v108
    %v125 = vmul.f32 %v109, %v109
    %v126 = vmul.f32 %v110, %v110
    %v127 = vmul.f32 %v111, %v111
    %v128 = vmul.f32 %v112, %v112
    %v129 = vmul.f32 %v113, %v113
    %v130 = vmul.f32 %v114, %v114
    %v131 = vmul.f32 %v115, %v115
    %v132 = vmul.f32 %v116, %v116
    %v133 = vmul.f32 %v117, %v117
    %v134 = vmul.f32 %v118, %v118
    %v135 = vmul.f32 %v119, %v119
    %v136 = vmul.f32 %v120, %v120
    %v137 = vmul.f32 %v121, %v121
    %v138 = vmul.f32 %v122, %v122
    %v139 = vsel %vm41, %v123, 0.0
    %140 = vadd.xlane.f32.xlu0 %v139
    %v141 = vpop.xlane.xlu0 %140
    %v142 = vsel %vm41, %v124, 0.0
    %143 = vadd.xlane.f32.xlu0 %v142
    %v144 = vpop.xlane.xlu0 %143
    %v145 = vsel %vm41, %v125, 0.0
    %146 = vadd.xlane.f32.xlu0 %v145
    %v147 = vpop.xlane.xlu0 %146
    %v148 = vsel %vm41, %v126, 0.0
    %149 = vadd.xlane.f32.xlu0 %v148
    %v150 = vpop.xlane.xlu0 %149
    %v151 = vsel %vm41, %v127, 0.0
    %152 = vadd.xlane.f32.xlu0 %v151
    %v153 = vpop.xlane.xlu0 %152
    %v154 = vsel %vm41, %v128, 0.0
    %155 = vadd.xlane.f32.xlu0 %v154
    %v156 = vpop.xlane.xlu0 %155
    %v157 = vsel %vm41, %v129, 0.0
    %158 = vadd.xlane.f32.xlu0 %v157
    %v159 = vpop.xlane.xlu0 %158
    %v160 = vsel %vm41, %v130, 0.0
    %161 = vadd.xlane.f32.xlu0 %v160
    %v162 = vpop.xlane.xlu0 %161
    %v163 = vsel %vm41, %v131, 0.0
    %164 = vadd.xlane.f32.xlu0 %v163
    %v165 = vpop.xlane.xlu0 %164
    %v166 = vsel %vm41, %v132, 0.0
    %167 = vadd.xlane.f32.xlu0 %v166
    %v168 = vpop.xlane.xlu0 %167
    %v169 = vsel %vm41, %v133, 0.0
    %170 = vadd.xlane.f32.xlu0 %v169
    %v171 = vpop.xlane.xlu0 %170
    %v172 = vsel %vm41, %v134, 0.0
    %173 = vadd.xlane.f32.xlu0 %v172
    %v174 = vpop.xlane.xlu0 %173
    %v175 = vsel %vm41, %v135, 0.0
    %176 = vadd.xlane.f32.xlu0 %v175
    %v177 = vpop.xlane.xlu0 %176
    %v178 = vsel %vm41, %v136, 0.0
    %179 = vadd.xlane.f32.xlu0 %v178
    %v180 = vpop.xlane.xlu0 %179
    %v181 = vsel %vm41, %v137, 0.0
    %182 = vadd.xlane.f32.xlu0 %v181
    %v183 = vpop.xlane.xlu0 %182
    %v184 = vsel %vm41, %v138, 0.0
    %185 = vadd.xlane.f32.xlu0 %v184
    %v186 = vpop.xlane.xlu0 %185
    %v187 = vmul.f32 %v141, %v90
    %v188 = vmul.f32 %v144, %v90
    %v189 = vmul.f32 %v147, %v90
    %v190 = vmul.f32 %v150, %v90
    %v191 = vmul.f32 %v153, %v90
    %v192 = vmul.f32 %v156, %v90
    %v193 = vmul.f32 %v159, %v90
    %v194 = vmul.f32 %v162, %v90
    %v195 = vmul.f32 %v165, %v90
    %v196 = vmul.f32 %v168, %v90
    %v197 = vmul.f32 %v171, %v90
    %v198 = vmul.f32 %v174, %v90
    %v199 = vmul.f32 %v177, %v90
    %v200 = vmul.f32 %v180, %v90
    %v201 = vmul.f32 %v183, %v90
    %v202 = vmul.f32 %v186, %v90
    %v203 = vadd.f32 %v187, 1e-05
    %v204 = vadd.f32 %v188, 1e-05
    %v205 = vadd.f32 %v189, 1e-05
    %v206 = vadd.f32 %v190, 1e-05
    %v207 = vadd.f32 %v191, 1e-05
    %v208 = vadd.f32 %v192, 1e-05
    %v209 = vadd.f32 %v193, 1e-05
    %v210 = vadd.f32 %v194, 1e-05
    %v211 = vadd.f32 %v195, 1e-05
    %v212 = vadd.f32 %v196, 1e-05
    %v213 = vadd.f32 %v197, 1e-05
    %v214 = vadd.f32 %v198, 1e-05
    %v215 = vadd.f32 %v199, 1e-05
    %v216 = vadd.f32 %v200, 1e-05
    %v217 = vadd.f32 %v201, 1e-05
    %v218 = vadd.f32 %v202, 1e-05
    %v219 = vrsqrt.pop %v203
    %v220 = vrsqrt.pop %v204
    %v221 = vrsqrt.pop %v205
    %v222 = vrsqrt.pop %v206
    %v223 = vrsqrt.pop %v207
    %v224 = vrsqrt.pop %v208
    %v225 = vrsqrt.pop %v209
    %v226 = vrsqrt.pop %v210
    %v227 = vrsqrt.pop %v211
    %v228 = vrsqrt.pop %v212
    %v229 = vrsqrt.pop %v213
    %v230 = vrsqrt.pop %v214
    %v231 = vrsqrt.pop %v215
    %v232 = vrsqrt.pop %v216
    %v233 = vrsqrt.pop %v217
    %v234 = vrsqrt.pop %v218
    %v235 = vmul.f32 %v107, %v219
    %v236 = vmul.f32 %v108, %v220
    %v237 = vmul.f32 %v109, %v221
    %v238 = vmul.f32 %v110, %v222
    %v239 = vmul.f32 %v111, %v223
    %v240 = vmul.f32 %v112, %v224
    %v241 = vmul.f32 %v113, %v225
    %v242 = vmul.f32 %v114, %v226
    %v243 = vmul.f32 %v115, %v227
    %v244 = vmul.f32 %v116, %v228
    %v245 = vmul.f32 %v117, %v229
    %v246 = vmul.f32 %v118, %v230
    %v247 = vmul.f32 %v119, %v231
    %v248 = vmul.f32 %v120, %v232
    %v249 = vmul.f32 %v121, %v233
    %v250 = vmul.f32 %v122, %v234
    %v251 = vld [vmem:[%s2] sm:$0x1]
    %v253 = vlaneseq
    %v254 = vshrl.u32 %v253, 7
    %v255 = vsub.s32 0, %v254
    %v256 = vrot.slane %v251, %v255
    %v258 = vmul.f32 %v235, %v256
    %v259 = vmul.f32 %v236, %v256
    %v260 = vmul.f32 %v237, %v256
    %v261 = vmul.f32 %v238, %v256
    %v262 = vmul.f32 %v239, %v256
    %v263 = vmul.f32 %v240, %v256
    %v264 = vmul.f32 %v241, %v256
    %v265 = vmul.f32 %v242, %v256
    %v266 = vmul.f32 %v243, %v256
    %v267 = vmul.f32 %v244, %v256
    %v268 = vmul.f32 %v245, %v256
    %v269 = vmul.f32 %v246, %v256
    %v270 = vmul.f32 %v247, %v256
    %v271 = vmul.f32 %v248, %v256
    %v272 = vmul.f32 %v249, %v256
    %v273 = vmul.f32 %v250, %v256
    %v274 = vld [vmem:[%s3] sm:$0x1]
    %v276 = vlaneseq
    %v277 = vshrl.u32 %v276, 7
    %v278 = vsub.s32 0, %v277
    %v279 = vrot.slane %v274, %v278
    %v281 = vadd.f32 %v258, %v279
    %v282 = vadd.f32 %v259, %v279
    %v283 = vadd.f32 %v260, %v279
    %v284 = vadd.f32 %v261, %v279
    %v285 = vadd.f32 %v262, %v279
    %v286 = vadd.f32 %v263, %v279
    %v287 = vadd.f32 %v264, %v279
    %v288 = vadd.f32 %v265, %v279
    %v289 = vadd.f32 %v266, %v279
    %v290 = vadd.f32 %v267, %v279
    %v291 = vadd.f32 %v268, %v279
    %v292 = vadd.f32 %v269, %v279
    %v293 = vadd.f32 %v270, %v279
    %v294 = vadd.f32 %v271, %v279
    %v295 = vadd.f32 %v272, %v279
    %v296 = vadd.f32 %v273, %v279
    %v297 = vld [vmem:[%s1] sm:$0xff]
    %v298 = vld [vmem:[%s1 + $0x8] sm:$0xff]
    %v299 = vld [vmem:[%s1 + $0x10] sm:$0xff]
    %v300 = vld [vmem:[%s1 + $0x18] sm:$0xff]
    %v301 = vld [vmem:[%s1 + $0x20] sm:$0xff]
    %v302 = vld [vmem:[%s1 + $0x28] sm:$0xff]
    %v303 = vld [vmem:[%s1 + $0x30] sm:$0xff]
    %v304 = vld [vmem:[%s1 + $0x38] sm:$0xff]
    %v305 = vld [vmem:[%s1 + $0x40] sm:$0xff]
    %v306 = vld [vmem:[%s1 + $0x48] sm:$0xff]
    %v307 = vld [vmem:[%s1 + $0x50] sm:$0xff]
    %v308 = vld [vmem:[%s1 + $0x58] sm:$0xff]
    %v309 = vld [vmem:[%s1 + $0x60] sm:$0xff]
    %v310 = vld [vmem:[%s1 + $0x68] sm:$0xff]
    %v311 = vld [vmem:[%s1 + $0x70] sm:$0xff]
    %v312 = vld [vmem:[%s1 + $0x78] sm:$0xff]
    %v313 = vxor.u32 %v297, 2147483648
    %v314 = vxor.u32 %v298, 2147483648
    %v315 = vxor.u32 %v299, 2147483648
    %v316 = vxor.u32 %v300, 2147483648
    %v317 = vxor.u32 %v301, 2147483648
    %v318 = vxor.u32 %v302, 2147483648
    %v319 = vxor.u32 %v303, 2147483648
    %v320 = vxor.u32 %v304, 2147483648
    %v321 = vxor.u32 %v305, 2147483648
    %v322 = vxor.u32 %v306, 2147483648
    %v323 = vxor.u32 %v307, 2147483648
    %v324 = vxor.u32 %v308, 2147483648
    %v325 = vxor.u32 %v309, 2147483648
    %v326 = vxor.u32 %v310, 2147483648
    %v327 = vxor.u32 %v311, 2147483648
    %v328 = vxor.u32 %v312, 2147483648
    %v329 = vmul.f32 %v313, 1.442695
    %v330 = vpow.pop %v329
    %v331 = vmul.f32 %v314, 1.442695
    %v332 = vpow.pop %v331
    %v333 = vmul.f32 %v315, 1.442695
    %v334 = vpow.pop %v333
    %v335 = vmul.f32 %v316, 1.442695
    %v336 = vpow.pop %v335
    %v337 = vmul.f32 %v317, 1.442695
    %v338 = vpow.pop %v337
    %v339 = vmul.f32 %v318, 1.442695
    %v340 = vpow.pop %v339
    %v341 = vmul.f32 %v319, 1.442695
    %v342 = vpow.pop %v341
    %v343 = vmul.f32 %v320, 1.442695
    %v344 = vpow.pop %v343
    %v345 = vmul.f32 %v321, 1.442695
    %v346 = vpow.pop %v345
    %v347 = vmul.f32 %v322, 1.442695
    %v348 = vpow.pop %v347
    %v349 = vmul.f32 %v323, 1.442695
    %v350 = vpow.pop %v349
    %v351 = vmul.f32 %v324, 1.442695
    %v352 = vpow.pop %v351
    %v353 = vmul.f32 %v325, 1.442695
    %v354 = vpow.pop %v353
    %v355 = vmul.f32 %v326, 1.442695
    %v356 = vpow.pop %v355
    %v357 = vmul.f32 %v327, 1.442695
    %v358 = vpow.pop %v357
    %v359 = vmul.f32 %v328, 1.442695
    %v360 = vpow.pop %v359
    %v361 = vadd.f32 %v330, 1.0
    %v362 = vadd.f32 %v332, 1.0
    %v363 = vadd.f32 %v334, 1.0
    %v364 = vadd.f32 %v336, 1.0
    %v365 = vadd.f32 %v338, 1.0
    %v366 = vadd.f32 %v340, 1.0
    %v367 = vadd.f32 %v342, 1.0
    %v368 = vadd.f32 %v344, 1.0
    %v369 = vadd.f32 %v346, 1.0
    %v370 = vadd.f32 %v348, 1.0
    %v371 = vadd.f32 %v350, 1.0
    %v372 = vadd.f32 %v352, 1.0
    %v373 = vadd.f32 %v354, 1.0
    %v374 = vadd.f32 %v356, 1.0
    %v375 = vadd.f32 %v358, 1.0
    %v376 = vadd.f32 %v360, 1.0
    %v377 = vrcp.pop %v361
    %v378 = vmul.f32 1.0, %v377
    %v379 = vrcp.pop %v362
    %v380 = vmul.f32 1.0, %v379
    %v381 = vrcp.pop %v363
    %v382 = vmul.f32 1.0, %v381
    %v383 = vrcp.pop %v364
    %v384 = vmul.f32 1.0, %v383
    %v385 = vrcp.pop %v365
    %v386 = vmul.f32 1.0, %v385
    %v387 = vrcp.pop %v366
    %v388 = vmul.f32 1.0, %v387
    %v389 = vrcp.pop %v367
    %v390 = vmul.f32 1.0, %v389
    %v391 = vrcp.pop %v368
    %v392 = vmul.f32 1.0, %v391
    %v393 = vrcp.pop %v369
    %v394 = vmul.f32 1.0, %v393
    %v395 = vrcp.pop %v370
    %v396 = vmul.f32 1.0, %v395
    %v397 = vrcp.pop %v371
    %v398 = vmul.f32 1.0, %v397
    %v399 = vrcp.pop %v372
    %v400 = vmul.f32 1.0, %v399
    %v401 = vrcp.pop %v373
    %v402 = vmul.f32 1.0, %v401
    %v403 = vrcp.pop %v374
    %v404 = vmul.f32 1.0, %v403
    %v405 = vrcp.pop %v375
    %v406 = vmul.f32 1.0, %v405
    %v407 = vrcp.pop %v376
    %v408 = vmul.f32 1.0, %v407
    %v409 = vmul.f32 %v297, %v378
    %v410 = vmul.f32 %v298, %v380
    %v411 = vmul.f32 %v299, %v382
    %v412 = vmul.f32 %v300, %v384
    %v413 = vmul.f32 %v301, %v386
    %v414 = vmul.f32 %v302, %v388
    %v415 = vmul.f32 %v303, %v390
    %v416 = vmul.f32 %v304, %v392
    %v417 = vmul.f32 %v305, %v394
    %v418 = vmul.f32 %v306, %v396
    %v419 = vmul.f32 %v307, %v398
    %v420 = vmul.f32 %v308, %v400
    %v421 = vmul.f32 %v309, %v402
    %v422 = vmul.f32 %v310, %v404
    %v423 = vmul.f32 %v311, %v406
    %v424 = vmul.f32 %v312, %v408
    %v425 = vmul.f32 %v281, %v409
    %v426 = vmul.f32 %v282, %v410
    %v427 = vmul.f32 %v283, %v411
    %v428 = vmul.f32 %v284, %v412
    %v429 = vmul.f32 %v285, %v413
    %v430 = vmul.f32 %v286, %v414
    %v431 = vmul.f32 %v287, %v415
    %v432 = vmul.f32 %v288, %v416
    %v433 = vmul.f32 %v289, %v417
    %v434 = vmul.f32 %v290, %v418
    %v435 = vmul.f32 %v291, %v419
    %v436 = vmul.f32 %v292, %v420
    %v437 = vmul.f32 %v293, %v421
    %v438 = vmul.f32 %v294, %v422
    %v439 = vmul.f32 %v295, %v423
    %v440 = vmul.f32 %v296, %v424
    %v441 = vld [vmem:[%s5] sm:$0xff]
    %v442 = vld [vmem:[%s5 + $0x8] sm:$0xff]
    %v443 = vld [vmem:[%s5 + $0x10] sm:$0xff]
    %v444 = vld [vmem:[%s5 + $0x18] sm:$0xff]
    %v445 = vld [vmem:[%s5 + $0x20] sm:$0xff]
    %v446 = vld [vmem:[%s5 + $0x28] sm:$0xff]
    %v447 = vld [vmem:[%s5 + $0x30] sm:$0xff]
    %v448 = vld [vmem:[%s5 + $0x38] sm:$0xff]
    %v449 = vld [vmem:[%s5 + $0x40] sm:$0xff]
    %v450 = vld [vmem:[%s5 + $0x48] sm:$0xff]
    %v451 = vld [vmem:[%s5 + $0x50] sm:$0xff]
    %v452 = vld [vmem:[%s5 + $0x58] sm:$0xff]
    %v453 = vld [vmem:[%s5 + $0x60] sm:$0xff]
    %v454 = vld [vmem:[%s5 + $0x68] sm:$0xff]
    %v455 = vld [vmem:[%s5 + $0x70] sm:$0xff]
    %v456 = vld [vmem:[%s5 + $0x78] sm:$0xff]
    %v457 = vpack.c.bf16 %v426, %v425
    %v458 = vpack.c.bf16 %v428, %v427
    %v459 = vpack.c.bf16 %v430, %v429
    %v460 = vpack.c.bf16 %v432, %v431
    %v461 = vpack.c.bf16 %v434, %v433
    %v462 = vpack.c.bf16 %v436, %v435
    %v463 = vpack.c.bf16 %v438, %v437
    %v464 = vpack.c.bf16 %v440, %v439
    %v465 = vld [vmem:[%s4] sm:$0xf]
    %v466 = vld [vmem:[%s4 + $0x4] sm:$0xf]
    %v467 = vld [vmem:[%s4 + $0x8] sm:$0xf]
    %v468 = vld [vmem:[%s4 + $0xc] sm:$0xf]
    %v473 = vunpack.c.l.b16 %v465
    %v474 = vunpack.c.l.b16 %v466
    %v475 = vunpack.c.l.b16 %v467
    %v476 = vunpack.c.l.b16 %v468
    %v477 = vpack.c.b16 %v474, %v473
    %v478 = vpack.c.b16 %v476, %v475
    %v482 = vsel %vm41, %v457, 0
    %v485 = vsel %vm41, %v458, 0
    %v488 = vsel %vm41, %v459, 0
    %v491 = vsel %vm41, %v460, 0
    %v494 = vsel %vm41, %v461, 0
    %v497 = vsel %vm41, %v462, 0
    %v500 = vsel %vm41, %v463, 0
    %v503 = vsel %vm41, %v464, 0
    %505 = vmatprep.subr.bf16.mxu0 0
    %506 = vmatpush1.bf16.msra.mxu0 %v477
    %507 = vmatprep.subr.bf16.mxu0 0
    %508 = vmatpush1.bf16.msra.mxu0 %v478
    %509 = vmatprep.subr.bf16.mxu0 0
    %510 = vmatpush1.bf16.msra.mxu0 0
    %511 = vmatprep.subr.bf16.mxu0 0
    %512 = vmatpush1.bf16.msra.mxu0 0
    %513 = vmatprep.subr.bf16.mxu0 0
    %514 = vmatpush1.bf16.msra.mxu0 0
    %515 = vmatprep.subr.bf16.mxu0 0
    %516 = vmatpush1.bf16.msra.mxu0 0
    %517 = vmatprep.subr.bf16.mxu0 0
    %518 = vmatpush1.bf16.msra.mxu0 0
    %519 = vmatprep.subr.bf16.mxu0 0
    %520 = vmatpush1.bf16.msra.mxu0 0
    %521 = vmatprep.subr.bf16.mxu0 0
    %522 = vmatpush1.bf16.msra.mxu0 0
    %523 = vmatprep.subr.bf16.mxu0 0
    %524 = vmatpush1.bf16.msra.mxu0 0
    %525 = vmatprep.subr.bf16.mxu0 0
    %526 = vmatpush1.bf16.msra.mxu0 0
    %527 = vmatprep.subr.bf16.mxu0 0
    %528 = vmatpush1.bf16.msra.mxu0 0
    %529 = vmatprep.subr.bf16.mxu0 0
    %530 = vmatpush1.bf16.msra.mxu0 0
    %531 = vmatprep.subr.bf16.mxu0 0
    %532 = vmatpush1.bf16.msra.mxu0 0
    %533 = vmatprep.subr.bf16.mxu0 0
    %534 = vmatpush1.bf16.msra.mxu0 0
    %535 = vmatprep.subr.bf16.mxu0 0
    %536 = vmatpush1.bf16.msra.mxu0 0
    %537 = vmatprep.mubr.bf16.mxu0 0
    %538 = vmatmul.mubr.bf16.gmra.mrb[0].mxu0 %v482
    %v539 = vpop.f32.mrb[0].mxu0
    %v540 = vadd.f32 0.0, %v539
    %v541 = vpop.f32.mrb[0].mxu0
    %v542 = vpop.f32.mrb[0].mxu0
    %v543 = vadd.f32 0.0, %v542
    %v544 = vpop.f32.mrb[0].mxu0
    %545 = vmatprep.mubr.bf16.mxu0 0
    %546 = vmatmul.mubr.bf16.gmra.mrb[0].mxu0 %v485
    %v547 = vpop.f32.mrb[0].mxu0
    %v548 = vadd.f32 0.0, %v547
    %v549 = vpop.f32.mrb[0].mxu0
    %v550 = vpop.f32.mrb[0].mxu0
    %v551 = vadd.f32 0.0, %v550
    %v552 = vpop.f32.mrb[0].mxu0
    %553 = vmatprep.mubr.bf16.mxu0 0
    %554 = vmatmul.mubr.bf16.gmra.mrb[0].mxu0 %v488
    %v555 = vpop.f32.mrb[0].mxu0
    %v556 = vadd.f32 0.0, %v555
    %v557 = vpop.f32.mrb[0].mxu0
    %v558 = vpop.f32.mrb[0].mxu0
    %v559 = vadd.f32 0.0, %v558
    %v560 = vpop.f32.mrb[0].mxu0
    %561 = vmatprep.mubr.bf16.mxu0 0
    %562 = vmatmul.mubr.bf16.gmra.mrb[0].mxu0 %v491
    %v563 = vpop.f32.mrb[0].mxu0
    %v564 = vadd.f32 0.0, %v563
    %v565 = vpop.f32.mrb[0].mxu0
    %v566 = vpop.f32.mrb[0].mxu0
    %v567 = vadd.f32 0.0, %v566
    %v568 = vpop.f32.mrb[0].mxu0
    %569 = vmatprep.mubr.bf16.mxu0 0
    %570 = vmatmul.mubr.bf16.gmra.mrb[0].mxu0 %v494
    %v571 = vpop.f32.mrb[0].mxu0
    %v572 = vadd.f32 0.0, %v571
    %v573 = vpop.f32.mrb[0].mxu0
    %v574 = vpop.f32.mrb[0].mxu0
    %v575 = vadd.f32 0.0, %v574
    %v576 = vpop.f32.mrb[0].mxu0
    %577 = vmatprep.mubr.bf16.mxu0 0
    %578 = vmatmul.mubr.bf16.gmra.mrb[0].mxu0 %v497
    %v579 = vpop.f32.mrb[0].mxu0
    %v580 = vadd.f32 0.0, %v579
    %v581 = vpop.f32.mrb[0].mxu0
    %v582 = vpop.f32.mrb[0].mxu0
    %v583 = vadd.f32 0.0, %v582
    %v584 = vpop.f32.mrb[0].mxu0
    %585 = vmatprep.mubr.bf16.mxu0 0
    %586 = vmatmul.mubr.bf16.gmra.mrb[0].mxu0 %v500
    %v587 = vpop.f32.mrb[0].mxu0
    %v588 = vadd.f32 0.0, %v587
    %v589 = vpop.f32.mrb[0].mxu0
    %v590 = vpop.f32.mrb[0].mxu0
    %v591 = vadd.f32 0.0, %v590
    %v592 = vpop.f32.mrb[0].mxu0
    %593 = vmatprep.mubr.bf16.mxu0 0
    %594 = vmatmul.mubr.bf16.gmra.mrb[0].mxu0 %v503
    %v595 = vpop.f32.mrb[0].mxu0
    %v596 = vadd.f32 0.0, %v595
    %v597 = vpop.f32.mrb[0].mxu0
    %v598 = vpop.f32.mrb[0].mxu0
    %v599 = vadd.f32 0.0, %v598
    %v600 = vpop.f32.mrb[0].mxu0
    %601 = vdwg.mxu0
    %v602 = vadd.f32 %v441, %v540
    %v603 = vadd.f32 %v442, %v543
    %v604 = vadd.f32 %v443, %v548
    %v605 = vadd.f32 %v444, %v551
    %v606 = vadd.f32 %v445, %v556
    %v607 = vadd.f32 %v446, %v559
    %v608 = vadd.f32 %v447, %v564
    %v609 = vadd.f32 %v448, %v567
    %v610 = vadd.f32 %v449, %v572
    %v611 = vadd.f32 %v450, %v575
    %v612 = vadd.f32 %v451, %v580
    %v613 = vadd.f32 %v452, %v583
    %v614 = vadd.f32 %v453, %v588
    %v615 = vadd.f32 %v454, %v591
    %v616 = vadd.f32 %v455, %v596
    %v617 = vadd.f32 %v456, %v599
    %vm618 = vcmask 130048
    %619 = vst.msk [vmem:[#allocation2] sm:$0xff] %vm618, %v602
    %620 = vst.msk [vmem:[#allocation2 + $0x8] sm:$0xff] %vm618, %v603
    %621 = vst.msk [vmem:[#allocation2 + $0x10] sm:$0xff] %vm618, %v604
    %622 = vst.msk [vmem:[#allocation2 + $0x18] sm:$0xff] %vm618, %v605
    %623 = vst.msk [vmem:[#allocation2 + $0x20] sm:$0xff] %vm618, %v606
    %624 = vst.msk [vmem:[#allocation2 + $0x28] sm:$0xff] %vm618, %v607
    %625 = vst.msk [vmem:[#allocation2 + $0x30] sm:$0xff] %vm618, %v608
    %626 = vst.msk [vmem:[#allocation2 + $0x38] sm:$0xff] %vm618, %v609
    %627 = vst.msk [vmem:[#allocation2 + $0x40] sm:$0xff] %vm618, %v610
    %628 = vst.msk [vmem:[#allocation2 + $0x48] sm:$0xff] %vm618, %v611
    %629 = vst.msk [vmem:[#allocation2 + $0x50] sm:$0xff] %vm618, %v612
    %630 = vst.msk [vmem:[#allocation2 + $0x58] sm:$0xff] %vm618, %v613
    %631 = vst.msk [vmem:[#allocation2 + $0x60] sm:$0xff] %vm618, %v614
    %632 = vst.msk [vmem:[#allocation2 + $0x68] sm:$0xff] %vm618, %v615
    %633 = vst.msk [vmem:[#allocation2 + $0x70] sm:$0xff] %vm618, %v616
    %634 = vst.msk [vmem:[#allocation2 + $0x78] sm:$0xff] %vm618, %v617
    // Predicated region
    $region26: #{vss_block_forward.7} parent=1 // pred_check
      _
    $region27: #{vss_block_forward.7} parent=1 // pred_check_branch
      %636 = sbr.rel (0) target = $region29
    $region28: #{vss_block_forward.7} parent=1 // pred_region
      %s638 = ssub.s32 2048, 2048
      %639 = vsyncadd [#allocation3], %s638
      %s640 = sshll.u32 [#allocation2], 4
      %s641 = int_to_ptr.vmem [resolvable:$true] %s640
      %646 = dma.vmem_to_hbm [thread:$0]  %s641, 2048, %s6, [#allocation3], 128, 128, 8
    $region29: #{vss_block_forward.7} parent=1 // pred_fallthru
      _
    // Predicated region
    $region30: #{vss_block_forward.7} parent=1 // pred_check
      _
    $region31: #{vss_block_forward.7} parent=1 // pred_check_branch
      %648 = sbr.rel (0) target = $region33
    $region32: #{vss_block_forward.7} parent=1 // pred_region
      %649 = dma.done [#allocation3], 2048
    $region33: #{vss_block_forward.7} parent=1 // pred_fallthru
      _
    %650 = vsyncpa [#allocation3], 1

// kernel: vss_block_forward.6
$region0: #{vss_block_forward.6}
  #allocation0 [shape = 'u32[]', space=smem, size = 0x4, offset = 0x4, fixed_abs, tag = 'smem constant byte address 0x4 - core index']
  #allocation1 [shape = 'u32[144,128]{1,0:T(1,128)}', space=vmem, size = 0x12000, scoped, tag = 'internal scratch']
  #allocation2 [shape = 'f32[64,128]{1,0:T(8,128)}', space=vmem, size = 0x8000, scoped, tag = 'scratch operand']
  #allocation3 [shape = 'f32[64,32]{1,0:T(8,128)}', space=vmem, size = 0x8000, scoped, tag = 'scratch operand']
  #allocation4 [shape = 'f32[64,32]{1,0:T(8,128)}', space=vmem, size = 0x8000, scoped, tag = 'scratch operand']
  #allocation5 [shape = 'f32[8,8,128]{2,1,0:T(8,128)}', space=vmem, size = 0x8000, scoped, tag = 'scratch operand']
  #allocation6 [shape = 'f32[8,8,128]{2,1,0:T(8,128)}', space=vmem, size = 0x8000, scoped, tag = 'scratch operand']
  #allocation7 [shape = 'f32[8,8,128]{2,1,0:T(8,128)}', space=vmem, size = 0x8000, scoped, tag = 'scratch operand']
  %s0 = inlined_call_operand.vmem [shape: f32[2,64,128], index: 0, kind: input, shape index: {}]
  %s1 = inlined_call_operand.vmem [shape: bf16[128,80], index: 1, kind: input, shape index: {}]
  %s2 = inlined_call_operand.vmem [shape: bf16[16,128], index: 2, kind: input, shape index: {}]
  %s3 = inlined_call_operand.vmem [shape: f32[1,128], index: 3, kind: input, shape index: {}]
  %s4 = inlined_call_operand.vmem [shape: f32[8,128], index: 4, kind: input, shape index: {}]
  %s5 = inlined_call_operand.vmem [shape: f32[1,128], index: 5, kind: input, shape index: {}]
  %s6 = inlined_call_operand.vmem [shape: f32[2,64,128], index: 6, kind: output, shape index: {}]
  %s7 = sld [smem:[#allocation0]]
  $region64: #{vss_block_forward.6} parent=0
    _
  %s9 = ssub.s32 1, %s7
  %s10 = scalar_select 0, %s9, %s7
  loop: start=0, step=1, limit=4
  $region2: #{vss_block_forward.6} parent=0 // loop_pre_header
    _
  $region3: #{vss_block_forward.6} parent=0 // loop_header
    %s12 = sphi 0, %s16
    %p13 = scmp.ge.s32.totalorder %s12, 4
    %s22 = sphi 0, %s24
    %s25 = sphi 0, %s22
    %s26 = sphi 0, %s25
    %s42 = sphi 0, %s26
    %s46 = sphi 0, %s46
    %s48 = sphi 0, %s46
    %s49 = sphi 0, %s48
    %s63 = sphi 0, %s49
    %s67 = sphi 0, %s67
    %s69 = sphi 0, %s67
    %s70 = sphi 0, %s69
    %s84 = sphi 0, %s70
    %s88 = sphi 0, %s88
    %s90 = sphi 0, %s88
    %s91 = sphi 0, %s90
    %s105 = sphi 0, %s91
    %s109 = sphi 0, %s109
    %s111 = sphi 0, %s109
    %s112 = sphi 0, %s111
    %s126 = sphi 0, %s112
    %s130 = sphi 0, %s130
    %s132 = sphi 0, %s130
    %s133 = sphi 0, %s132
    %s147 = sphi 0, %s133
    %s153 = sphi 0, %s155
    %s156 = sphi 0, %s153
    %s157 = sphi 0, %s156
    %s173 = sphi 0, %s157
  $region4: #{vss_block_forward.6} parent=0 // loop_header_branch
    %15 = sbr.rel (%p13) target = $region8
  $region5: #{vss_block_forward.6} parent=0 // loop_body
    %s17 = ssub.s32 %s12, 1
    %s18 = ssub.s32 %s12, 2
    %s19 = sadd.s32 %s12, 1
    %s20 = ssub.s32 %s12, %s19
    %p21 = scmp.eq.s32.totalorder %s20, 0
    %s23 = sadd.s32 %s22, 1
    %s24 = scalar_select %p21, %s22, %s23
    %p27 = pneg %p21
    %p28 = scmp.eq.s32.totalorder %s12, 1
    %p29 = por %p27, %p28
    %p30 = scmp.ne.s32.totalorder %s22, %s25
    %p31 = scmp.eq.s32.totalorder %s12, 0
    %p32 = por %p30, %p31
    %p33 = scmp.ne.s32.totalorder %s22, %s25
    %p34 = scmp.eq.s32.totalorder %s17, 1
    %p35 = por %p33, %p34
    %p36 = scmp.ne.s32.totalorder %s25, %s26
    %p37 = scmp.eq.s32.totalorder %s17, 0
    %p38 = por %p36, %p37
    %p39 = scmp.ne.s32.totalorder %s25, %s26
    %p40 = scmp.eq.s32.totalorder %s18, 1
    %p41 = por %p39, %p40
    %p43 = scmp.ne.s32.totalorder %s26, %s42
    %p44 = scmp.eq.s32.totalorder %s18, 0
    %p45 = por %p43, %p44
    %s47 = sadd.s32 %s46, 1
    %p50 = scmp.eq.s32.totalorder %s12, 1
    %p51 = scmp.ne.s32.totalorder %s46, %s48
    %p52 = scmp.eq.s32.totalorder %s12, 0
    %p53 = por %p51, %p52
    %p54 = scmp.ne.s32.totalorder %s46, %s48
    %p55 = scmp.eq.s32.totalorder %s17, 1
    %p56 = por %p54, %p55
    %p57 = scmp.ne.s32.totalorder %s48, %s49
    %p58 = scmp.eq.s32.totalorder %s17, 0
    %p59 = por %p57, %p58
    %p60 = scmp.ne.s32.totalorder %s48, %s49
    %p61 = scmp.eq.s32.totalorder %s18, 1
    %p62 = por %p60, %p61
    %p64 = scmp.ne.s32.totalorder %s49, %s63
    %p65 = scmp.eq.s32.totalorder %s18, 0
    %p66 = por %p64, %p65
    %s68 = sadd.s32 %s67, 1
    %p71 = scmp.eq.s32.totalorder %s12, 1
    %p72 = scmp.ne.s32.totalorder %s67, %s69
    %p73 = scmp.eq.s32.totalorder %s12, 0
    %p74 = por %p72, %p73
    %p75 = scmp.ne.s32.totalorder %s67, %s69
    %p76 = scmp.eq.s32.totalorder %s17, 1
    %p77 = por %p75, %p76
    %p78 = scmp.ne.s32.totalorder %s69, %s70
    %p79 = scmp.eq.s32.totalorder %s17, 0
    %p80 = por %p78, %p79
    %p81 = scmp.ne.s32.totalorder %s69, %s70
    %p82 = scmp.eq.s32.totalorder %s18, 1
    %p83 = por %p81, %p82
    %p85 = scmp.ne.s32.totalorder %s70, %s84
    %p86 = scmp.eq.s32.totalorder %s18, 0
    %p87 = por %p85, %p86
    %s89 = sadd.s32 %s88, 1
    %p92 = scmp.eq.s32.totalorder %s12, 1
    %p93 = scmp.ne.s32.totalorder %s88, %s90
    %p94 = scmp.eq.s32.totalorder %s12, 0
    %p95 = por %p93, %p94
    %p96 = scmp.ne.s32.totalorder %s88, %s90
    %p97 = scmp.eq.s32.totalorder %s17, 1
    %p98 = por %p96, %p97
    %p99 = scmp.ne.s32.totalorder %s90, %s91
    %p100 = scmp.eq.s32.totalorder %s17, 0
    %p101 = por %p99, %p100
    %p102 = scmp.ne.s32.totalorder %s90, %s91
    %p103 = scmp.eq.s32.totalorder %s18, 1
    %p104 = por %p102, %p103
    %p106 = scmp.ne.s32.totalorder %s91, %s105
    %p107 = scmp.eq.s32.totalorder %s18, 0
    %p108 = por %p106, %p107
    %s110 = sadd.s32 %s109, 1
    %p113 = scmp.eq.s32.totalorder %s12, 1
    %p114 = scmp.ne.s32.totalorder %s109, %s111
    %p115 = scmp.eq.s32.totalorder %s12, 0
    %p116 = por %p114, %p115
    %p117 = scmp.ne.s32.totalorder %s109, %s111
    %p118 = scmp.eq.s32.totalorder %s17, 1
    %p119 = por %p117, %p118
    %p120 = scmp.ne.s32.totalorder %s111, %s112
    %p121 = scmp.eq.s32.totalorder %s17, 0
    %p122 = por %p120, %p121
    %p123 = scmp.ne.s32.totalorder %s111, %s112
    %p124 = scmp.eq.s32.totalorder %s18, 1
    %p125 = por %p123, %p124
    %p127 = scmp.ne.s32.totalorder %s112, %s126
    %p128 = scmp.eq.s32.totalorder %s18, 0
    %p129 = por %p127, %p128
    %s131 = sadd.s32 %s130, 1
    %p134 = scmp.eq.s32.totalorder %s12, 1
    %p135 = scmp.ne.s32.totalorder %s130, %s132
    %p136 = scmp.eq.s32.totalorder %s12, 0
    %p137 = por %p135, %p136
    %p138 = scmp.ne.s32.totalorder %s130, %s132
    %p139 = scmp.eq.s32.totalorder %s17, 1
    %p140 = por %p138, %p139
    %p141 = scmp.ne.s32.totalorder %s132, %s133
    %p142 = scmp.eq.s32.totalorder %s17, 0
    %p143 = por %p141, %p142
    %p144 = scmp.ne.s32.totalorder %s132, %s133
    %p145 = scmp.eq.s32.totalorder %s18, 1
    %p146 = por %p144, %p145
    %p148 = scmp.ne.s32.totalorder %s133, %s147
    %p149 = scmp.eq.s32.totalorder %s18, 0
    %p150 = por %p148, %p149
    %s151 = ssub.s32 %s12, %s19
    %p152 = scmp.eq.s32.totalorder %s151, 0
    %s154 = sadd.s32 %s153, 1
    %s155 = scalar_select %p152, %s153, %s154
    %p158 = pneg %p152
    %p159 = scmp.eq.s32.totalorder %s12, 1
    %p160 = por %p158, %p159
    %p161 = scmp.ne.s32.totalorder %s153, %s156
    %p162 = scmp.eq.s32.totalorder %s12, 0
    %p163 = por %p161, %p162
    %p164 = scmp.ne.s32.totalorder %s153, %s156
    %p165 = scmp.eq.s32.totalorder %s17, 1
    %p166 = por %p164, %p165
    %p167 = scmp.ne.s32.totalorder %s156, %s157
    %p168 = scmp.eq.s32.totalorder %s17, 0
    %p169 = por %p167, %p168
    %p170 = scmp.ne.s32.totalorder %s156, %s157
    %p171 = scmp.eq.s32.totalorder %s18, 1
    %p172 = por %p170, %p171
    %p174 = scmp.ne.s32.totalorder %s157, %s173
    %p175 = scmp.eq.s32.totalorder %s18, 0
    %p176 = por %p174, %p175
    %p177 = scmp.le.s32.totalorder 1, %s12
    %p178 = scmp.lt.s32.totalorder %s12, 3
    %p179 = pnand %p177, %p178
    %p180 = pneg %p179
    // Predicated region
    $region9: #{vss_block_forward.6} parent=5 // pred_check
      _
    $region10: #{vss_block_forward.6} parent=5 // pred_check_branch
      %182 = sbr.rel (%p179) target = $region12
    $region11: #{vss_block_forward.6} parent=5 // pred_region
      %s183 = ssub.s32 %s12, 1
      // Predicated region
      $region13: #{vss_block_forward.6} parent=11 // pred_check
        %p184 = pneg %p59
      $region14: #{vss_block_forward.6} parent=11 // pred_check_branch
        %186 = sbr.rel (%p184) target = $region16
      $region15: #{vss_block_forward.6} parent=11 // pred_region
        _
      $region16: #{vss_block_forward.6} parent=11 // pred_fallthru
        _
      // Predicated region
      $region17: #{vss_block_forward.6} parent=11 // pred_check
        %p187 = pneg %p80
      $region18: #{vss_block_forward.6} parent=11 // pred_check_branch
        %189 = sbr.rel (%p187) target = $region20
      $region19: #{vss_block_forward.6} parent=11 // pred_region
        _
      $region20: #{vss_block_forward.6} parent=11 // pred_fallthru
        _
      // Predicated region
      $region21: #{vss_block_forward.6} parent=11 // pred_check
        %p190 = pneg %p101
      $region22: #{vss_block_forward.6} parent=11 // pred_check_branch
        %192 = sbr.rel (%p190) target = $region24
      $region23: #{vss_block_forward.6} parent=11 // pred_region
        _
      $region24: #{vss_block_forward.6} parent=11 // pred_fallthru
        _
      // Predicated region
      $region25: #{vss_block_forward.6} parent=11 // pred_check
        %p193 = pneg %p122
      $region26: #{vss_block_forward.6} parent=11 // pred_check_branch
        %195 = sbr.rel (%p193) target = $region28
      $region27: #{vss_block_forward.6} parent=11 // pred_region
        _
      $region28: #{vss_block_forward.6} parent=11 // pred_fallthru
        _
      // Predicated region
      $region29: #{vss_block_forward.6} parent=11 // pred_check
        %p196 = pneg %p143
      $region30: #{vss_block_forward.6} parent=11 // pred_check_branch
        %198 = sbr.rel (%p196) target = $region32
      $region31: #{vss_block_forward.6} parent=11 // pred_region
        _
      $region32: #{vss_block_forward.6} parent=11 // pred_fallthru
        _
    $region12: #{vss_block_forward.6} parent=5 // pred_fallthru
      _
    %p199 = scmp.lt.s32.totalorder %s12, 2
    // Predicated region
    $region33: #{vss_block_forward.6} parent=5 // pred_check
      %p200 = pneg %p199
    $region34: #{vss_block_forward.6} parent=5 // pred_check_branch
      %202 = sbr.rel (%p200) target = $region36
    $region35: #{vss_block_forward.6} parent=5 // pred_region
      // Predicated region
      $region37: #{vss_block_forward.6} parent=35 // pred_check
        %p203 = pneg %p32
      $region38: #{vss_block_forward.6} parent=35 // pred_check_branch
        %205 = sbr.rel (%p203) target = $region40
      $region39: #{vss_block_forward.6} parent=35 // pred_region
        %p206 = scmp.lt.s32.totalorder %s12, 1
        %s207 = scalar_select %p206, %s12, 1
        %s208 = smul.addr %s207, 8
        %s209 = smul.addr %s208, 8
        %s210 = scalar_lea.vmem %s0, %s209
      $region40: #{vss_block_forward.6} parent=35 // pred_fallthru
        _
    $region36: #{vss_block_forward.6} parent=5 // pred_fallthru
      _
    %p211 = scmp.le.s32.totalorder 1, %s12
    %p212 = scmp.lt.s32.totalorder %s12, 3
    %p213 = pnand %p211, %p212
    %p214 = pneg %p213
    // Predicated region
    $region41: #{vss_block_forward.6} parent=5 // pred_check
      _
    $region42: #{vss_block_forward.6} parent=5 // pred_check_branch
      %216 = sbr.rel (%p213) target = $region44
    $region43: #{vss_block_forward.6} parent=5 // pred_region
      %s217 = ssub.s32 %s12, 1
      %p218 = scmp.lt.s32.totalorder %s17, 1
      %s219 = scalar_select %p218, %s17, 1
      %s220 = smul.addr %s219, 8
      %s221 = smul.addr %s220, 8
      %s222 = scalar_lea.vmem %s0, %s221
      %p223 = pneg %p38
      %p224 = pneg %p35
      %p225 = pneg %p59
      %p226 = pneg %p56
      %p227 = pneg %p80
      %p228 = pneg %p77
      %p229 = pneg %p101
      %p230 = pneg %p98
      %p231 = pneg %p122
      %p232 = pneg %p119
      %p233 = pneg %p143
      %p234 = pneg %p140
      %p235 = pneg %p169
      %p236 = pneg %p166
      %p237 = scmp.lt.s32.totalorder %s17, 1
      %s238 = scalar_select %p237, %s17, 1
      %s239 = smul.addr %s238, 8
      %s240 = smul.addr %s239, 8
      %s241 = scalar_lea.vmem %s6, %s240
      %p242 = scmp.lt.s32.totalorder %s17, 1
      %s243 = scalar_select %p242, %s17, 1
      %s244 = smul.addr %s243, 8
      %s245 = smul.addr %s244, 8
      %s246 = scalar_lea.vmem %s0, %s245
      %p247 = scmp.lt.s32.totalorder %s17, 1
      %s248 = scalar_select %p247, %s17, 1
      %s249 = smul.addr %s248, 8
      %s250 = smul.addr %s249, 8
      %s251 = scalar_lea.vmem %s6, %s250
      %v253 = vld [vmem:[%s246] sm:$0xff]
      %v254 = vld [vmem:[%s246 + $0x8] sm:$0xff]
      %v255 = vld [vmem:[%s246 + $0x10] sm:$0xff]
      %v256 = vld [vmem:[%s246 + $0x18] sm:$0xff]
      %v257 = vld [vmem:[%s246 + $0x20] sm:$0xff]
      %v258 = vld [vmem:[%s246 + $0x28] sm:$0xff]
      %v259 = vld [vmem:[%s246 + $0x30] sm:$0xff]
      %v260 = vld [vmem:[%s246 + $0x38] sm:$0xff]
      %v261 = vpack.c.bf16 %v254, %v253
      %v262 = vpack.c.bf16 %v256, %v255
      %v263 = vpack.c.bf16 %v258, %v257
      %v264 = vpack.c.bf16 %v260, %v259
      %v265 = vld [vmem:[%s1] sm:$0xf]
      %v266 = vld [vmem:[%s1 + $0x4] sm:$0xf]
      %v267 = vld [vmem:[%s1 + $0x8] sm:$0xf]
      %v268 = vld [vmem:[%s1 + $0xc] sm:$0xf]
      %v269 = vld [vmem:[%s1 + $0x10] sm:$0xf]
      %v270 = vld [vmem:[%s1 + $0x14] sm:$0xf]
      %v271 = vld [vmem:[%s1 + $0x18] sm:$0xf]
      %v272 = vld [vmem:[%s1 + $0x1c] sm:$0xf]
      %v273 = vld [vmem:[%s1 + $0x20] sm:$0xf]
      %v274 = vld [vmem:[%s1 + $0x24] sm:$0xf]
      %v275 = vld [vmem:[%s1 + $0x28] sm:$0xf]
      %v276 = vld [vmem:[%s1 + $0x2c] sm:$0xf]
      %v277 = vld [vmem:[%s1 + $0x30] sm:$0xf]
      %v278 = vld [vmem:[%s1 + $0x34] sm:$0xf]
      %v279 = vld [vmem:[%s1 + $0x38] sm:$0xf]
      %v280 = vld [vmem:[%s1 + $0x3c] sm:$0xf]
      %v297 = vunpack.c.l.b16 %v265
      %v298 = vunpack.c.l.b16 %v266
      %v299 = vunpack.c.l.b16 %v267
      %v300 = vunpack.c.l.b16 %v268
      %v301 = vunpack.c.l.b16 %v269
      %v302 = vunpack.c.l.b16 %v270
      %v303 = vunpack.c.l.b16 %v271
      %v304 = vunpack.c.l.b16 %v272
      %v305 = vunpack.c.l.b16 %v273
      %v306 = vunpack.c.l.b16 %v274
      %v307 = vunpack.c.l.b16 %v275
      %v308 = vunpack.c.l.b16 %v276
      %v309 = vunpack.c.l.b16 %v277
      %v310 = vunpack.c.l.b16 %v278
      %v311 = vunpack.c.l.b16 %v279
      %v312 = vunpack.c.l.b16 %v280
      %v313 = vpack.c.b16 %v298, %v297
      %v314 = vpack.c.b16 %v300, %v299
      %v315 = vpack.c.b16 %v302, %v301
      %v316 = vpack.c.b16 %v304, %v303
      %v317 = vpack.c.b16 %v306, %v305
      %v318 = vpack.c.b16 %v308, %v307
      %v319 = vpack.c.b16 %v310, %v309
      %v320 = vpack.c.b16 %v312, %v311
      %329 = vmatprep.subr.bf16.mxu0 0
      %330 = vmatpush1.bf16.msra.mxu0 %v313
      %331 = vmatprep.subr.bf16.mxu0 0
      %332 = vmatpush1.bf16.msra.mxu0 %v314
      %333 = vmatprep.subr.bf16.mxu0 0
      %334 = vmatpush1.bf16.msra.mxu0 %v315
      %335 = vmatprep.subr.bf16.mxu0 0
      %336 = vmatpush1.bf16.msra.mxu0 %v316
      %337 = vmatprep.subr.bf16.mxu0 0
      %338 = vmatpush1.bf16.msra.mxu0 %v317
      %339 = vmatprep.subr.bf16.mxu0 0
      %340 = vmatpush1.bf16.msra.mxu0 %v318
      %341 = vmatprep.subr.bf16.mxu0 0
      %342 = vmatpush1.bf16.msra.mxu0 %v319
      %343 = vmatprep.subr.bf16.mxu0 0
      %344 = vmatpush1.bf16.msra.mxu0 %v320
      %345 = vmatprep.subr.bf16.mxu0 0
      %346 = vmatpush1.bf16.msra.mxu0 0
      %347 = vmatprep.subr.bf16.mxu0 0
      %348 = vmatpush1.bf16.msra.mxu0 0
      %349 = vmatprep.subr.bf16.mxu0 0
      %350 = vmatpush1.bf16.msra.mxu0 0
      %351 = vmatprep.subr.bf16.mxu0 0
      %352 = vmatpush1.bf16.msra.mxu0 0
      %353 = vmatprep.subr.bf16.mxu0 0
      %354 = vmatpush1.bf16.msra.mxu0 0
      %355 = vmatprep.subr.bf16.mxu0 0
      %356 = vmatpush1.bf16.msra.mxu0 0
      %357 = vmatprep.subr.bf16.mxu0 0
      %358 = vmatpush1.bf16.msra.mxu0 0
      %359 = vmatprep.subr.bf16.mxu0 0
      %360 = vmatpush1.bf16.msra.mxu0 0
      %361 = vmatprep.mubr.bf16.mxu0 0
      %362 = vmatmul.mubr.bf16.gmra.mrb[0].mxu0 %v261
      %v363 = vpop.f32.mrb[0].mxu0
      %v364 = vadd.f32 0.0, %v363
      %v365 = vpop.f32.mrb[0].mxu0
      %v366 = vpop.f32.mrb[0].mxu0
      %v367 = vadd.f32 0.0, %v366
      %v368 = vpop.f32.mrb[0].mxu0
      %369 = vmatprep.mubr.bf16.mxu0 0
      %370 = vmatmul.mubr.bf16.gmra.mrb[0].mxu0 %v262
      %v371 = vpop.f32.mrb[0].mxu0
      %v372 = vadd.f32 0.0, %v371
      %v373 = vpop.f32.mrb[0].mxu0
      %v374 = vpop.f32.mrb[0].mxu0
      %v375 = vadd.f32 0.0, %v374
      %v376 = vpop.f32.mrb[0].mxu0
      %377 = vmatprep.mubr.bf16.mxu0 0
      %378 = vmatmul.mubr.bf16.gmra.mrb[0].mxu0 %v263
      %v379 = vpop.f32.mrb[0].mxu0
      %v380 = vadd.f32 0.0, %v379
      %v381 = vpop.f32.mrb[0].mxu0
      %v382 = vpop.f32.mrb[0].mxu0
      %v383 = vadd.f32 0.0, %v382
      %v384 = vpop.f32.mrb[0].mxu0
      %385 = vmatprep.mubr.bf16.mxu0 0
      %386 = vmatmul.mubr.bf16.gmra.mrb[0].mxu0 %v264
      %v387 = vpop.f32.mrb[0].mxu0
      %v388 = vadd.f32 0.0, %v387
      %v389 = vpop.f32.mrb[0].mxu0
      %v390 = vpop.f32.mrb[0].mxu0
      %v391 = vadd.f32 0.0, %v390
      %v392 = vpop.f32.mrb[0].mxu0
      %393 = vdwg.mxu0
      %402 = vrot.lane.b32.xlu0 %v364, 112
      %v403 = vpop.permute.xlu0 %402
      %404 = vrot.lane.b32.xlu0 %v367, 112
      %v405 = vpop.permute.xlu0 %404
      %406 = vrot.lane.b32.xlu0 %v372, 112
      %v407 = vpop.permute.xlu0 %406
      %408 = vrot.lane.b32.xlu0 %v375, 112
      %v409 = vpop.permute.xlu0 %408
      %410 = vrot.lane.b32.xlu0 %v380, 112
      %v411 = vpop.permute.xlu0 %410
      %412 = vrot.lane.b32.xlu0 %v383, 112
      %v413 = vpop.permute.xlu0 %412
      %414 = vrot.lane.b32.xlu0 %v388, 112
      %v415 = vpop.permute.xlu0 %414
      %416 = vrot.lane.b32.xlu0 %v391, 112
      %v417 = vpop.permute.xlu0 %416
      %vm426 = vcmask 261120
      %427 = vst.msk [vmem:[#allocation3] sm:$0xff] %vm426, %v403
      %428 = vst.msk [vmem:[#allocation3 + $0x8] sm:$0xff] %vm426, %v405
      %429 = vst.msk [vmem:[#allocation3 + $0x10] sm:$0xff] %vm426, %v407
      %430 = vst.msk [vmem:[#allocation3 + $0x18] sm:$0xff] %vm426, %v409
      %431 = vst.msk [vmem:[#allocation3 + $0x20] sm:$0xff] %vm426, %v411
      %432 = vst.msk [vmem:[#allocation3 + $0x28] sm:$0xff] %vm426, %v413
      %433 = vst.msk [vmem:[#allocation3 + $0x30] sm:$0xff] %vm426, %v415
      %434 = vst.msk [vmem:[#allocation3 + $0x38] sm:$0xff] %vm426, %v417
      %435 = vrot.lane.b32.xlu0 %v364, 80
      %v436 = vpop.permute.xlu0 %435
      %437 = vrot.lane.b32.xlu0 %v367, 80
      %v438 = vpop.permute.xlu0 %437
      %439 = vrot.lane.b32.xlu0 %v372, 80
      %v440 = vpop.permute.xlu0 %439
      %441 = vrot.lane.b32.xlu0 %v375, 80
      %v442 = vpop.permute.xlu0 %441
      %443 = vrot.lane.b32.xlu0 %v380, 80
      %v444 = vpop.permute.xlu0 %443
      %445 = vrot.lane.b32.xlu0 %v383, 80
      %v446 = vpop.permute.xlu0 %445
      %447 = vrot.lane.b32.xlu0 %v388, 80
      %v448 = vpop.permute.xlu0 %447
      %449 = vrot.lane.b32.xlu0 %v391, 80
      %v450 = vpop.permute.xlu0 %449
      %459 = vst.msk [vmem:[#allocation4] sm:$0xff] %vm426, %v436
      %460 = vst.msk [vmem:[#allocation4 + $0x8] sm:$0xff] %vm426, %v438
      %461 = vst.msk [vmem:[#allocation4 + $0x10] sm:$0xff] %vm426, %v440
      %462 = vst.msk [vmem:[#allocation4 + $0x18] sm:$0xff] %vm426, %v442
      %463 = vst.msk [vmem:[#allocation4 + $0x20] sm:$0xff] %vm426, %v444
      %464 = vst.msk [vmem:[#allocation4 + $0x28] sm:$0xff] %vm426, %v446
      %465 = vst.msk [vmem:[#allocation4 + $0x30] sm:$0xff] %vm426, %v448
      %466 = vst.msk [vmem:[#allocation4 + $0x38] sm:$0xff] %vm426, %v450
      %v467 = vpack.c.bf16 %v367, %v364
      %v468 = vpack.c.bf16 %v375, %v372
      %v469 = vpack.c.bf16 %v383, %v380
      %v470 = vpack.c.bf16 %v391, %v388
      %v471 = vld [vmem:[%s2] sm:$0xf]
      %v472 = vld [vmem:[%s2 + $0x4] sm:$0xf]
      %v473 = vld [vmem:[%s3] sm:$0x1]
      %v475 = vlaneseq
      %v476 = vshrl.u32 %v475, 7
      %v477 = vsub.s32 0, %v476
      %v478 = vrot.slane %v473, %v477
      %v482 = vunpack.c.l.b16 %v471
      %v483 = vunpack.c.l.b16 %v472
      %v484 = vpack.c.b16 %v483, %v482
      %vm486 = vcmask 130048
      %v488 = vsel %vm486, %v467, 0
      %v491 = vsel %vm486, %v468, 0
      %v494 = vsel %vm486, %v469, 0
      %v497 = vsel %vm486, %v470, 0
      %499 = vmatprep.subr.bf16.mxu0 0
      %500 = vmatpush1.bf16.msra.mxu0 %v484
      %501 = vmatprep.subr.bf16.mxu0 0
      %502 = vmatpush1.bf16.msra.mxu0 0
      %503 = vmatprep.subr.bf16.mxu0 0
      %504 = vmatpush1.bf16.msra.mxu0 0
      %505 = vmatprep.subr.bf16.mxu0 0
      %506 = vmatpush1.bf16.msra.mxu0 0
      %507 = vmatprep.subr.bf16.mxu0 0
      %508 = vmatpush1.bf16.msra.mxu0 0
      %509 = vmatprep.subr.bf16.mxu0 0
      %510 = vmatpush1.bf16.msra.mxu0 0
      %511 = vmatprep.subr.bf16.mxu0 0
      %512 = vmatpush1.bf16.msra.mxu0 0
      %513 = vmatprep.subr.bf16.mxu0 0
      %514 = vmatpush1.bf16.msra.mxu0 0
      %515 = vmatprep.subr.bf16.mxu0 0
      %516 = vmatpush1.bf16.msra.mxu0 0
      %517 = vmatprep.subr.bf16.mxu0 0
      %518 = vmatpush1.bf16.msra.mxu0 0
      %519 = vmatprep.subr.bf16.mxu0 0
      %520 = vmatpush1.bf16.msra.mxu0 0
      %521 = vmatprep.subr.bf16.mxu0 0
      %522 = vmatpush1.bf16.msra.mxu0 0
      %523 = vmatprep.subr.bf16.mxu0 0
      %524 = vmatpush1.bf16.msra.mxu0 0
      %525 = vmatprep.subr.bf16.mxu0 0
      %526 = vmatpush1.bf16.msra.mxu0 0
      %527 = vmatprep.subr.bf16.mxu0 0
      %528 = vmatpush1.bf16.msra.mxu0 0
      %529 = vmatprep.subr.bf16.mxu0 0
      %530 = vmatpush1.bf16.msra.mxu0 0
      %531 = vmatprep.mubr.bf16.mxu0 0
      %532 = vmatmul.mubr.bf16.gmra.mrb[0].mxu0 %v488
      %v533 = vpop.f32.mrb[0].mxu0
      %v534 = vadd.f32 %v478, %v533
      %v535 = vpop.f32.mrb[0].mxu0
      %v536 = vpop.f32.mrb[0].mxu0
      %v537 = vadd.f32 %v478, %v536
      %v538 = vpop.f32.mrb[0].mxu0
      %539 = vmatprep.mubr.bf16.mxu0 0
      %540 = vmatmul.mubr.bf16.gmra.mrb[0].mxu0 %v491
      %v541 = vpop.f32.mrb[0].mxu0
      %v542 = vadd.f32 %v478, %v541
      %v543 = vpop.f32.mrb[0].mxu0
      %v544 = vpop.f32.mrb[0].mxu0
      %v545 = vadd.f32 %v478, %v544
      %v546 = vpop.f32.mrb[0].mxu0
      %547 = vmatprep.mubr.bf16.mxu0 0
      %548 = vmatmul.mubr.bf16.gmra.mrb[0].mxu0 %v494
      %v549 = vpop.f32.mrb[0].mxu0
      %v550 = vadd.f32 %v478, %v549
      %v551 = vpop.f32.mrb[0].mxu0
      %v552 = vpop.f32.mrb[0].mxu0
      %v553 = vadd.f32 %v478, %v552
      %v554 = vpop.f32.mrb[0].mxu0
      %555 = vmatprep.mubr.bf16.mxu0 0
      %556 = vmatmul.mubr.bf16.gmra.mrb[0].mxu0 %v497
      %v557 = vpop.f32.mrb[0].mxu0
      %v558 = vadd.f32 %v478, %v557
      %v559 = vpop.f32.mrb[0].mxu0
      %v560 = vpop.f32.mrb[0].mxu0
      %v561 = vadd.f32 %v478, %v560
      %v562 = vpop.f32.mrb[0].mxu0
      %563 = vdwg.mxu0
      %v564 = vmin.f32 %v534, 20.0
      %v565 = vmin.f32 %v537, 20.0
      %v566 = vmin.f32 %v542, 20.0
      %v567 = vmin.f32 %v545, 20.0
      %v568 = vmin.f32 %v550, 20.0
      %v569 = vmin.f32 %v553, 20.0
      %v570 = vmin.f32 %v558, 20.0
      %v571 = vmin.f32 %v561, 20.0
      %vm572 = vcmp.gt.f32.partialorder %v534, 20.0
      %vm573 = vcmp.gt.f32.partialorder %v537, 20.0
      %vm574 = vcmp.gt.f32.partialorder %v542, 20.0
      %vm575 = vcmp.gt.f32.partialorder %v545, 20.0
      %vm576 = vcmp.gt.f32.partialorder %v550, 20.0
      %vm577 = vcmp.gt.f32.partialorder %v553, 20.0
      %vm578 = vcmp.gt.f32.partialorder %v558, 20.0
      %vm579 = vcmp.gt.f32.partialorder %v561, 20.0
      %v580 = vmul.f32 %v564, 1.442695
      %v581 = vpow.pop %v580
      %v582 = vmul.f32 %v565, 1.442695
      %v583 = vpow.pop %v582
      %v584 = vmul.f32 %v566, 1.442695
      %v585 = vpow.pop %v584
      %v586 = vmul.f32 %v567, 1.442695
      %v587 = vpow.pop %v586
      %v588 = vmul.f32 %v568, 1.442695
      %v589 = vpow.pop %v588
      %v590 = vmul.f32 %v569, 1.442695
      %v591 = vpow.pop %v590
      %v592 = vmul.f32 %v570, 1.442695
      %v593 = vpow.pop %v592
      %v594 = vmul.f32 %v571, 1.442695
      %v595 = vpow.pop %v594
      %v596 = vadd.f32 %v581, 1.0
      %v597 = vadd.f32 %v583, 1.0
      %v598 = vadd.f32 %v585, 1.0
      %v599 = vadd.f32 %v587, 1.0
      %v600 = vadd.f32 %v589, 1.0
      %v601 = vadd.f32 %v591, 1.0
      %v602 = vadd.f32 %v593, 1.0
      %v603 = vadd.f32 %v595, 1.0
      %v604 = vlog2.pop %v596
      %v605 = vmul.f32 %v604, 0.6931472
      %v606 = vlog2.pop %v597
      %v607 = vmul.f32 %v606, 0.6931472
      %v608 = vlog2.pop %v598
      %v609 = vmul.f32 %v608, 0.6931472
      %v610 = vlog2.pop %v599
      %v611 = vmul.f32 %v610, 0.6931472
      %v612 = vlog2.pop %v600
      %v613 = vmul.f32 %v612, 0.6931472
      %v614 = vlog2.pop %v601
      %v615 = vmul.f32 %v614, 0.6931472
      %v616 = vlog2.pop %v602
      %v617 = vmul.f32 %v616, 0.6931472
      %v618 = vlog2.pop %v603
      %v619 = vmul.f32 %v618, 0.6931472
      %v620 = vsel %vm572, %v534, %v605
      %v621 = vsel %vm573, %v537, %v607
      %v622 = vsel %vm574, %v542, %v609
      %v623 = vsel %vm575, %v545, %v611
      %v624 = vsel %vm576, %v550, %v613
      %v625 = vsel %vm577, %v553, %v615
      %v626 = vsel %vm578, %v558, %v617
      %v627 = vsel %vm579, %v561, %v619
      %628 = vst [vmem:[#allocation2] sm:$0xff] %v620
      %629 = vst [vmem:[#allocation2 + $0x8] sm:$0xff] %v621
      %630 = vst [vmem:[#allocation2 + $0x10] sm:$0xff] %v622
      %631 = vst [vmem:[#allocation2 + $0x18] sm:$0xff] %v623
      %632 = vst [vmem:[#allocation2 + $0x20] sm:$0xff] %v624
      %633 = vst [vmem:[#allocation2 + $0x28] sm:$0xff] %v625
      %634 = vst [vmem:[#allocation2 + $0x30] sm:$0xff] %v626
      %635 = vst [vmem:[#allocation2 + $0x38] sm:$0xff] %v627
      %v636 = vld [vmem:[%s4] sm:$0xff]
      %v637 = vld [vmem:[%s5] sm:$0x1]
      loop: start=0, step=1, limit=8
      $region45: #{vss_block_forward.6} parent=43 // loop_pre_header
        _
      $region46: #{vss_block_forward.6} parent=43 // loop_header
        %s639 = sphi 0, %s643
        %p640 = scmp.ge.s32.totalorder %s639, 8
        %v644 = vphi 0.0, %v1988
      $region47: #{vss_block_forward.6} parent=43 // loop_header_branch
        %642 = sbr.rel (%p640) target = $region51
      $region48: #{vss_block_forward.6} parent=43 // loop_body
        %s645 = smul.u32 %s639, 8
        %s646 = scalar_lea.vmem %s246, %s645
        %v647 = vld [vmem:[%s646] sm:$0xff]
        %s648 = scalar_lea.vmem [#allocation2], %s645
        %v649 = vld [vmem:[%s648] sm:$0xff]
        %s650 = scalar_lea.vmem [#allocation3], %s645
        %v651 = vld [vmem:[%s650] sm:$0xff]
        %s652 = scalar_lea.vmem [#allocation4], %s645
        %v653 = vld [vmem:[%s652] sm:$0xff]
        %v654 = vmul.f32 %v649, %v647
        %v655 = vlaneseq
        %v656 = vshrl.u32 %v655, 7
        %v657 = vsub.s32 0, %v656
        %v658 = vrot.slane %v636, %v657
        %v659 = vmul.f32 %v649, %v658
        %v660 = vmul.f32 %v659, 1.442695
        %v661 = vpow.pop %v660
        %v663 = vcombine.high %v661, %v661
        %v665 = vunpack.c.l.s4 1966171168
        %v666 = vunpack.c.0.s8 %v665
        %v667 = vlaneseq
        %v668 = vshrl.u32 %v667, 7
        %v669 = vsub.s32 %v666, %v668
        %v670 = vrot.slane %v661, %v669
        %v672 = vunpack.c.l.s4 1966171168
        %v673 = vunpack.c.0.s8 %v672
        %v674 = vlaneseq
        %v675 = vshrl.u32 %v674, 7
        %v676 = vsub.s32 %v673, %v675
        %v677 = vrot.slane %v663, %v676
        %v678 = vcombine.high %v670, %v670
        %v679 = vcombine.high %v677, %v677
        %v681 = vunpack.c.l.s4 1966171168
        %v682 = vunpack.c.0.s8 %v681
        %v683 = vlaneseq
        %v684 = vshrl.u32 %v683, 7
        %v685 = vsub.s32 %v682, %v684
        %v686 = vrot.slane %v670, %v685
        %v688 = vunpack.c.l.s4 1966171168
        %v689 = vunpack.c.0.s8 %v688
        %v690 = vlaneseq
        %v691 = vshrl.u32 %v690, 7
        %v692 = vsub.s32 %v689, %v691
        %v693 = vrot.slane %v677, %v692
        %v695 = vunpack.c.l.s4 1966171168
        %v696 = vunpack.c.0.s8 %v695
        %v697 = vlaneseq
        %v698 = vshrl.u32 %v697, 7
        %v699 = vsub.s32 %v696, %v698
        %v700 = vrot.slane %v678, %v699
        %v702 = vunpack.c.l.s4 1966171168
        %v703 = vunpack.c.0.s8 %v702
        %v704 = vlaneseq
        %v705 = vshrl.u32 %v704, 7
        %v706 = vsub.s32 %v703, %v705
        %v707 = vrot.slane %v679, %v706
        %v708 = vcombine.high %v686, %v686
        %v709 = vcombine.high %v693, %v693
        %v710 = vcombine.high %v700, %v700
        %v711 = vcombine.high %v707, %v707
        %720 = vst [vmem:[#allocation5] sm:$0x1] %v686
        %721 = vst [vmem:[#allocation5 + $0x8] sm:$0x1] %v700
        %722 = vst [vmem:[#allocation5 + $0x10] sm:$0x1] %v708
        %723 = vst [vmem:[#allocation5 + $0x18] sm:$0x1] %v710
        %724 = vst [vmem:[#allocation5 + $0x20] sm:$0x1] %v693
        %725 = vst [vmem:[#allocation5 + $0x28] sm:$0x1] %v707
        %726 = vst [vmem:[#allocation5 + $0x30] sm:$0x1] %v709
        %727 = vst [vmem:[#allocation5 + $0x38] sm:$0x1] %v711
        %729 = vset.pattern.permute.xlu0 0
        %730 = vperm.xlu0 %729, %v651
        %v731 = vpop.permute.xlu0 %730
        %733 = vset.pattern.permute.xlu0 8
        %734 = vperm.xlu0 %733, %v651
        %v735 = vpop.permute.xlu0 %734
        %737 = vset.pattern.permute.xlu0 16
        %738 = vperm.xlu0 %737, %v651
        %v739 = vpop.permute.xlu0 %738
        %741 = vset.pattern.permute.xlu0 24
        %742 = vperm.xlu0 %741, %v651
        %v743 = vpop.permute.xlu0 %742
        %v745 = vsel %vm426, %v731, %v735
        %vm746 = vcmask 523264
        %v747 = vsel %vm746, %v745, %v739
        %vm748 = vcmask 785408
        %v749 = vsel %vm748, %v747, %v743
        %v750 = vmul.f32 %v749, %v654
        %v752 = vcombine.high %v750, %v750
        %v754 = vunpack.c.l.s4 1966171168
        %v755 = vunpack.c.0.s8 %v754
        %v756 = vlaneseq
        %v757 = vshrl.u32 %v756, 7
        %v758 = vsub.s32 %v755, %v757
        %v759 = vrot.slane %v750, %v758
        %v761 = vunpack.c.l.s4 1966171168
        %v762 = vunpack.c.0.s8 %v761
        %v763 = vlaneseq
        %v764 = vshrl.u32 %v763, 7
        %v765 = vsub.s32 %v762, %v764
        %v766 = vrot.slane %v752, %v765
        %v767 = vcombine.high %v759, %v759
        %v768 = vcombine.high %v766, %v766
        %v770 = vunpack.c.l.s4 1966171168
        %v771 = vunpack.c.0.s8 %v770
        %v772 = vlaneseq
        %v773 = vshrl.u32 %v772, 7
        %v774 = vsub.s32 %v771, %v773
        %v775 = vrot.slane %v759, %v774
        %v777 = vunpack.c.l.s4 1966171168
        %v778 = vunpack.c.0.s8 %v777
        %v779 = vlaneseq
        %v780 = vshrl.u32 %v779, 7
        %v781 = vsub.s32 %v778, %v780
        %v782 = vrot.slane %v766, %v781
        %v784 = vunpack.c.l.s4 1966171168
        %v785 = vunpack.c.0.s8 %v784
        %v786 = vlaneseq
        %v787 = vshrl.u32 %v786, 7
        %v788 = vsub.s32 %v785, %v787
        %v789 = vrot.slane %v767, %v788
        %v791 = vunpack.c.l.s4 1966171168
        %v792 = vunpack.c.0.s8 %v791
        %v793 = vlaneseq
        %v794 = vshrl.u32 %v793, 7
        %v795 = vsub.s32 %v792, %v794
        %v796 = vrot.slane %v768, %v795
        %v797 = vcombine.high %v775, %v775
        %v798 = vcombine.high %v782, %v782
        %v799 = vcombine.high %v789, %v789
        %v800 = vcombine.high %v796, %v796
        %809 = vst [vmem:[#allocation6] sm:$0x1] %v775
        %810 = vst [vmem:[#allocation6 + $0x8] sm:$0x1] %v789
        %811 = vst [vmem:[#allocation6 + $0x10] sm:$0x1] %v797
        %812 = vst [vmem:[#allocation6 + $0x18] sm:$0x1] %v799
        %813 = vst [vmem:[#allocation6 + $0x20] sm:$0x1] %v782
        %814 = vst [vmem:[#allocation6 + $0x28] sm:$0x1] %v796
        %815 = vst [vmem:[#allocation6 + $0x30] sm:$0x1] %v798
        %816 = vst [vmem:[#allocation6 + $0x38] sm:$0x1] %v800
        %v817 = vlaneseq
        %v818 = vshrl.u32 %v817, 7
        %v819 = vsub.s32 1, %v818
        %v820 = vrot.slane %v636, %v819
        %v821 = vmul.f32 %v649, %v820
        %v822 = vmul.f32 %v821, 1.442695
        %v823 = vpow.pop %v822
        %v825 = vcombine.high %v823, %v823
        %v827 = vunpack.c.l.s4 1966171168
        %v828 = vunpack.c.0.s8 %v827
        %v829 = vlaneseq
        %v830 = vshrl.u32 %v829, 7
        %v831 = vsub.s32 %v828, %v830
        %v832 = vrot.slane %v823, %v831
        %v834 = vunpack.c.l.s4 1966171168
        %v835 = vunpack.c.0.s8 %v834
        %v836 = vlaneseq
        %v837 = vshrl.u32 %v836, 7
        %v838 = vsub.s32 %v835, %v837
        %v839 = vrot.slane %v825, %v838
        %v840 = vcombine.high %v832, %v832
        %v841 = vcombine.high %v839, %v839
        %v843 = vunpack.c.l.s4 1966171168
        %v844 = vunpack.c.0.s8 %v843
        %v845 = vlaneseq
        %v846 = vshrl.u32 %v845, 7
        %v847 = vsub.s32 %v844, %v846
        %v848 = vrot.slane %v832, %v847
        %v850 = vunpack.c.l.s4 1966171168
        %v851 = vunpack.c.0.s8 %v850
        %v852 = vlaneseq
        %v853 = vshrl.u32 %v852, 7
        %v854 = vsub.s32 %v851, %v853
        %v855 = vrot.slane %v839, %v854
        %v857 = vunpack.c.l.s4 1966171168
        %v858 = vunpack.c.0.s8 %v857
        %v859 = vlaneseq
        %v860 = vshrl.u32 %v859, 7
        %v861 = vsub.s32 %v858, %v860
        %v862 = vrot.slane %v840, %v861
        %v864 = vunpack.c.l.s4 1966171168
        %v865 = vunpack.c.0.s8 %v864
        %v866 = vlaneseq
        %v867 = vshrl.u32 %v866, 7
        %v868 = vsub.s32 %v865, %v867
        %v869 = vrot.slane %v841, %v868
        %v870 = vcombine.high %v848, %v848
        %v871 = vcombine.high %v855, %v855
        %v872 = vcombine.high %v862, %v862
        %v873 = vcombine.high %v869, %v869
        %882 = vst [vmem:[#allocation5 + $0x1] sm:$0x1] %v848
        %883 = vst [vmem:[#allocation5 + $0x9] sm:$0x1] %v862
        %884 = vst [vmem:[#allocation5 + $0x11] sm:$0x1] %v870
        %885 = vst [vmem:[#allocation5 + $0x19] sm:$0x1] %v872
        %886 = vst [vmem:[#allocation5 + $0x21] sm:$0x1] %v855
        %887 = vst [vmem:[#allocation5 + $0x29] sm:$0x1] %v869
        %888 = vst [vmem:[#allocation5 + $0x31] sm:$0x1] %v871
        %889 = vst [vmem:[#allocation5 + $0x39] sm:$0x1] %v873
        %890 = vset.pattern.permute.xlu0 1
        %891 = vperm.xlu0 %890, %v651
        %v892 = vpop.permute.xlu0 %891
        %894 = vset.pattern.permute.xlu0 9
        %895 = vperm.xlu0 %894, %v651
        %v896 = vpop.permute.xlu0 %895
        %898 = vset.pattern.permute.xlu0 17
        %899 = vperm.xlu0 %898, %v651
        %v900 = vpop.permute.xlu0 %899
        %902 = vset.pattern.permute.xlu0 25
        %903 = vperm.xlu0 %902, %v651
        %v904 = vpop.permute.xlu0 %903
        %v906 = vsel %vm426, %v892, %v896
        %v907 = vsel %vm746, %v906, %v900
        %v908 = vsel %vm748, %v907, %v904
        %v909 = vmul.f32 %v908, %v654
        %v911 = vcombine.high %v909, %v909
        %v913 = vunpack.c.l.s4 1966171168
        %v914 = vunpack.c.0.s8 %v913
        %v915 = vlaneseq
        %v916 = vshrl.u32 %v915, 7
        %v917 = vsub.s32 %v914, %v916
        %v918 = vrot.slane %v909, %v917
        %v920 = vunpack.c.l.s4 1966171168
        %v921 = vunpack.c.0.s8 %v920
        %v922 = vlaneseq
        %v923 = vshrl.u32 %v922, 7
        %v924 = vsub.s32 %v921, %v923
        %v925 = vrot.slane %v911, %v924
        %v926 = vcombine.high %v918, %v918
        %v927 = vcombine.high %v925, %v925
        %v929 = vunpack.c.l.s4 1966171168
        %v930 = vunpack.c.0.s8 %v929
        %v931 = vlaneseq
        %v932 = vshrl.u32 %v931, 7
        %v933 = vsub.s32 %v930, %v932
        %v934 = vrot.slane %v918, %v933
        %v936 = vunpack.c.l.s4 1966171168
        %v937 = vunpack.c.0.s8 %v936
        %v938 = vlaneseq
        %v939 = vshrl.u32 %v938, 7
        %v940 = vsub.s32 %v937, %v939
        %v941 = vrot.slane %v925, %v940
        %v943 = vunpack.c.l.s4 1966171168
        %v944 = vunpack.c.0.s8 %v943
        %v945 = vlaneseq
        %v946 = vshrl.u32 %v945, 7
        %v947 = vsub.s32 %v944, %v946
        %v948 = vrot.slane %v926, %v947
        %v950 = vunpack.c.l.s4 1966171168
        %v951 = vunpack.c.0.s8 %v950
        %v952 = vlaneseq
        %v953 = vshrl.u32 %v952, 7
        %v954 = vsub.s32 %v951, %v953
        %v955 = vrot.slane %v927, %v954
        %v956 = vcombine.high %v934, %v934
        %v957 = vcombine.high %v941, %v941
        %v958 = vcombine.high %v948, %v948
        %v959 = vcombine.high %v955, %v955
        %968 = vst [vmem:[#allocation6 + $0x1] sm:$0x1] %v934
        %969 = vst [vmem:[#allocation6 + $0x9] sm:$0x1] %v948
        %970 = vst [vmem:[#allocation6 + $0x11] sm:$0x1] %v956
        %971 = vst [vmem:[#allocation6 + $0x19] sm:$0x1] %v958
        %972 = vst [vmem:[#allocation6 + $0x21] sm:$0x1] %v941
        %973 = vst [vmem:[#allocation6 + $0x29] sm:$0x1] %v955
        %974 = vst [vmem:[#allocation6 + $0x31] sm:$0x1] %v957
        %975 = vst [vmem:[#allocation6 + $0x39] sm:$0x1] %v959
        %v976 = vlaneseq
        %v977 = vshrl.u32 %v976, 7
        %v978 = vsub.s32 2, %v977
        %v979 = vrot.slane %v636, %v978
        %v980 = vmul.f32 %v649, %v979
        %v981 = vmul.f32 %v980, 1.442695
        %v982 = vpow.pop %v981
        %v984 = vcombine.high %v982, %v982
        %v986 = vunpack.c.l.s4 1966171168
        %v987 = vunpack.c.0.s8 %v986
        %v988 = vlaneseq
        %v989 = vshrl.u32 %v988, 7
        %v990 = vsub.s32 %v987, %v989
        %v991 = vrot.slane %v982, %v990
        %v993 = vunpack.c.l.s4 1966171168
        %v994 = vunpack.c.0.s8 %v993
        %v995 = vlaneseq
        %v996 = vshrl.u32 %v995, 7
        %v997 = vsub.s32 %v994, %v996
        %v998 = vrot.slane %v984, %v997
        %v999 = vcombine.high %v991, %v991
        %v1000 = vcombine.high %v998, %v998
        %v1002 = vunpack.c.l.s4 1966171168
        %v1003 = vunpack.c.0.s8 %v1002
        %v1004 = vlaneseq
        %v1005 = vshrl.u32 %v1004, 7
        %v1006 = vsub.s32 %v1003, %v1005
        %v1007 = vrot.slane %v991, %v1006
        %v1009 = vunpack.c.l.s4 1966171168
        %v1010 = vunpack.c.0.s8 %v1009
        %v1011 = vlaneseq
        %v1012 = vshrl.u32 %v1011, 7
        %v1013 = vsub.s32 %v1010, %v1012
        %v1014 = vrot.slane %v998, %v1013
        %v1016 = vunpack.c.l.s4 1966171168
        %v1017 = vunpack.c.0.s8 %v1016
        %v1018 = vlaneseq
        %v1019 = vshrl.u32 %v1018, 7
        %v1020 = vsub.s32 %v1017, %v1019
        %v1021 = vrot.slane %v999, %v1020
        %v1023 = vunpack.c.l.s4 1966171168
        %v1024 = vunpack.c.0.s8 %v1023
        %v1025 = vlaneseq
        %v1026 = vshrl.u32 %v1025, 7
        %v1027 = vsub.s32 %v1024, %v1026
        %v1028 = vrot.slane %v1000, %v1027
        %v1029 = vcombine.high %v1007, %v1007
        %v1030 = vcombine.high %v1014, %v1014
        %v1031 = vcombine.high %v1021, %v1021
        %v1032 = vcombine.high %v1028, %v1028
        %1041 = vst [vmem:[#allocation5 + $0x2] sm:$0x1] %v1007
        %1042 = vst [vmem:[#allocation5 + $0xa] sm:$0x1] %v1021
        %1043 = vst [vmem:[#allocation5 + $0x12] sm:$0x1] %v1029
        %1044 = vst [vmem:[#allocation5 + $0x1a] sm:$0x1] %v1031
        %1045 = vst [vmem:[#allocation5 + $0x22] sm:$0x1] %v1014
        %1046 = vst [vmem:[#allocation5 + $0x2a] sm:$0x1] %v1028
        %1047 = vst [vmem:[#allocation5 + $0x32] sm:$0x1] %v1030
        %1048 = vst [vmem:[#allocation5 + $0x3a] sm:$0x1] %v1032
        %1049 = vset.pattern.permute.xlu0 2
        %1050 = vperm.xlu0 %1049, %v651
        %v1051 = vpop.permute.xlu0 %1050
        %1053 = vset.pattern.permute.xlu0 10
        %1054 = vperm.xlu0 %1053, %v651
        %v1055 = vpop.permute.xlu0 %1054
        %1057 = vset.pattern.permute.xlu0 18
        %1058 = vperm.xlu0 %1057, %v651
        %v1059 = vpop.permute.xlu0 %1058
        %1061 = vset.pattern.permute.xlu0 26
        %1062 = vperm.xlu0 %1061, %v651
        %v1063 = vpop.permute.xlu0 %1062
        %v1065 = vsel %vm426, %v1051, %v1055
        %v1066 = vsel %vm746, %v1065, %v1059
        %v1067 = vsel %vm748, %v1066, %v1063
        %v1068 = vmul.f32 %v1067, %v654
        %v1070 = vcombine.high %v1068, %v1068
        %v1072 = vunpack.c.l.s4 1966171168
        %v1073 = vunpack.c.0.s8 %v1072
        %v1074 = vlaneseq
        %v1075 = vshrl.u32 %v1074, 7
        %v1076 = vsub.s32 %v1073, %v1075
        %v1077 = vrot.slane %v1068, %v1076
        %v1079 = vunpack.c.l.s4 1966171168
        %v1080 = vunpack.c.0.s8 %v1079
        %v1081 = vlaneseq
        %v1082 = vshrl.u32 %v1081, 7
        %v1083 = vsub.s32 %v1080, %v1082
        %v1084 = vrot.slane %v1070, %v1083
        %v1085 = vcombine.high %v1077, %v1077
        %v1086 = vcombine.high %v1084, %v1084
        %v1088 = vunpack.c.l.s4 1966171168
        %v1089 = vunpack.c.0.s8 %v1088
        %v1090 = vlaneseq
        %v1091 = vshrl.u32 %v1090, 7
        %v1092 = vsub.s32 %v1089, %v1091
        %v1093 = vrot.slane %v1077, %v1092
        %v1095 = vunpack.c.l.s4 1966171168
        %v1096 = vunpack.c.0.s8 %v1095
        %v1097 = vlaneseq
        %v1098 = vshrl.u32 %v1097, 7
        %v1099 = vsub.s32 %v1096, %v1098
        %v1100 = vrot.slane %v1084, %v1099
        %v1102 = vunpack.c.l.s4 1966171168
        %v1103 = vunpack.c.0.s8 %v1102
        %v1104 = vlaneseq
        %v1105 = vshrl.u32 %v1104, 7
        %v1106 = vsub.s32 %v1103, %v1105
        %v1107 = vrot.slane %v1085, %v1106
        %v1109 = vunpack.c.l.s4 1966171168
        %v1110 = vunpack.c.0.s8 %v1109
        %v1111 = vlaneseq
        %v1112 = vshrl.u32 %v1111, 7
        %v1113 = vsub.s32 %v1110, %v1112
        %v1114 = vrot.slane %v1086, %v1113
        %v1115 = vcombine.high %v1093, %v1093
        %v1116 = vcombine.high %v1100, %v1100
        %v1117 = vcombine.high %v1107, %v1107
        %v1118 = vcombine.high %v1114, %v1114
        %1127 = vst [vmem:[#allocation6 + $0x2] sm:$0x1] %v1093
        %1128 = vst [vmem:[#allocation6 + $0xa] sm:$0x1] %v1107
        %1129 = vst [vmem:[#allocation6 + $0x12] sm:$0x1] %v1115
        %1130 = vst [vmem:[#allocation6 + $0x1a] sm:$0x1] %v1117
        %1131 = vst [vmem:[#allocation6 + $0x22] sm:$0x1] %v1100
        %1132 = vst [vmem:[#allocation6 + $0x2a] sm:$0x1] %v1114
        %1133 = vst [vmem:[#allocation6 + $0x32] sm:$0x1] %v1116
        %1134 = vst [vmem:[#allocation6 + $0x3a] sm:$0x1] %v1118
        %v1135 = vlaneseq
        %v1136 = vshrl.u32 %v1135, 7
        %v1137 = vsub.s32 3, %v1136
        %v1138 = vrot.slane %v636, %v1137
        %v1139 = vmul.f32 %v649, %v1138
        %v1140 = vmul.f32 %v1139, 1.442695
        %v1141 = vpow.pop %v1140
        %v1143 = vcombine.high %v1141, %v1141
        %v1145 = vunpack.c.l.s4 1966171168
        %v1146 = vunpack.c.0.s8 %v1145
        %v1147 = vlaneseq
        %v1148 = vshrl.u32 %v1147, 7
        %v1149 = vsub.s32 %v1146, %v1148
        %v1150 = vrot.slane %v1141, %v1149
        %v1152 = vunpack.c.l.s4 1966171168
        %v1153 = vunpack.c.0.s8 %v1152
        %v1154 = vlaneseq
        %v1155 = vshrl.u32 %v1154, 7
        %v1156 = vsub.s32 %v1153, %v1155
        %v1157 = vrot.slane %v1143, %v1156
        %v1158 = vcombine.high %v1150, %v1150
        %v1159 = vcombine.high %v1157, %v1157
        %v1161 = vunpack.c.l.s4 1966171168
        %v1162 = vunpack.c.0.s8 %v1161
        %v1163 = vlaneseq
        %v1164 = vshrl.u32 %v1163, 7
        %v1165 = vsub.s32 %v1162, %v1164
        %v1166 = vrot.slane %v1150, %v1165
        %v1168 = vunpack.c.l.s4 1966171168
        %v1169 = vunpack.c.0.s8 %v1168
        %v1170 = vlaneseq
        %v1171 = vshrl.u32 %v1170, 7
        %v1172 = vsub.s32 %v1169, %v1171
        %v1173 = vrot.slane %v1157, %v1172
        %v1175 = vunpack.c.l.s4 1966171168
        %v1176 = vunpack.c.0.s8 %v1175
        %v1177 = vlaneseq
        %v1178 = vshrl.u32 %v1177, 7
        %v1179 = vsub.s32 %v1176, %v1178
        %v1180 = vrot.slane %v1158, %v1179
        %v1182 = vunpack.c.l.s4 1966171168
        %v1183 = vunpack.c.0.s8 %v1182
        %v1184 = vlaneseq
        %v1185 = vshrl.u32 %v1184, 7
        %v1186 = vsub.s32 %v1183, %v1185
        %v1187 = vrot.slane %v1159, %v1186
        %v1188 = vcombine.high %v1166, %v1166
        %v1189 = vcombine.high %v1173, %v1173
        %v1190 = vcombine.high %v1180, %v1180
        %v1191 = vcombine.high %v1187, %v1187
        %1200 = vst [vmem:[#allocation5 + $0x3] sm:$0x1] %v1166
        %1201 = vst [vmem:[#allocation5 + $0xb] sm:$0x1] %v1180
        %1202 = vst [vmem:[#allocation5 + $0x13] sm:$0x1] %v1188
        %1203 = vst [vmem:[#allocation5 + $0x1b] sm:$0x1] %v1190
        %1204 = vst [vmem:[#allocation5 + $0x23] sm:$0x1] %v1173
        %1205 = vst [vmem:[#allocation5 + $0x2b] sm:$0x1] %v1187
        %1206 = vst [vmem:[#allocation5 + $0x33] sm:$0x1] %v1189
        %1207 = vst [vmem:[#allocation5 + $0x3b] sm:$0x1] %v1191
        %1208 = vset.pattern.permute.xlu0 3
        %1209 = vperm.xlu0 %1208, %v651
        %v1210 = vpop.permute.xlu0 %1209
        %1212 = vset.pattern.permute.xlu0 11
        %1213 = vperm.xlu0 %1212, %v651
        %v1214 = vpop.permute.xlu0 %1213
        %1216 = vset.pattern.permute.xlu0 19
        %1217 = vperm.xlu0 %1216, %v651
        %v1218 = vpop.permute.xlu0 %1217
        %1220 = vset.pattern.permute.xlu0 27
        %1221 = vperm.xlu0 %1220, %v651
        %v1222 = vpop.permute.xlu0 %1221
        %v1224 = vsel %vm426, %v1210, %v1214
        %v1225 = vsel %vm746, %v1224, %v1218
        %v1226 = vsel %vm748, %v1225, %v1222
        %v1227 = vmul.f32 %v1226, %v654
        %v1229 = vcombine.high %v1227, %v1227
        %v1231 = vunpack.c.l.s4 1966171168
        %v1232 = vunpack.c.0.s8 %v1231
        %v1233 = vlaneseq
        %v1234 = vshrl.u32 %v1233, 7
        %v1235 = vsub.s32 %v1232, %v1234
        %v1236 = vrot.slane %v1227, %v1235
        %v1238 = vunpack.c.l.s4 1966171168
        %v1239 = vunpack.c.0.s8 %v1238
        %v1240 = vlaneseq
        %v1241 = vshrl.u32 %v1240, 7
        %v1242 = vsub.s32 %v1239, %v1241
        %v1243 = vrot.slane %v1229, %v1242
        %v1244 = vcombine.high %v1236, %v1236
        %v1245 = vcombine.high %v1243, %v1243
        %v1247 = vunpack.c.l.s4 1966171168
        %v1248 = vunpack.c.0.s8 %v1247
        %v1249 = vlaneseq
        %v1250 = vshrl.u32 %v1249, 7
        %v1251 = vsub.s32 %v1248, %v1250
        %v1252 = vrot.slane %v1236, %v1251
        %v1254 = vunpack.c.l.s4 1966171168
        %v1255 = vunpack.c.0.s8 %v1254
        %v1256 = vlaneseq
        %v1257 = vshrl.u32 %v1256, 7
        %v1258 = vsub.s32 %v1255, %v1257
        %v1259 = vrot.slane %v1243, %v1258
        %v1261 = vunpack.c.l.s4 1966171168
        %v1262 = vunpack.c.0.s8 %v1261
        %v1263 = vlaneseq
        %v1264 = vshrl.u32 %v1263, 7
        %v1265 = vsub.s32 %v1262, %v1264
        %v1266 = vrot.slane %v1244, %v1265
        %v1268 = vunpack.c.l.s4 1966171168
        %v1269 = vunpack.c.0.s8 %v1268
        %v1270 = vlaneseq
        %v1271 = vshrl.u32 %v1270, 7
        %v1272 = vsub.s32 %v1269, %v1271
        %v1273 = vrot.slane %v1245, %v1272
        %v1274 = vcombine.high %v1252, %v1252
        %v1275 = vcombine.high %v1259, %v1259
        %v1276 = vcombine.high %v1266, %v1266
        %v1277 = vcombine.high %v1273, %v1273
        %1286 = vst [vmem:[#allocation6 + $0x3] sm:$0x1] %v1252
        %1287 = vst [vmem:[#allocation6 + $0xb] sm:$0x1] %v1266
        %1288 = vst [vmem:[#allocation6 + $0x13] sm:$0x1] %v1274
        %1289 = vst [vmem:[#allocation6 + $0x1b] sm:$0x1] %v1276
        %1290 = vst [vmem:[#allocation6 + $0x23] sm:$0x1] %v1259
        %1291 = vst [vmem:[#allocation6 + $0x2b] sm:$0x1] %v1273
        %1292 = vst [vmem:[#allocation6 + $0x33] sm:$0x1] %v1275
        %1293 = vst [vmem:[#allocation6 + $0x3b] sm:$0x1] %v1277
        %v1294 = vlaneseq
        %v1295 = vshrl.u32 %v1294, 7
        %v1296 = vsub.s32 4, %v1295
        %v1297 = vrot.slane %v636, %v1296
        %v1298 = vmul.f32 %v649, %v1297
        %v1299 = vmul.f32 %v1298, 1.442695
        %v1300 = vpow.pop %v1299
        %v1302 = vcombine.high %v1300, %v1300
        %v1304 = vunpack.c.l.s4 1966171168
        %v1305 = vunpack.c.0.s8 %v1304
        %v1306 = vlaneseq
        %v1307 = vshrl.u32 %v1306, 7
        %v1308 = vsub.s32 %v1305, %v1307
        %v1309 = vrot.slane %v1300, %v1308
        %v1311 = vunpack.c.l.s4 1966171168
        %v1312 = vunpack.c.0.s8 %v1311
        %v1313 = vlaneseq
        %v1314 = vshrl.u32 %v1313, 7
        %v1315 = vsub.s32 %v1312, %v1314
        %v1316 = vrot.slane %v1302, %v1315
        %v1317 = vcombine.high %v1309, %v1309
        %v1318 = vcombine.high %v1316, %v1316
        %v1320 = vunpack.c.l.s4 1966171168
        %v1321 = vunpack.c.0.s8 %v1320
        %v1322 = vlaneseq
        %v1323 = vshrl.u32 %v1322, 7
        %v1324 = vsub.s32 %v1321, %v1323
        %v1325 = vrot.slane %v1309, %v1324
        %v1327 = vunpack.c.l.s4 1966171168
        %v1328 = vunpack.c.0.s8 %v1327
        %v1329 = vlaneseq
        %v1330 = vshrl.u32 %v1329, 7
        %v1331 = vsub.s32 %v1328, %v1330
        %v1332 = vrot.slane %v1316, %v1331
        %v1334 = vunpack.c.l.s4 1966171168
        %v1335 = vunpack.c.0.s8 %v1334
        %v1336 = vlaneseq
        %v1337 = vshrl.u32 %v1336, 7
        %v1338 = vsub.s32 %v1335, %v1337
        %v1339 = vrot.slane %v1317, %v1338
        %v1341 = vunpack.c.l.s4 1966171168
        %v1342 = vunpack.c.0.s8 %v1341
        %v1343 = vlaneseq
        %v1344 = vshrl.u32 %v1343, 7
        %v1345 = vsub.s32 %v1342, %v1344
        %v1346 = vrot.slane %v1318, %v1345
        %v1347 = vcombine.high %v1325, %v1325
        %v1348 = vcombine.high %v1332, %v1332
        %v1349 = vcombine.high %v1339, %v1339
        %v1350 = vcombine.high %v1346, %v1346
        %1359 = vst [vmem:[#allocation5 + $0x4] sm:$0x1] %v1325
        %1360 = vst [vmem:[#allocation5 + $0xc] sm:$0x1] %v1339
        %1361 = vst [vmem:[#allocation5 + $0x14] sm:$0x1] %v1347
        %1362 = vst [vmem:[#allocation5 + $0x1c] sm:$0x1] %v1349
        %1363 = vst [vmem:[#allocation5 + $0x24] sm:$0x1] %v1332
        %1364 = vst [vmem:[#allocation5 + $0x2c] sm:$0x1] %v1346
        %1365 = vst [vmem:[#allocation5 + $0x34] sm:$0x1] %v1348
        %1366 = vst [vmem:[#allocation5 + $0x3c] sm:$0x1] %v1350
        %1367 = vset.pattern.permute.xlu0 4
        %1368 = vperm.xlu0 %1367, %v651
        %v1369 = vpop.permute.xlu0 %1368
        %1371 = vset.pattern.permute.xlu0 12
        %1372 = vperm.xlu0 %1371, %v651
        %v1373 = vpop.permute.xlu0 %1372
        %1375 = vset.pattern.permute.xlu0 20
        %1376 = vperm.xlu0 %1375, %v651
        %v1377 = vpop.permute.xlu0 %1376
        %1379 = vset.pattern.permute.xlu0 28
        %1380 = vperm.xlu0 %1379, %v651
        %v1381 = vpop.permute.xlu0 %1380
        %v1383 = vsel %vm426, %v1369, %v1373
        %v1384 = vsel %vm746, %v1383, %v1377
        %v1385 = vsel %vm748, %v1384, %v1381
        %v1386 = vmul.f32 %v1385, %v654
        %v1388 = vcombine.high %v1386, %v1386
        %v1390 = vunpack.c.l.s4 1966171168
        %v1391 = vunpack.c.0.s8 %v1390
        %v1392 = vlaneseq
        %v1393 = vshrl.u32 %v1392, 7
        %v1394 = vsub.s32 %v1391, %v1393
        %v1395 = vrot.slane %v1386, %v1394
        %v1397 = vunpack.c.l.s4 1966171168
        %v1398 = vunpack.c.0.s8 %v1397
        %v1399 = vlaneseq
        %v1400 = vshrl.u32 %v1399, 7
        %v1401 = vsub.s32 %v1398, %v1400
        %v1402 = vrot.slane %v1388, %v1401
        %v1403 = vcombine.high %v1395, %v1395
        %v1404 = vcombine.high %v1402, %v1402
        %v1406 = vunpack.c.l.s4 1966171168
        %v1407 = vunpack.c.0.s8 %v1406
        %v1408 = vlaneseq
        %v1409 = vshrl.u32 %v1408, 7
        %v1410 = vsub.s32 %v1407, %v1409
        %v1411 = vrot.slane %v1395, %v1410
        %v1413 = vunpack.c.l.s4 1966171168
        %v1414 = vunpack.c.0.s8 %v1413
        %v1415 = vlaneseq
        %v1416 = vshrl.u32 %v1415, 7
        %v1417 = vsub.s32 %v1414, %v1416
        %v1418 = vrot.slane %v1402, %v1417
        %v1420 = vunpack.c.l.s4 1966171168
        %v1421 = vunpack.c.0.s8 %v1420
        %v1422 = vlaneseq
        %v1423 = vshrl.u32 %v1422, 7
        %v1424 = vsub.s32 %v1421, %v1423
        %v1425 = vrot.slane %v1403, %v1424
        %v1427 = vunpack.c.l.s4 1966171168
        %v1428 = vunpack.c.0.s8 %v1427
        %v1429 = vlaneseq
        %v1430 = vshrl.u32 %v1429, 7
        %v1431 = vsub.s32 %v1428, %v1430
        %v1432 = vrot.slane %v1404, %v1431
        %v1433 = vcombine.high %v1411, %v1411
        %v1434 = vcombine.high %v1418, %v1418
        %v1435 = vcombine.high %v1425, %v1425
        %v1436 = vcombine.high %v1432, %v1432
        %1445 = vst [vmem:[#allocation6 + $0x4] sm:$0x1] %v1411
        %1446 = vst [vmem:[#allocation6 + $0xc] sm:$0x1] %v1425
        %1447 = vst [vmem:[#allocation6 + $0x14] sm:$0x1] %v1433
        %1448 = vst [vmem:[#allocation6 + $0x1c] sm:$0x1] %v1435
        %1449 = vst [vmem:[#allocation6 + $0x24] sm:$0x1] %v1418
        %1450 = vst [vmem:[#allocation6 + $0x2c] sm:$0x1] %v1432
        %1451 = vst [vmem:[#allocation6 + $0x34] sm:$0x1] %v1434
        %1452 = vst [vmem:[#allocation6 + $0x3c] sm:$0x1] %v1436
        %v1453 = vlaneseq
        %v1454 = vshrl.u32 %v1453, 7
        %v1455 = vsub.s32 5, %v1454
        %v1456 = vrot.slane %v636, %v1455
        %v1457 = vmul.f32 %v649, %v1456
        %v1458 = vmul.f32 %v1457, 1.442695
        %v1459 = vpow.pop %v1458
        %v1461 = vcombine.high %v1459, %v1459
        %v1463 = vunpack.c.l.s4 1966171168
        %v1464 = vunpack.c.0.s8 %v1463
        %v1465 = vlaneseq
        %v1466 = vshrl.u32 %v1465, 7
        %v1467 = vsub.s32 %v1464, %v1466
        %v1468 = vrot.slane %v1459, %v1467
        %v1470 = vunpack.c.l.s4 1966171168
        %v1471 = vunpack.c.0.s8 %v1470
        %v1472 = vlaneseq
        %v1473 = vshrl.u32 %v1472, 7
        %v1474 = vsub.s32 %v1471, %v1473
        %v1475 = vrot.slane %v1461, %v1474
        %v1476 = vcombine.high %v1468, %v1468
        %v1477 = vcombine.high %v1475, %v1475
        %v1479 = vunpack.c.l.s4 1966171168
        %v1480 = vunpack.c.0.s8 %v1479
        %v1481 = vlaneseq
        %v1482 = vshrl.u32 %v1481, 7
        %v1483 = vsub.s32 %v1480, %v1482
        %v1484 = vrot.slane %v1468, %v1483
        %v1486 = vunpack.c.l.s4 1966171168
        %v1487 = vunpack.c.0.s8 %v1486
        %v1488 = vlaneseq
        %v1489 = vshrl.u32 %v1488, 7
        %v1490 = vsub.s32 %v1487, %v1489
        %v1491 = vrot.slane %v1475, %v1490
        %v1493 = vunpack.c.l.s4 1966171168
        %v1494 = vunpack.c.0.s8 %v1493
        %v1495 = vlaneseq
        %v1496 = vshrl.u32 %v1495, 7
        %v1497 = vsub.s32 %v1494, %v1496
        %v1498 = vrot.slane %v1476, %v1497
        %v1500 = vunpack.c.l.s4 1966171168
        %v1501 = vunpack.c.0.s8 %v1500
        %v1502 = vlaneseq
        %v1503 = vshrl.u32 %v1502, 7
        %v1504 = vsub.s32 %v1501, %v1503
        %v1505 = vrot.slane %v1477, %v1504
        %v1506 = vcombine.high %v1484, %v1484
        %v1507 = vcombine.high %v1491, %v1491
        %v1508 = vcombine.high %v1498, %v1498
        %v1509 = vcombine.high %v1505, %v1505
        %1518 = vst [vmem:[#allocation5 + $0x5] sm:$0x1] %v1484
        %1519 = vst [vmem:[#allocation5 + $0xd] sm:$0x1] %v1498
        %1520 = vst [vmem:[#allocation5 + $0x15] sm:$0x1] %v1506
        %1521 = vst [vmem:[#allocation5 + $0x1d] sm:$0x1] %v1508
        %1522 = vst [vmem:[#allocation5 + $0x25] sm:$0x1] %v1491
        %1523 = vst [vmem:[#allocation5 + $0x2d] sm:$0x1] %v1505
        %1524 = vst [vmem:[#allocation5 + $0x35] sm:$0x1] %v1507
        %1525 = vst [vmem:[#allocation5 + $0x3d] sm:$0x1] %v1509
        %1526 = vset.pattern.permute.xlu0 5
        %1527 = vperm.xlu0 %1526, %v651
        %v1528 = vpop.permute.xlu0 %1527
        %1530 = vset.pattern.permute.xlu0 13
        %1531 = vperm.xlu0 %1530, %v651
        %v1532 = vpop.permute.xlu0 %1531
        %1534 = vset.pattern.permute.xlu0 21
        %1535 = vperm.xlu0 %1534, %v651
        %v1536 = vpop.permute.xlu0 %1535
        %1538 = vset.pattern.permute.xlu0 29
        %1539 = vperm.xlu0 %1538, %v651
        %v1540 = vpop.permute.xlu0 %1539
        %v1542 = vsel %vm426, %v1528, %v1532
        %v1543 = vsel %vm746, %v1542, %v1536
        %v1544 = vsel %vm748, %v1543, %v1540
        %v1545 = vmul.f32 %v1544, %v654
        %v1547 = vcombine.high %v1545, %v1545
        %v1549 = vunpack.c.l.s4 1966171168
        %v1550 = vunpack.c.0.s8 %v1549
        %v1551 = vlaneseq
        %v1552 = vshrl.u32 %v1551, 7
        %v1553 = vsub.s32 %v1550, %v1552
        %v1554 = vrot.slane %v1545, %v1553
        %v1556 = vunpack.c.l.s4 1966171168
        %v1557 = vunpack.c.0.s8 %v1556
        %v1558 = vlaneseq
        %v1559 = vshrl.u32 %v1558, 7
        %v1560 = vsub.s32 %v1557, %v1559
        %v1561 = vrot.slane %v1547, %v1560
        %v1562 = vcombine.high %v1554, %v1554
        %v1563 = vcombine.high %v1561, %v1561
        %v1565 = vunpack.c.l.s4 1966171168
        %v1566 = vunpack.c.0.s8 %v1565
        %v1567 = vlaneseq
        %v1568 = vshrl.u32 %v1567, 7
        %v1569 = vsub.s32 %v1566, %v1568
        %v1570 = vrot.slane %v1554, %v1569
        %v1572 = vunpack.c.l.s4 1966171168
        %v1573 = vunpack.c.0.s8 %v1572
        %v1574 = vlaneseq
        %v1575 = vshrl.u32 %v1574, 7
        %v1576 = vsub.s32 %v1573, %v1575
        %v1577 = vrot.slane %v1561, %v1576
        %v1579 = vunpack.c.l.s4 1966171168
        %v1580 = vunpack.c.0.s8 %v1579
        %v1581 = vlaneseq
        %v1582 = vshrl.u32 %v1581, 7
        %v1583 = vsub.s32 %v1580, %v1582
        %v1584 = vrot.slane %v1562, %v1583
        %v1586 = vunpack.c.l.s4 1966171168
        %v1587 = vunpack.c.0.s8 %v1586
        %v1588 = vlaneseq
        %v1589 = vshrl.u32 %v1588, 7
        %v1590 = vsub.s32 %v1587, %v1589
        %v1591 = vrot.slane %v1563, %v1590
        %v1592 = vcombine.high %v1570, %v1570
        %v1593 = vcombine.high %v1577, %v1577
        %v1594 = vcombine.high %v1584, %v1584
        %v1595 = vcombine.high %v1591, %v1591
        %1604 = vst [vmem:[#allocation6 + $0x5] sm:$0x1] %v1570
        %1605 = vst [vmem:[#allocation6 + $0xd] sm:$0x1] %v1584
        %1606 = vst [vmem:[#allocation6 + $0x15] sm:$0x1] %v1592
        %1607 = vst [vmem:[#allocation6 + $0x1d] sm:$0x1] %v1594
        %1608 = vst [vmem:[#allocation6 + $0x25] sm:$0x1] %v1577
        %1609 = vst [vmem:[#allocation6 + $0x2d] sm:$0x1] %v1591
        %1610 = vst [vmem:[#allocation6 + $0x35] sm:$0x1] %v1593
        %1611 = vst [vmem:[#allocation6 + $0x3d] sm:$0x1] %v1595
        %v1612 = vlaneseq
        %v1613 = vshrl.u32 %v1612, 7
        %v1614 = vsub.s32 6, %v1613
        %v1615 = vrot.slane %v636, %v1614
        %v1616 = vmul.f32 %v649, %v1615
        %v1617 = vmul.f32 %v1616, 1.442695
        %v1618 = vpow.pop %v1617
        %v1620 = vcombine.high %v1618, %v1618
        %v1622 = vunpack.c.l.s4 1966171168
        %v1623 = vunpack.c.0.s8 %v1622
        %v1624 = vlaneseq
        %v1625 = vshrl.u32 %v1624, 7
        %v1626 = vsub.s32 %v1623, %v1625
        %v1627 = vrot.slane %v1618, %v1626
        %v1629 = vunpack.c.l.s4 1966171168
        %v1630 = vunpack.c.0.s8 %v1629
        %v1631 = vlaneseq
        %v1632 = vshrl.u32 %v1631, 7
        %v1633 = vsub.s32 %v1630, %v1632
        %v1634 = vrot.slane %v1620, %v1633
        %v1635 = vcombine.high %v1627, %v1627
        %v1636 = vcombine.high %v1634, %v1634
        %v1638 = vunpack.c.l.s4 1966171168
        %v1639 = vunpack.c.0.s8 %v1638
        %v1640 = vlaneseq
        %v1641 = vshrl.u32 %v1640, 7
        %v1642 = vsub.s32 %v1639, %v1641
        %v1643 = vrot.slane %v1627, %v1642
        %v1645 = vunpack.c.l.s4 1966171168
        %v1646 = vunpack.c.0.s8 %v1645
        %v1647 = vlaneseq
        %v1648 = vshrl.u32 %v1647, 7
        %v1649 = vsub.s32 %v1646, %v1648
        %v1650 = vrot.slane %v1634, %v1649
        %v1652 = vunpack.c.l.s4 1966171168
        %v1653 = vunpack.c.0.s8 %v1652
        %v1654 = vlaneseq
        %v1655 = vshrl.u32 %v1654, 7
        %v1656 = vsub.s32 %v1653, %v1655
        %v1657 = vrot.slane %v1635, %v1656
        %v1659 = vunpack.c.l.s4 1966171168
        %v1660 = vunpack.c.0.s8 %v1659
        %v1661 = vlaneseq
        %v1662 = vshrl.u32 %v1661, 7
        %v1663 = vsub.s32 %v1660, %v1662
        %v1664 = vrot.slane %v1636, %v1663
        %v1665 = vcombine.high %v1643, %v1643
        %v1666 = vcombine.high %v1650, %v1650
        %v1667 = vcombine.high %v1657, %v1657
        %v1668 = vcombine.high %v1664, %v1664
        %1677 = vst [vmem:[#allocation5 + $0x6] sm:$0x1] %v1643
        %1678 = vst [vmem:[#allocation5 + $0xe] sm:$0x1] %v1657
        %1679 = vst [vmem:[#allocation5 + $0x16] sm:$0x1] %v1665
        %1680 = vst [vmem:[#allocation5 + $0x1e] sm:$0x1] %v1667
        %1681 = vst [vmem:[#allocation5 + $0x26] sm:$0x1] %v1650
        %1682 = vst [vmem:[#allocation5 + $0x2e] sm:$0x1] %v1664
        %1683 = vst [vmem:[#allocation5 + $0x36] sm:$0x1] %v1666
        %1684 = vst [vmem:[#allocation5 + $0x3e] sm:$0x1] %v1668
        %1685 = vset.pattern.permute.xlu0 6
        %1686 = vperm.xlu0 %1685, %v651
        %v1687 = vpop.permute.xlu0 %1686
        %1689 = vset.pattern.permute.xlu0 14
        %1690 = vperm.xlu0 %1689, %v651
        %v1691 = vpop.permute.xlu0 %1690
        %1693 = vset.pattern.permute.xlu0 22
        %1694 = vperm.xlu0 %1693, %v651
        %v1695 = vpop.permute.xlu0 %1694
        %1697 = vset.pattern.permute.xlu0 30
        %1698 = vperm.xlu0 %1697, %v651
        %v1699 = vpop.permute.xlu0 %1698
        %v1701 = vsel %vm426, %v1687, %v1691
        %v1702 = vsel %vm746, %v1701, %v1695
        %v1703 = vsel %vm748, %v1702, %v1699
        %v1704 = vmul.f32 %v1703, %v654
        %v1706 = vcombine.high %v1704, %v1704
        %v1708 = vunpack.c.l.s4 1966171168
        %v1709 = vunpack.c.0.s8 %v1708
        %v1710 = vlaneseq
        %v1711 = vshrl.u32 %v1710, 7
        %v1712 = vsub.s32 %v1709, %v1711
        %v1713 = vrot.slane %v1704, %v1712
        %v1715 = vunpack.c.l.s4 1966171168
        %v1716 = vunpack.c.0.s8 %v1715
        %v1717 = vlaneseq
        %v1718 = vshrl.u32 %v1717, 7
        %v1719 = vsub.s32 %v1716, %v1718
        %v1720 = vrot.slane %v1706, %v1719
        %v1721 = vcombine.high %v1713, %v1713
        %v1722 = vcombine.high %v1720, %v1720
        %v1724 = vunpack.c.l.s4 1966171168
        %v1725 = vunpack.c.0.s8 %v1724
        %v1726 = vlaneseq
        %v1727 = vshrl.u32 %v1726, 7
        %v1728 = vsub.s32 %v1725, %v1727
        %v1729 = vrot.slane %v1713, %v1728
        %v1731 = vunpack.c.l.s4 1966171168
        %v1732 = vunpack.c.0.s8 %v1731
        %v1733 = vlaneseq
        %v1734 = vshrl.u32 %v1733, 7
        %v1735 = vsub.s32 %v1732, %v1734
        %v1736 = vrot.slane %v1720, %v1735
        %v1738 = vunpack.c.l.s4 1966171168
        %v1739 = vunpack.c.0.s8 %v1738
        %v1740 = vlaneseq
        %v1741 = vshrl.u32 %v1740, 7
        %v1742 = vsub.s32 %v1739, %v1741
        %v1743 = vrot.slane %v1721, %v1742
        %v1745 = vunpack.c.l.s4 1966171168
        %v1746 = vunpack.c.0.s8 %v1745
        %v1747 = vlaneseq
        %v1748 = vshrl.u32 %v1747, 7
        %v1749 = vsub.s32 %v1746, %v1748
        %v1750 = vrot.slane %v1722, %v1749
        %v1751 = vcombine.high %v1729, %v1729
        %v1752 = vcombine.high %v1736, %v1736
        %v1753 = vcombine.high %v1743, %v1743
        %v1754 = vcombine.high %v1750, %v1750
        %1763 = vst [vmem:[#allocation6 + $0x6] sm:$0x1] %v1729
        %1764 = vst [vmem:[#allocation6 + $0xe] sm:$0x1] %v1743
        %1765 = vst [vmem:[#allocation6 + $0x16] sm:$0x1] %v1751
        %1766 = vst [vmem:[#allocation6 + $0x1e] sm:$0x1] %v1753
        %1767 = vst [vmem:[#allocation6 + $0x26] sm:$0x1] %v1736
        %1768 = vst [vmem:[#allocation6 + $0x2e] sm:$0x1] %v1750
        %1769 = vst [vmem:[#allocation6 + $0x36] sm:$0x1] %v1752
        %1770 = vst [vmem:[#allocation6 + $0x3e] sm:$0x1] %v1754
        %v1771 = vlaneseq
        %v1772 = vshrl.u32 %v1771, 7
        %v1773 = vsub.s32 7, %v1772
        %v1774 = vrot.slane %v636, %v1773
        %v1775 = vmul.f32 %v649, %v1774
        %v1776 = vmul.f32 %v1775, 1.442695
        %v1777 = vpow.pop %v1776
        %v1779 = vcombine.high %v1777, %v1777
        %v1781 = vunpack.c.l.s4 1966171168
        %v1782 = vunpack.c.0.s8 %v1781
        %v1783 = vlaneseq
        %v1784 = vshrl.u32 %v1783, 7
        %v1785 = vsub.s32 %v1782, %v1784
        %v1786 = vrot.slane %v1777, %v1785
        %v1788 = vunpack.c.l.s4 1966171168
        %v1789 = vunpack.c.0.s8 %v1788
        %v1790 = vlaneseq
        %v1791 = vshrl.u32 %v1790, 7
        %v1792 = vsub.s32 %v1789, %v1791
        %v1793 = vrot.slane %v1779, %v1792
        %v1794 = vcombine.high %v1786, %v1786
        %v1795 = vcombine.high %v1793, %v1793
        %v1797 = vunpack.c.l.s4 1966171168
        %v1798 = vunpack.c.0.s8 %v1797
        %v1799 = vlaneseq
        %v1800 = vshrl.u32 %v1799, 7
        %v1801 = vsub.s32 %v1798, %v1800
        %v1802 = vrot.slane %v1786, %v1801
        %v1804 = vunpack.c.l.s4 1966171168
        %v1805 = vunpack.c.0.s8 %v1804
        %v1806 = vlaneseq
        %v1807 = vshrl.u32 %v1806, 7
        %v1808 = vsub.s32 %v1805, %v1807
        %v1809 = vrot.slane %v1793, %v1808
        %v1811 = vunpack.c.l.s4 1966171168
        %v1812 = vunpack.c.0.s8 %v1811
        %v1813 = vlaneseq
        %v1814 = vshrl.u32 %v1813, 7
        %v1815 = vsub.s32 %v1812, %v1814
        %v1816 = vrot.slane %v1794, %v1815
        %v1818 = vunpack.c.l.s4 1966171168
        %v1819 = vunpack.c.0.s8 %v1818
        %v1820 = vlaneseq
        %v1821 = vshrl.u32 %v1820, 7
        %v1822 = vsub.s32 %v1819, %v1821
        %v1823 = vrot.slane %v1795, %v1822
        %v1824 = vcombine.high %v1802, %v1802
        %v1825 = vcombine.high %v1809, %v1809
        %v1826 = vcombine.high %v1816, %v1816
        %v1827 = vcombine.high %v1823, %v1823
        %1836 = vst [vmem:[#allocation5 + $0x7] sm:$0x1] %v1802
        %1837 = vst [vmem:[#allocation5 + $0xf] sm:$0x1] %v1816
        %1838 = vst [vmem:[#allocation5 + $0x17] sm:$0x1] %v1824
        %1839 = vst [vmem:[#allocation5 + $0x1f] sm:$0x1] %v1826
        %1840 = vst [vmem:[#allocation5 + $0x27] sm:$0x1] %v1809
        %1841 = vst [vmem:[#allocation5 + $0x2f] sm:$0x1] %v1823
        %1842 = vst [vmem:[#allocation5 + $0x37] sm:$0x1] %v1825
        %1843 = vst [vmem:[#allocation5 + $0x3f] sm:$0x1] %v1827
        %1844 = vset.pattern.permute.xlu0 7
        %1845 = vperm.xlu0 %1844, %v651
        %v1846 = vpop.permute.xlu0 %1845
        %1848 = vset.pattern.permute.xlu0 15
        %1849 = vperm.xlu0 %1848, %v651
        %v1850 = vpop.permute.xlu0 %1849
        %1852 = vset.pattern.permute.xlu0 23
        %1853 = vperm.xlu0 %1852, %v651
        %v1854 = vpop.permute.xlu0 %1853
        %1856 = vset.pattern.permute.xlu0 31
        %1857 = vperm.xlu0 %1856, %v651
        %v1858 = vpop.permute.xlu0 %1857
        %v1860 = vsel %vm426, %v1846, %v1850
        %v1861 = vsel %vm746, %v1860, %v1854
        %v1862 = vsel %vm748, %v1861, %v1858
        %v1863 = vmul.f32 %v1862, %v654
        %v1865 = vcombine.high %v1863, %v1863
        %v1867 = vunpack.c.l.s4 1966171168
        %v1868 = vunpack.c.0.s8 %v1867
        %v1869 = vlaneseq
        %v1870 = vshrl.u32 %v1869, 7
        %v1871 = vsub.s32 %v1868, %v1870
        %v1872 = vrot.slane %v1863, %v1871
        %v1874 = vunpack.c.l.s4 1966171168
        %v1875 = vunpack.c.0.s8 %v1874
        %v1876 = vlaneseq
        %v1877 = vshrl.u32 %v1876, 7
        %v1878 = vsub.s32 %v1875, %v1877
        %v1879 = vrot.slane %v1865, %v1878
        %v1880 = vcombine.high %v1872, %v1872
        %v1881 = vcombine.high %v1879, %v1879
        %v1883 = vunpack.c.l.s4 1966171168
        %v1884 = vunpack.c.0.s8 %v1883
        %v1885 = vlaneseq
        %v1886 = vshrl.u32 %v1885, 7
        %v1887 = vsub.s32 %v1884, %v1886
        %v1888 = vrot.slane %v1872, %v1887
        %v1890 = vunpack.c.l.s4 1966171168
        %v1891 = vunpack.c.0.s8 %v1890
        %v1892 = vlaneseq
        %v1893 = vshrl.u32 %v1892, 7
        %v1894 = vsub.s32 %v1891, %v1893
        %v1895 = vrot.slane %v1879, %v1894
        %v1897 = vunpack.c.l.s4 1966171168
        %v1898 = vunpack.c.0.s8 %v1897
        %v1899 = vlaneseq
        %v1900 = vshrl.u32 %v1899, 7
        %v1901 = vsub.s32 %v1898, %v1900
        %v1902 = vrot.slane %v1880, %v1901
        %v1904 = vunpack.c.l.s4 1966171168
        %v1905 = vunpack.c.0.s8 %v1904
        %v1906 = vlaneseq
        %v1907 = vshrl.u32 %v1906, 7
        %v1908 = vsub.s32 %v1905, %v1907
        %v1909 = vrot.slane %v1881, %v1908
        %v1910 = vcombine.high %v1888, %v1888
        %v1911 = vcombine.high %v1895, %v1895
        %v1912 = vcombine.high %v1902, %v1902
        %v1913 = vcombine.high %v1909, %v1909
        %1922 = vst [vmem:[#allocation6 + $0x7] sm:$0x1] %v1888
        %1923 = vst [vmem:[#allocation6 + $0xf] sm:$0x1] %v1902
        %1924 = vst [vmem:[#allocation6 + $0x17] sm:$0x1] %v1910
        %1925 = vst [vmem:[#allocation6 + $0x1f] sm:$0x1] %v1912
        %1926 = vst [vmem:[#allocation6 + $0x27] sm:$0x1] %v1895
        %1927 = vst [vmem:[#allocation6 + $0x2f] sm:$0x1] %v1909
        %1928 = vst [vmem:[#allocation6 + $0x37] sm:$0x1] %v1911
        %1929 = vst [vmem:[#allocation6 + $0x3f] sm:$0x1] %v1913
        %v1930 = vld [vmem:[#allocation5] sm:$0xff]
        %v1931 = vmul.f32 %v644, %v1930
        %v1932 = vld [vmem:[#allocation6] sm:$0xff]
        %v1933 = vadd.f32 %v1931, %v1932
        %1934 = vst [vmem:[#allocation7] sm:$0xff] %v1933
        %s1935 = scalar_lea.vmem [#allocation5], 8
        %v1936 = vld [vmem:[%s1935] sm:$0xff]
        %v1937 = vmul.f32 %v1933, %v1936
        %s1938 = scalar_lea.vmem [#allocation6], 8
        %v1939 = vld [vmem:[%s1938] sm:$0xff]
        %v1940 = vadd.f32 %v1937, %v1939
        %s1941 = scalar_lea.vmem [#allocation7], 8
        %1942 = vst [vmem:[%s1941] sm:$0xff] %v1940
        %s1943 = scalar_lea.vmem [#allocation5], 16
        %v1944 = vld [vmem:[%s1943] sm:$0xff]
        %v1945 = vmul.f32 %v1940, %v1944
        %s1946 = scalar_lea.vmem [#allocation6], 16
        %v1947 = vld [vmem:[%s1946] sm:$0xff]
        %v1948 = vadd.f32 %v1945, %v1947
        %s1949 = scalar_lea.vmem [#allocation7], 16
        %1950 = vst [vmem:[%s1949] sm:$0xff] %v1948
        %s1951 = scalar_lea.vmem [#allocation5], 24
        %v1952 = vld [vmem:[%s1951] sm:$0xff]
        %v1953 = vmul.f32 %v1948, %v1952
        %s1954 = scalar_lea.vmem [#allocation6], 24
        %v1955 = vld [vmem:[%s1954] sm:$0xff]
        %v1956 = vadd.f32 %v1953, %v1955
        %s1957 = scalar_lea.vmem [#allocation7], 24
        %1958 = vst [vmem:[%s1957] sm:$0xff] %v1956
        %s1959 = scalar_lea.vmem [#allocation5], 32
        %v1960 = vld [vmem:[%s1959] sm:$0xff]
        %v1961 = vmul.f32 %v1956, %v1960
        %s1962 = scalar_lea.vmem [#allocation6], 32
        %v1963 = vld [vmem:[%s1962] sm:$0xff]
        %v1964 = vadd.f32 %v1961, %v1963
        %s1965 = scalar_lea.vmem [#allocation7], 32
        %1966 = vst [vmem:[%s1965] sm:$0xff] %v1964
        %s1967 = scalar_lea.vmem [#allocation5], 40
        %v1968 = vld [vmem:[%s1967] sm:$0xff]
        %v1969 = vmul.f32 %v1964, %v1968
        %s1970 = scalar_lea.vmem [#allocation6], 40
        %v1971 = vld [vmem:[%s1970] sm:$0xff]
        %v1972 = vadd.f32 %v1969, %v1971
        %s1973 = scalar_lea.vmem [#allocation7], 40
        %1974 = vst [vmem:[%s1973] sm:$0xff] %v1972
        %s1975 = scalar_lea.vmem [#allocation5], 48
        %v1976 = vld [vmem:[%s1975] sm:$0xff]
        %v1977 = vmul.f32 %v1972, %v1976
        %s1978 = scalar_lea.vmem [#allocation6], 48
        %v1979 = vld [vmem:[%s1978] sm:$0xff]
        %v1980 = vadd.f32 %v1977, %v1979
        %s1981 = scalar_lea.vmem [#allocation7], 48
        %1982 = vst [vmem:[%s1981] sm:$0xff] %v1980
        %s1983 = scalar_lea.vmem [#allocation5], 56
        %v1984 = vld [vmem:[%s1983] sm:$0xff]
        %v1985 = vmul.f32 %v1980, %v1984
        %s1986 = scalar_lea.vmem [#allocation6], 56
        %v1987 = vld [vmem:[%s1986] sm:$0xff]
        %v1988 = vadd.f32 %v1985, %v1987
        %s1989 = scalar_lea.vmem [#allocation7], 56
        %1990 = vst [vmem:[%s1989] sm:$0xff] %v1988
        %v1992 = vlaneseq
        %v1993 = vshrl.u32 %v1992, 7
        %v1994 = vsub.s32 0, %v1993
        %v1995 = vrot.slane %v637, %v1994
        %v1997 = vmul.f32 %v1995, %v647
        %1999 = vset.pattern.permute.xlu0 0
        %2000 = vperm.xlu0 %1999, %v653
        %v2001 = vpop.permute.xlu0 %2000
        %2003 = vset.pattern.permute.xlu0 8
        %2004 = vperm.xlu0 %2003, %v653
        %v2005 = vpop.permute.xlu0 %2004
        %2007 = vset.pattern.permute.xlu0 16
        %2008 = vperm.xlu0 %2007, %v653
        %v2009 = vpop.permute.xlu0 %2008
        %2011 = vset.pattern.permute.xlu0 24
        %2012 = vperm.xlu0 %2011, %v653
        %v2013 = vpop.permute.xlu0 %2012
        %v2015 = vsel %vm426, %v2001, %v2005
        %v2016 = vsel %vm746, %v2015, %v2009
        %v2017 = vsel %vm748, %v2016, %v2013
        %v2018 = vld [vmem:[#allocation7] sm:$0x1]
        %v2019 = vld [vmem:[#allocation7 + $0x8] sm:$0x1]
        %v2020 = vld [vmem:[#allocation7 + $0x10] sm:$0x1]
        %v2021 = vld [vmem:[#allocation7 + $0x18] sm:$0x1]
        %v2022 = vld [vmem:[#allocation7 + $0x20] sm:$0x1]
        %v2023 = vld [vmem:[#allocation7 + $0x28] sm:$0x1]
        %v2024 = vld [vmem:[#allocation7 + $0x30] sm:$0x1]
        %v2025 = vld [vmem:[#allocation7 + $0x38] sm:$0x1]
        %v2027 = vrot.slane %v2017, 1
        %v2028 = vrot.slane %v2017, 2
        %v2029 = vrot.slane %v2017, 3
        %v2030 = vrot.slane %v2017, 4
        %v2031 = vrot.slane %v2017, 5
        %v2032 = vrot.slane %v2017, 6
        %v2033 = vrot.slane %v2017, 7
        %v2042 = vmul.f32 %v2018, %v2017
        %v2043 = vmul.f32 %v2019, %v2027
        %v2044 = vmul.f32 %v2020, %v2028
        %v2045 = vmul.f32 %v2021, %v2029
        %v2046 = vmul.f32 %v2022, %v2030
        %v2047 = vmul.f32 %v2023, %v2031
        %v2048 = vmul.f32 %v2024, %v2032
        %v2049 = vmul.f32 %v2025, %v2033
        %v2058 = vrot.slane %v2043, 7
        %vm2059 = vcmask 1041409
        %v2060 = vsel %vm2059, %v2058, %v2042
        %v2061 = vrot.slane %v2044, 6
        %vm2062 = vcmask 1042434
        %v2063 = vsel %vm2062, %v2061, %v2060
        %v2064 = vrot.slane %v2045, 5
        %vm2065 = vcmask 1043459
        %v2066 = vsel %vm2065, %v2064, %v2063
        %v2067 = vrot.slane %v2046, 4
        %vm2068 = vcmask 1044484
        %v2069 = vsel %vm2068, %v2067, %v2066
        %v2070 = vrot.slane %v2047, 3
        %vm2071 = vcmask 1045509
        %v2072 = vsel %vm2071, %v2070, %v2069
        %v2073 = vrot.slane %v2048, 2
        %vm2074 = vcmask 1046534
        %v2075 = vsel %vm2074, %v2073, %v2072
        %v2076 = vrot.slane %v2049, 1
        %vm2077 = vcmask 1047559
        %v2078 = vsel %vm2077, %v2076, %v2075
        %v2080 = vadd.f32 %v1997, %v2078
        %2081 = vset.pattern.permute.xlu0 1
        %2082 = vperm.xlu0 %2081, %v653
        %v2083 = vpop.permute.xlu0 %2082
        %2085 = vset.pattern.permute.xlu0 9
        %2086 = vperm.xlu0 %2085, %v653
        %v2087 = vpop.permute.xlu0 %2086
        %2089 = vset.pattern.permute.xlu0 17
        %2090 = vperm.xlu0 %2089, %v653
        %v2091 = vpop.permute.xlu0 %2090
        %2093 = vset.pattern.permute.xlu0 25
        %2094 = vperm.xlu0 %2093, %v653
        %v2095 = vpop.permute.xlu0 %2094
        %v2097 = vsel %vm426, %v2083, %v2087
        %v2098 = vsel %vm746, %v2097, %v2091
        %v2099 = vsel %vm748, %v2098, %v2095
        %v2100 = vld [vmem:[#allocation7 + $0x1] sm:$0x1]
        %v2101 = vld [vmem:[#allocation7 + $0x9] sm:$0x1]
        %v2102 = vld [vmem:[#allocation7 + $0x11] sm:$0x1]
        %v2103 = vld [vmem:[#allocation7 + $0x19] sm:$0x1]
        %v2104 = vld [vmem:[#allocation7 + $0x21] sm:$0x1]
        %v2105 = vld [vmem:[#allocation7 + $0x29] sm:$0x1]
        %v2106 = vld [vmem:[#allocation7 + $0x31] sm:$0x1]
        %v2107 = vld [vmem:[#allocation7 + $0x39] sm:$0x1]
        %v2109 = vrot.slane %v2099, 1
        %v2110 = vrot.slane %v2099, 2
        %v2111 = vrot.slane %v2099, 3
        %v2112 = vrot.slane %v2099, 4
        %v2113 = vrot.slane %v2099, 5
        %v2114 = vrot.slane %v2099, 6
        %v2115 = vrot.slane %v2099, 7
        %v2124 = vmul.f32 %v2100, %v2099
        %v2125 = vmul.f32 %v2101, %v2109
        %v2126 = vmul.f32 %v2102, %v2110
        %v2127 = vmul.f32 %v2103, %v2111
        %v2128 = vmul.f32 %v2104, %v2112
        %v2129 = vmul.f32 %v2105, %v2113
        %v2130 = vmul.f32 %v2106, %v2114
        %v2131 = vmul.f32 %v2107, %v2115
        %v2140 = vrot.slane %v2125, 7
        %v2141 = vsel %vm2059, %v2140, %v2124
        %v2142 = vrot.slane %v2126, 6
        %v2143 = vsel %vm2062, %v2142, %v2141
        %v2144 = vrot.slane %v2127, 5
        %v2145 = vsel %vm2065, %v2144, %v2143
        %v2146 = vrot.slane %v2128, 4
        %v2147 = vsel %vm2068, %v2146, %v2145
        %v2148 = vrot.slane %v2129, 3
        %v2149 = vsel %vm2071, %v2148, %v2147
        %v2150 = vrot.slane %v2130, 2
        %v2151 = vsel %vm2074, %v2150, %v2149
        %v2152 = vrot.slane %v2131, 1
        %v2153 = vsel %vm2077, %v2152, %v2151
        %v2155 = vadd.f32 %v2080, %v2153
        %2156 = vset.pattern.permute.xlu0 2
        %2157 = vperm.xlu0 %2156, %v653
        %v2158 = vpop.permute.xlu0 %2157
        %2160 = vset.pattern.permute.xlu0 10
        %2161 = vperm.xlu0 %2160, %v653
        %v2162 = vpop.permute.xlu0 %2161
        %2164 = vset.pattern.permute.xlu0 18
        %2165 = vperm.xlu0 %2164, %v653
        %v2166 = vpop.permute.xlu0 %2165
        %2168 = vset.pattern.permute.xlu0 26
        %2169 = vperm.xlu0 %2168, %v653
        %v2170 = vpop.permute.xlu0 %2169
        %v2172 = vsel %vm426, %v2158, %v2162
        %v2173 = vsel %vm746, %v2172, %v2166
        %v2174 = vsel %vm748, %v2173, %v2170
        %v2175 = vld [vmem:[#allocation7 + $0x2] sm:$0x1]
        %v2176 = vld [vmem:[#allocation7 + $0xa] sm:$0x1]
        %v2177 = vld [vmem:[#allocation7 + $0x12] sm:$0x1]
        %v2178 = vld [vmem:[#allocation7 + $0x1a] sm:$0x1]
        %v2179 = vld [vmem:[#allocation7 + $0x22] sm:$0x1]
        %v2180 = vld [vmem:[#allocation7 + $0x2a] sm:$0x1]
        %v2181 = vld [vmem:[#allocation7 + $0x32] sm:$0x1]
        %v2182 = vld [vmem:[#allocation7 + $0x3a] sm:$0x1]
        %v2184 = vrot.slane %v2174, 1
        %v2185 = vrot.slane %v2174, 2
        %v2186 = vrot.slane %v2174, 3
        %v2187 = vrot.slane %v2174, 4
        %v2188 = vrot.slane %v2174, 5
        %v2189 = vrot.slane %v2174, 6
        %v2190 = vrot.slane %v2174, 7
        %v2199 = vmul.f32 %v2175, %v2174
        %v2200 = vmul.f32 %v2176, %v2184
        %v2201 = vmul.f32 %v2177, %v2185
        %v2202 = vmul.f32 %v2178, %v2186
        %v2203 = vmul.f32 %v2179, %v2187
        %v2204 = vmul.f32 %v2180, %v2188
        %v2205 = vmul.f32 %v2181, %v2189
        %v2206 = vmul.f32 %v2182, %v2190
        %v2215 = vrot.slane %v2200, 7
        %v2216 = vsel %vm2059, %v2215, %v2199
        %v2217 = vrot.slane %v2201, 6
        %v2218 = vsel %vm2062, %v2217, %v2216
        %v2219 = vrot.slane %v2202, 5
        %v2220 = vsel %vm2065, %v2219, %v2218
        %v2221 = vrot.slane %v2203, 4
        %v2222 = vsel %vm2068, %v2221, %v2220
        %v2223 = vrot.slane %v2204, 3
        %v2224 = vsel %vm2071, %v2223, %v2222
        %v2225 = vrot.slane %v2205, 2
        %v2226 = vsel %vm2074, %v2225, %v2224
        %v2227 = vrot.slane %v2206, 1
        %v2228 = vsel %vm2077, %v2227, %v2226
        %v2230 = vadd.f32 %v2155, %v2228
        %2231 = vset.pattern.permute.xlu0 3
        %2232 = vperm.xlu0 %2231, %v653
        %v2233 = vpop.permute.xlu0 %2232
        %2235 = vset.pattern.permute.xlu0 11
        %2236 = vperm.xlu0 %2235, %v653
        %v2237 = vpop.permute.xlu0 %2236
        %2239 = vset.pattern.permute.xlu0 19
        %2240 = vperm.xlu0 %2239, %v653
        %v2241 = vpop.permute.xlu0 %2240
        %2243 = vset.pattern.permute.xlu0 27
        %2244 = vperm.xlu0 %2243, %v653
        %v2245 = vpop.permute.xlu0 %2244
        %v2247 = vsel %vm426, %v2233, %v2237
        %v2248 = vsel %vm746, %v2247, %v2241
        %v2249 = vsel %vm748, %v2248, %v2245
        %v2250 = vld [vmem:[#allocation7 + $0x3] sm:$0x1]
        %v2251 = vld [vmem:[#allocation7 + $0xb] sm:$0x1]
        %v2252 = vld [vmem:[#allocation7 + $0x13] sm:$0x1]
        %v2253 = vld [vmem:[#allocation7 + $0x1b] sm:$0x1]
        %v2254 = vld [vmem:[#allocation7 + $0x23] sm:$0x1]
        %v2255 = vld [vmem:[#allocation7 + $0x2b] sm:$0x1]
        %v2256 = vld [vmem:[#allocation7 + $0x33] sm:$0x1]
        %v2257 = vld [vmem:[#allocation7 + $0x3b] sm:$0x1]
        %v2259 = vrot.slane %v2249, 1
        %v2260 = vrot.slane %v2249, 2
        %v2261 = vrot.slane %v2249, 3
        %v2262 = vrot.slane %v2249, 4
        %v2263 = vrot.slane %v2249, 5
        %v2264 = vrot.slane %v2249, 6
        %v2265 = vrot.slane %v2249, 7
        %v2274 = vmul.f32 %v2250, %v2249
        %v2275 = vmul.f32 %v2251, %v2259
        %v2276 = vmul.f32 %v2252, %v2260
        %v2277 = vmul.f32 %v2253, %v2261
        %v2278 = vmul.f32 %v2254, %v2262
        %v2279 = vmul.f32 %v2255, %v2263
        %v2280 = vmul.f32 %v2256, %v2264
        %v2281 = vmul.f32 %v2257, %v2265
        %v2290 = vrot.slane %v2275, 7
        %v2291 = vsel %vm2059, %v2290, %v2274
        %v2292 = vrot.slane %v2276, 6
        %v2293 = vsel %vm2062, %v2292, %v2291
        %v2294 = vrot.slane %v2277, 5
        %v2295 = vsel %vm2065, %v2294, %v2293
        %v2296 = vrot.slane %v2278, 4
        %v2297 = vsel %vm2068, %v2296, %v2295
        %v2298 = vrot.slane %v2279, 3
        %v2299 = vsel %vm2071, %v2298, %v2297
        %v2300 = vrot.slane %v2280, 2
        %v2301 = vsel %vm2074, %v2300, %v2299
        %v2302 = vrot.slane %v2281, 1
        %v2303 = vsel %vm2077, %v2302, %v2301
        %v2305 = vadd.f32 %v2230, %v2303
        %2306 = vset.pattern.permute.xlu0 4
        %2307 = vperm.xlu0 %2306, %v653
        %v2308 = vpop.permute.xlu0 %2307
        %2310 = vset.pattern.permute.xlu0 12
        %2311 = vperm.xlu0 %2310, %v653
        %v2312 = vpop.permute.xlu0 %2311
        %2314 = vset.pattern.permute.xlu0 20
        %2315 = vperm.xlu0 %2314, %v653
        %v2316 = vpop.permute.xlu0 %2315
        %2318 = vset.pattern.permute.xlu0 28
        %2319 = vperm.xlu0 %2318, %v653
        %v2320 = vpop.permute.xlu0 %2319
        %v2322 = vsel %vm426, %v2308, %v2312
        %v2323 = vsel %vm746, %v2322, %v2316
        %v2324 = vsel %vm748, %v2323, %v2320
        %v2325 = vld [vmem:[#allocation7 + $0x4] sm:$0x1]
        %v2326 = vld [vmem:[#allocation7 + $0xc] sm:$0x1]
        %v2327 = vld [vmem:[#allocation7 + $0x14] sm:$0x1]
        %v2328 = vld [vmem:[#allocation7 + $0x1c] sm:$0x1]
        %v2329 = vld [vmem:[#allocation7 + $0x24] sm:$0x1]
        %v2330 = vld [vmem:[#allocation7 + $0x2c] sm:$0x1]
        %v2331 = vld [vmem:[#allocation7 + $0x34] sm:$0x1]
        %v2332 = vld [vmem:[#allocation7 + $0x3c] sm:$0x1]
        %v2334 = vrot.slane %v2324, 1
        %v2335 = vrot.slane %v2324, 2
        %v2336 = vrot.slane %v2324, 3
        %v2337 = vrot.slane %v2324, 4
        %v2338 = vrot.slane %v2324, 5
        %v2339 = vrot.slane %v2324, 6
        %v2340 = vrot.slane %v2324, 7
        %v2349 = vmul.f32 %v2325, %v2324
        %v2350 = vmul.f32 %v2326, %v2334
        %v2351 = vmul.f32 %v2327, %v2335
        %v2352 = vmul.f32 %v2328, %v2336
        %v2353 = vmul.f32 %v2329, %v2337
        %v2354 = vmul.f32 %v2330, %v2338
        %v2355 = vmul.f32 %v2331, %v2339
        %v2356 = vmul.f32 %v2332, %v2340
        %v2365 = vrot.slane %v2350, 7
        %v2366 = vsel %vm2059, %v2365, %v2349
        %v2367 = vrot.slane %v2351, 6
        %v2368 = vsel %vm2062, %v2367, %v2366
        %v2369 = vrot.slane %v2352, 5
        %v2370 = vsel %vm2065, %v2369, %v2368
        %v2371 = vrot.slane %v2353, 4
        %v2372 = vsel %vm2068, %v2371, %v2370
        %v2373 = vrot.slane %v2354, 3
        %v2374 = vsel %vm2071, %v2373, %v2372
        %v2375 = vrot.slane %v2355, 2
        %v2376 = vsel %vm2074, %v2375, %v2374
        %v2377 = vrot.slane %v2356, 1
        %v2378 = vsel %vm2077, %v2377, %v2376
        %v2380 = vadd.f32 %v2305, %v2378
        %2381 = vset.pattern.permute.xlu0 5
        %2382 = vperm.xlu0 %2381, %v653
        %v2383 = vpop.permute.xlu0 %2382
        %2385 = vset.pattern.permute.xlu0 13
        %2386 = vperm.xlu0 %2385, %v653
        %v2387 = vpop.permute.xlu0 %2386
        %2389 = vset.pattern.permute.xlu0 21
        %2390 = vperm.xlu0 %2389, %v653
        %v2391 = vpop.permute.xlu0 %2390
        %2393 = vset.pattern.permute.xlu0 29
        %2394 = vperm.xlu0 %2393, %v653
        %v2395 = vpop.permute.xlu0 %2394
        %v2397 = vsel %vm426, %v2383, %v2387
        %v2398 = vsel %vm746, %v2397, %v2391
        %v2399 = vsel %vm748, %v2398, %v2395
        %v2400 = vld [vmem:[#allocation7 + $0x5] sm:$0x1]
        %v2401 = vld [vmem:[#allocation7 + $0xd] sm:$0x1]
        %v2402 = vld [vmem:[#allocation7 + $0x15] sm:$0x1]
        %v2403 = vld [vmem:[#allocation7 + $0x1d] sm:$0x1]
        %v2404 = vld [vmem:[#allocation7 + $0x25] sm:$0x1]
        %v2405 = vld [vmem:[#allocation7 + $0x2d] sm:$0x1]
        %v2406 = vld [vmem:[#allocation7 + $0x35] sm:$0x1]
        %v2407 = vld [vmem:[#allocation7 + $0x3d] sm:$0x1]
        %v2409 = vrot.slane %v2399, 1
        %v2410 = vrot.slane %v2399, 2
        %v2411 = vrot.slane %v2399, 3
        %v2412 = vrot.slane %v2399, 4
        %v2413 = vrot.slane %v2399, 5
        %v2414 = vrot.slane %v2399, 6
        %v2415 = vrot.slane %v2399, 7
        %v2424 = vmul.f32 %v2400, %v2399
        %v2425 = vmul.f32 %v2401, %v2409
        %v2426 = vmul.f32 %v2402, %v2410
        %v2427 = vmul.f32 %v2403, %v2411
        %v2428 = vmul.f32 %v2404, %v2412
        %v2429 = vmul.f32 %v2405, %v2413
        %v2430 = vmul.f32 %v2406, %v2414
        %v2431 = vmul.f32 %v2407, %v2415
        %v2440 = vrot.slane %v2425, 7
        %v2441 = vsel %vm2059, %v2440, %v2424
        %v2442 = vrot.slane %v2426, 6
        %v2443 = vsel %vm2062, %v2442, %v2441
        %v2444 = vrot.slane %v2427, 5
        %v2445 = vsel %vm2065, %v2444, %v2443
        %v2446 = vrot.slane %v2428, 4
        %v2447 = vsel %vm2068, %v2446, %v2445
        %v2448 = vrot.slane %v2429, 3
        %v2449 = vsel %vm2071, %v2448, %v2447
        %v2450 = vrot.slane %v2430, 2
        %v2451 = vsel %vm2074, %v2450, %v2449
        %v2452 = vrot.slane %v2431, 1
        %v2453 = vsel %vm2077, %v2452, %v2451
        %v2455 = vadd.f32 %v2380, %v2453
        %2456 = vset.pattern.permute.xlu0 6
        %2457 = vperm.xlu0 %2456, %v653
        %v2458 = vpop.permute.xlu0 %2457
        %2460 = vset.pattern.permute.xlu0 14
        %2461 = vperm.xlu0 %2460, %v653
        %v2462 = vpop.permute.xlu0 %2461
        %2464 = vset.pattern.permute.xlu0 22
        %2465 = vperm.xlu0 %2464, %v653
        %v2466 = vpop.permute.xlu0 %2465
        %2468 = vset.pattern.permute.xlu0 30
        %2469 = vperm.xlu0 %2468, %v653
        %v2470 = vpop.permute.xlu0 %2469
        %v2472 = vsel %vm426, %v2458, %v2462
        %v2473 = vsel %vm746, %v2472, %v2466
        %v2474 = vsel %vm748, %v2473, %v2470
        %v2475 = vld [vmem:[#allocation7 + $0x6] sm:$0x1]
        %v2476 = vld [vmem:[#allocation7 + $0xe] sm:$0x1]
        %v2477 = vld [vmem:[#allocation7 + $0x16] sm:$0x1]
        %v2478 = vld [vmem:[#allocation7 + $0x1e] sm:$0x1]
        %v2479 = vld [vmem:[#allocation7 + $0x26] sm:$0x1]
        %v2480 = vld [vmem:[#allocation7 + $0x2e] sm:$0x1]
        %v2481 = vld [vmem:[#allocation7 + $0x36] sm:$0x1]
        %v2482 = vld [vmem:[#allocation7 + $0x3e] sm:$0x1]
        %v2484 = vrot.slane %v2474, 1
        %v2485 = vrot.slane %v2474, 2
        %v2486 = vrot.slane %v2474, 3
        %v2487 = vrot.slane %v2474, 4
        %v2488 = vrot.slane %v2474, 5
        %v2489 = vrot.slane %v2474, 6
        %v2490 = vrot.slane %v2474, 7
        %v2499 = vmul.f32 %v2475, %v2474
        %v2500 = vmul.f32 %v2476, %v2484
        %v2501 = vmul.f32 %v2477, %v2485
        %v2502 = vmul.f32 %v2478, %v2486
        %v2503 = vmul.f32 %v2479, %v2487
        %v2504 = vmul.f32 %v2480, %v2488
        %v2505 = vmul.f32 %v2481, %v2489
        %v2506 = vmul.f32 %v2482, %v2490
        %v2515 = vrot.slane %v2500, 7
        %v2516 = vsel %vm2059, %v2515, %v2499
        %v2517 = vrot.slane %v2501, 6
        %v2518 = vsel %vm2062, %v2517, %v2516
        %v2519 = vrot.slane %v2502, 5
        %v2520 = vsel %vm2065, %v2519, %v2518
        %v2521 = vrot.slane %v2503, 4
        %v2522 = vsel %vm2068, %v2521, %v2520
        %v2523 = vrot.slane %v2504, 3
        %v2524 = vsel %vm2071, %v2523, %v2522
        %v2525 = vrot.slane %v2505, 2
        %v2526 = vsel %vm2074, %v2525, %v2524
        %v2527 = vrot.slane %v2506, 1
        %v2528 = vsel %vm2077, %v2527, %v2526
        %v2530 = vadd.f32 %v2455, %v2528
        %2531 = vset.pattern.permute.xlu0 7
        %2532 = vperm.xlu0 %2531, %v653
        %v2533 = vpop.permute.xlu0 %2532
        %2535 = vset.pattern.permute.xlu0 15
        %2536 = vperm.xlu0 %2535, %v653
        %v2537 = vpop.permute.xlu0 %2536
        %2539 = vset.pattern.permute.xlu0 23
        %2540 = vperm.xlu0 %2539, %v653
        %v2541 = vpop.permute.xlu0 %2540
        %2543 = vset.pattern.permute.xlu0 31
        %2544 = vperm.xlu0 %2543, %v653
        %v2545 = vpop.permute.xlu0 %2544
        %v2547 = vsel %vm426, %v2533, %v2537
        %v2548 = vsel %vm746, %v2547, %v2541
        %v2549 = vsel %vm748, %v2548, %v2545
        %v2550 = vld [vmem:[#allocation7 + $0x7] sm:$0x1]
        %v2551 = vld [vmem:[#allocation7 + $0xf] sm:$0x1]
        %v2552 = vld [vmem:[#allocation7 + $0x17] sm:$0x1]
        %v2553 = vld [vmem:[#allocation7 + $0x1f] sm:$0x1]
        %v2554 = vld [vmem:[#allocation7 + $0x27] sm:$0x1]
        %v2555 = vld [vmem:[#allocation7 + $0x2f] sm:$0x1]
        %v2556 = vld [vmem:[#allocation7 + $0x37] sm:$0x1]
        %v2557 = vld [vmem:[#allocation7 + $0x3f] sm:$0x1]
        %v2559 = vrot.slane %v2549, 1
        %v2560 = vrot.slane %v2549, 2
        %v2561 = vrot.slane %v2549, 3
        %v2562 = vrot.slane %v2549, 4
        %v2563 = vrot.slane %v2549, 5
        %v2564 = vrot.slane %v2549, 6
        %v2565 = vrot.slane %v2549, 7
        %v2574 = vmul.f32 %v2550, %v2549
        %v2575 = vmul.f32 %v2551, %v2559
        %v2576 = vmul.f32 %v2552, %v2560
        %v2577 = vmul.f32 %v2553, %v2561
        %v2578 = vmul.f32 %v2554, %v2562
        %v2579 = vmul.f32 %v2555, %v2563
        %v2580 = vmul.f32 %v2556, %v2564
        %v2581 = vmul.f32 %v2557, %v2565
        %v2590 = vrot.slane %v2575, 7
        %v2591 = vsel %vm2059, %v2590, %v2574
        %v2592 = vrot.slane %v2576, 6
        %v2593 = vsel %vm2062, %v2592, %v2591
        %v2594 = vrot.slane %v2577, 5
        %v2595 = vsel %vm2065, %v2594, %v2593
        %v2596 = vrot.slane %v2578, 4
        %v2597 = vsel %vm2068, %v2596, %v2595
        %v2598 = vrot.slane %v2579, 3
        %v2599 = vsel %vm2071, %v2598, %v2597
        %v2600 = vrot.slane %v2580, 2
        %v2601 = vsel %vm2074, %v2600, %v2599
        %v2602 = vrot.slane %v2581, 1
        %v2603 = vsel %vm2077, %v2602, %v2601
        %v2605 = vadd.f32 %v2530, %v2603
        %s2606 = scalar_lea.vmem %s251, %s645
        %2607 = vst [vmem:[%s2606] sm:$0xff] %v2605
      $region49: #{vss_block_forward.6} parent=43 // loop_footer
        %s643 = sadd.s32 1, %s639
      $region50: #{vss_block_forward.6} parent=43 // loop_footer_branch
        %638 = sbr.rel target = $region46
      $region51: #{vss_block_forward.6} parent=43 // loop_exit
        _
      %p2608 = scmp.lt.s32.totalorder %s17, 1
      %s2609 = scalar_select %p2608, %s17, 1
      %s2610 = smul.addr %s2609, 8
      %s2611 = smul.addr %s2610, 8
      %s2612 = scalar_lea.vmem %s6, %s2611
      // Predicated region
      $region52: #{vss_block_forward.6} parent=43 // pred_check
        %p2613 = pneg %p166
      $region53: #{vss_block_forward.6} parent=43 // pred_check_branch
        %2615 = sbr.rel (%p2613) target = $region55
      $region54: #{vss_block_forward.6} parent=43 // pred_region
        _
      $region55: #{vss_block_forward.6} parent=43 // pred_fallthru
        _
    $region44: #{vss_block_forward.6} parent=5 // pred_fallthru
      _
    %p2616 = scmp.le.s32.totalorder 2, %s12
    // Predicated region
    $region56: #{vss_block_forward.6} parent=5 // pred_check
      %p2617 = pneg %p2616
    $region57: #{vss_block_forward.6} parent=5 // pred_check_branch
      %2619 = sbr.rel (%p2617) target = $region59
    $region58: #{vss_block_forward.6} parent=5 // pred_region
      %s2620 = ssub.s32 %s12, 2
      // Predicated region
      $region60: #{vss_block_forward.6} parent=58 // pred_check
        %p2621 = pneg %p172
      $region61: #{vss_block_forward.6} parent=58 // pred_check_branch
        %2623 = sbr.rel (%p2621) target = $region63
      $region62: #{vss_block_forward.6} parent=58 // pred_region
        %p2624 = scmp.lt.s32.totalorder %s18, 1
        %s2625 = scalar_select %p2624, %s18, 1
        %s2626 = smul.addr %s2625, 8
        %s2627 = smul.addr %s2626, 8
        %s2628 = scalar_lea.vmem %s6, %s2627
      $region63: #{vss_block_forward.6} parent=58 // pred_fallthru
        _
    $region59: #{vss_block_forward.6} parent=5 // pred_fallthru
      _
  $region6: #{vss_block_forward.6} parent=0 // loop_footer
    %s16 = sadd.s32 1, %s12
  $region7: #{vss_block_forward.6} parent=0 // loop_footer_branch
    %11 = sbr.rel target = $region3
  $region8: #{vss_block_forward.6} parent=0 // loop_exit
    _

</llo_original>
